<compile_context>
chip_gen: v6e
topology: v6e:2x2x1
jax: 0.10.0
libtpu: 0.0.40
codegen_flags: <defaults>
</compile_context>

<pallas_src>
import functools

import jax
import jax.numpy as jnp
from jax.experimental import pallas as pl
from jax.experimental.pallas import tpu as pltpu

_LANE = 128
_ROW_UNIT = 1024  # 8 sublanes * 128 lanes: keeps (tb//128, 128) blocks legally tiled


def _logreg_kernel(x_ref, w_ref, off_ref, t_ref, prob_ref, hl_ref, *,
                   h_min, h_max, p_min, p_max, eps):
    g, lanes = off_ref.shape                 # (tb // 128, 128)
    f = x_ref.shape[-1]

    x = x_ref[...]                           # [tb, F] in the caller's dtype (bf16 stays bf16)
    w = w_ref[...]                           # [1, F] float32
    if x.dtype != jnp.float32:
        w = w.astype(x.dtype)                # bf16 multiply is native on v6e/v7x VPU

    # Free view: split the leading dim on a 128-row (8-sublane aligned) boundary;
    # last-two-dims tiling is unchanged, batch rows land on lanes of the result.
    x3 = x.reshape(g, lanes, f)

    # Linear(num_features, 1): VPU multiply + lane reduce, f32 accumulation.
    # Produces a lane-dense [g, 128] logit so the transcendental chain and the
    # output stores run at full vreg width (unmasked vst).
    logit = jnp.sum(x3 * w.reshape(1, 1, f), axis=-1, dtype=jnp.float32)   # [g, 128]
    logit = logit + off_ref[...]             # bias + lexeme embedding (precomputed, lane-dense)

    prob = jnp.clip(jax.nn.sigmoid(logit), p_min, p_max)
    # Exact divide (not approx reciprocal) to preserve parity with the torch reference.
    half_life = jnp.clip(-t_ref[...] / (jnp.log2(prob) + eps), h_min, h_max)

    prob_ref[...] = prob.astype(prob_ref.dtype)
    hl_ref[...] = half_life.astype(hl_ref.dtype)


def _choose_tile_rows(batch, num_features, itemsize):
    """Rows per grid step (multiple of 1024): ~8 MiB HBM per x buffer, <=16 MiB VMEM."""
    lane_f = pl.cdiv(num_features, _LANE) * _LANE          # F is lane-padded in VMEM
    tb_hbm = (8 << 20) // max(1, num_features * itemsize)  # amortize per-step overhead
    tb_vmem = (16 << 20) // max(1, lane_f * itemsize)      # 2 buffers stay inside v7x VMEM
    tb = min(tb_hbm, tb_vmem)
    # Keep >= ~4 grid steps when the batch is big enough (>= 2 per TensorCore on v7x).
    quarter = (batch // (4 * _ROW_UNIT)) * _ROW_UNIT
    if quarter >= _ROW_UNIT:
        tb = min(tb, quarter)
    # Never tile past the (row-unit padded) batch.
    tb = min(tb, pl.cdiv(batch, _ROW_UNIT) * _ROW_UNIT)
    tb = max(_ROW_UNIT, (tb // _ROW_UNIT) * _ROW_UNIT)
    return int(tb)


def _vmem_limit_bytes(tb, num_features, itemsize):
    lane_f = pl.cdiv(num_features, _LANE) * _LANE
    x_block = tb * lane_f * itemsize                       # VMEM footprint of one x block
    small = 6 * (tb // _LANE) * _LANE * 4                  # offset, t, prob, hl, weight + slack
    need = 2 * (x_block + small) + (4 << 20)               # double-buffered + headroom
    return int(min(max(need, 32 << 20), 100 << 20))


def logistic_regression_forward(x, l, t, weight, bias, emb_table, *,
                                h_min=15.0 / 60.0 / 24.0, h_max=9.0 * 30.0,
                                p_min=0.0001, p_max=0.9999, epsilon=1e-06):
    """x: [B, F] float (f32 or bf16), l: [B] int32, t: [B] or [B, 1] float.

    weight: [1, F] (or [F]), bias: [1] / [1,1] / scalar, emb_table: [L, 1] or None.
    Returns (prob, half_life), both [B, 1] float32.
    """
    B, F = x.shape
    L = 0 if emb_table is None else int(emb_table.shape[0])

    weight = jnp.asarray(weight, jnp.float32).reshape(1, F)
    bias_val = jnp.asarray(bias, jnp.float32).reshape(-1)[0]
    t_flat = jnp.asarray(t, jnp.float32).reshape(B)

    # Embedding lookup as a tiny XLA gather on the [L] table, folded with the bias.
    # (Out-of-range lexeme ids are clamped by JAX indexing, unlike PyTorch which errors.)
    if L > 0:
        emb_flat = jnp.asarray(emb_table, jnp.float32).reshape(L)
        l_idx = jnp.asarray(l, jnp.int32).reshape(B)
        offset = emb_flat[l_idx] + bias_val                  # [B]
    else:
        offset = jnp.full((B,), bias_val, dtype=jnp.float32)

    # ---- tiling / lane-dense layout (x itself is NOT copied or padded) ----------
    itemsize = jnp.dtype(x.dtype).itemsize
    tb = _choose_tile_rows(B, F, itemsize)                   # rows per grid step
    g = tb // _LANE                                          # sublane rows per aux/out block
    gt = pl.cdiv(B, _LANE)                                   # rows of lane-dense aux/out arrays
    bp = gt * _LANE                                          # batch padded to 128 (aux/out only)

    if bp != B:
        # Only the tiny per-row vectors get padded (<=127 zeros); padded rows
        # produce finite values that the final [:B] slice discards.
        off_p = jnp.pad(offset, (0, bp - B))
        t_p = jnp.pad(t_flat, (0, bp - B))
    else:
        off_p, t_p = offset, t_flat
    off2 = off_p.reshape(gt, _LANE)                          # lane-dense [gt, 128]
    t2 = t_p.reshape(gt, _LANE)

    kernel = functools.partial(
        _logreg_kernel,
        h_min=float(h_min), h_max=float(h_max),
        p_min=float(p_min), p_max=float(p_max),
        eps=float(epsilon),
    )

    grid = (pl.cdiv(B, tb),)
    prob2, hl2 = pl.pallas_call(
        kernel,
        out_shape=(jax.ShapeDtypeStruct((gt, _LANE), jnp.float32),
                   jax.ShapeDtypeStruct((gt, _LANE), jnp.float32)),
        grid_spec=pltpu.PrefetchScalarGridSpec(
            num_scalar_prefetch=0,
            grid=grid,
            in_specs=[
                pl.BlockSpec((tb, F), lambda i: (i, 0)),       # x tile (streamed, ragged last block masked)
                pl.BlockSpec((1, F), lambda i: (0, 0)),        # weight (resident)
                pl.BlockSpec((g, _LANE), lambda i: (i, 0)),    # bias + embedding offset
                pl.BlockSpec((g, _LANE), lambda i: (i, 0)),    # t
            ],
            out_specs=(pl.BlockSpec((g, _LANE), lambda i: (i, 0)),
                       pl.BlockSpec((g, _LANE), lambda i: (i, 0))),
        ),
        compiler_params=pltpu.CompilerParams(
            dimension_semantics=("parallel",),                 # shard batch tiles across TCs (v7x)
            vmem_limit_bytes=_vmem_limit_bytes(tb, F, itemsize),
        ),
    )(x, weight, off2, t2)

    prob = prob2.reshape(bp, 1)[:B]
    half_life = hl2.reshape(bp, 1)[:B]
    return prob, half_life


if __name__ == "__main__":
    # Small, deterministic example consistent with the module's forward.
    B = 8    # batch
    F = 32   # num_features
    L = 16   # num_lexemes

    key = jax.random.PRNGKey(0)
    kx, kl, kt, kw, kb, ke = jax.random.split(key, 6)

    x = jax.random.normal(kx, (B, F), dtype=jnp.float32)
    l = jax.random.randint(kl, (B,), 0, L, dtype=jnp.int32)
    t = jax.random.uniform(kt, (B, 1), minval=0.01, maxval=10.0, dtype=jnp.float32)

    # Small non-zero parameters so the matvec / embedding paths are actually exercised
    # (the module's default init is zeros; values here are deterministic via PRNGKey(0)).
    weight = 0.1 * jax.random.normal(kw, (1, F), dtype=jnp.float32)
    bound = 1.0 / (F ** 0.5)
    bias = jax.random.uniform(kb, (1,), minval=-bound, maxval=bound, dtype=jnp.float32)
    emb_table = 0.1 * jax.random.normal(ke, (L, 1), dtype=jnp.float32)

    prob, half_life = logistic_regression_forward(x, l, t, weight, bias, emb_table)
    jax.block_until_ready((prob, half_life))

    # Pure-JAX reference check.
    logit_ref = x @ weight.T + bias.reshape(1, 1) + emb_table[l]
    prob_ref = jnp.clip(jax.nn.sigmoid(logit_ref), 0.0001, 0.9999)
    hl_ref = jnp.clip(-t / (jnp.log2(prob_ref) + 1e-06), 15.0 / 60.0 / 24.0, 9.0 * 30.0)
    assert prob.shape == (B, 1) and half_life.shape == (B, 1)
    assert bool(jnp.all(jnp.isfinite(prob))) and bool(jnp.all(jnp.isfinite(half_life)))
    assert jnp.allclose(prob, prob_ref, atol=1e-5, rtol=1e-5)
    assert jnp.allclose(half_life, hl_ref, atol=1e-4, rtol=1e-4)

    print("KERNEL_OK")
</pallas_src>

<mosaic_0001>
module attributes {stable_mosaic.version = 11 : i64} {
  func.func @_logreg_kernel(%arg0: i32, %arg1: memref<1024x32xf32, #tpu.memory_space<vmem>>, %arg2: memref<1x32xf32, #tpu.memory_space<vmem>>, %arg3: memref<8x128xf32, #tpu.memory_space<vmem>>, %arg4: memref<8x128xf32, #tpu.memory_space<vmem>>, %arg5: memref<8x128xf32, #tpu.memory_space<vmem>>, %arg6: memref<8x128xf32, #tpu.memory_space<vmem>>) attributes {dimension_semantics = [#tpu.dimension_semantics<parallel>], iteration_bounds = array<i64: 1>, scalar_prefetch = 0 : i64, scratch_operands = 0 : i64, tpu.core_type = #tpu.core_type<tc>, window_params = [{transform_indices = @transform_0, window_bounds = array<i64: 1024, 32>}, {pipeline_mode = #tpu.pipeline_mode<synchronous>, transform_indices = @transform_1, window_bounds = array<i64: 1, 32>}, {transform_indices = @transform_2, window_bounds = array<i64: 8, 128>}, {transform_indices = @transform_3, window_bounds = array<i64: 8, 128>}, {transform_indices = @transform_4, window_bounds = array<i64: 8, 128>}, {transform_indices = @transform_5, window_bounds = array<i64: 8, 128>}]} {
    %c0 = arith.constant 0 : index
    %c0_0 = arith.constant 0 : index
    %0 = vector.load %arg1[%c0, %c0_0] : memref<1024x32xf32, #tpu.memory_space<vmem>>, vector<1024x32xf32>
    %c0_1 = arith.constant 0 : index
    %c0_2 = arith.constant 0 : index
    %1 = vector.load %arg2[%c0_1, %c0_2] : memref<1x32xf32, #tpu.memory_space<vmem>>, vector<1x32xf32>
    %2 = vector.shape_cast %0 : vector<1024x32xf32> to vector<8x128x32xf32>
    %3 = vector.shape_cast %1 : vector<1x32xf32> to vector<1x1x32xf32>
    %4 = vector.broadcast %3 : vector<1x1x32xf32> to vector<8x128x32xf32>
    %5 = arith.mulf %2, %4 : vector<8x128x32xf32>
    %cst = arith.constant dense<0.000000e+00> : vector<8x128xf32>
    %6 = vector.multi_reduction <add>, %5, %cst [2] : vector<8x128x32xf32> to vector<8x128xf32>
    %c0_3 = arith.constant 0 : index
    %c0_4 = arith.constant 0 : index
    %7 = vector.load %arg3[%c0_3, %c0_4] : memref<8x128xf32, #tpu.memory_space<vmem>>, vector<8x128xf32>
    %8 = arith.addf %6, %7 : vector<8x128xf32>
    %9 = arith.negf %8 : vector<8x128xf32>
    %10 = math.exp %9 : vector<8x128xf32>
    %cst_5 = arith.constant 1.000000e+00 : f32
    %11 = vector.broadcast %cst_5 : f32 to vector<8x128xf32>
    %12 = arith.addf %11, %10 : vector<8x128xf32>
    %13 = arith.divf %11, %12 : vector<8x128xf32>
    %cst_6 = arith.constant 9.99999974E-5 : f32
    %cst_7 = arith.constant 0.999899983 : f32
    %14 = vector.broadcast %cst_6 : f32 to vector<8x128xf32>
    %15 = arith.maximumf %14, %13 : vector<8x128xf32>
    %16 = vector.broadcast %cst_7 : f32 to vector<8x128xf32>
    %17 = arith.minimumf %16, %15 : vector<8x128xf32>
    %c0_8 = arith.constant 0 : index
    %c0_9 = arith.constant 0 : index
    %18 = vector.load %arg4[%c0_8, %c0_9] : memref<8x128xf32, #tpu.memory_space<vmem>>, vector<8x128xf32>
    %cst_10 = arith.constant 0.000000e+00 : f32
    %19 = vector.broadcast %cst_10 : f32 to vector<8x128xf32>
    %20 = arith.subf %19, %18 : vector<8x128xf32>
    %21 = math.log %17 : vector<8x128xf32>
    %cst_11 = arith.constant 2.000000e+00 : f32
    %22 = math.log %cst_11 : f32
    %23 = vector.broadcast %22 : f32 to vector<8x128xf32>
    %24 = arith.divf %21, %23 : vector<8x128xf32>
    %cst_12 = arith.constant 9.99999997E-7 : f32
    %25 = vector.broadcast %cst_12 : f32 to vector<8x128xf32>
    %26 = arith.addf %24, %25 : vector<8x128xf32>
    %27 = arith.divf %20, %26 : vector<8x128xf32>
    %cst_13 = arith.constant 0.010416667 : f32
    %cst_14 = arith.constant 2.700000e+02 : f32
    %28 = vector.broadcast %cst_13 : f32 to vector<8x128xf32>
    %29 = arith.maximumf %28, %27 : vector<8x128xf32>
    %30 = vector.broadcast %cst_14 : f32 to vector<8x128xf32>
    %31 = arith.minimumf %30, %29 : vector<8x128xf32>
    %c0_15 = arith.constant 0 : index
    %c0_16 = arith.constant 0 : index
    %32 = vector.load %arg5[%c0_15, %c0_16] : memref<8x128xf32, #tpu.memory_space<vmem>>, vector<8x128xf32>
    tpu.vector_store %arg5[%c0_15, %c0_16], %17 {strides = array<i32>} : memref<8x128xf32, #tpu.memory_space<vmem>>, vector<8x128xf32>,
    %c0_17 = arith.constant 0 : index
    %c0_18 = arith.constant 0 : index
    %33 = vector.load %arg6[%c0_17, %c0_18] : memref<8x128xf32, #tpu.memory_space<vmem>>, vector<8x128xf32>
    tpu.vector_store %arg6[%c0_17, %c0_18], %31 {strides = array<i32>} : memref<8x128xf32, #tpu.memory_space<vmem>>, vector<8x128xf32>,
    return
  }
  func.func @transform_0(%arg0: i32) -> (i32, i32) {
    %c0_i32 = arith.constant 0 : i32
    %c0_i32_0 = arith.constant 0 : i32
    return %arg0, %c0_i32 : i32, i32
  }
  func.func @transform_1(%arg0: i32) -> (i32, i32) {
    %c0_i32 = arith.constant 0 : i32
    %c0_i32_0 = arith.constant 0 : i32
    %c0_i32_1 = arith.constant 0 : i32
    return %c0_i32, %c0_i32_0 : i32, i32
  }
  func.func @transform_2(%arg0: i32) -> (i32, i32) {
    %c0_i32 = arith.constant 0 : i32
    %c0_i32_0 = arith.constant 0 : i32
    return %arg0, %c0_i32 : i32, i32
  }
  func.func @transform_3(%arg0: i32) -> (i32, i32) {
    %c0_i32 = arith.constant 0 : i32
    %c0_i32_0 = arith.constant 0 : i32
    return %arg0, %c0_i32 : i32, i32
  }
  func.func @transform_4(%arg0: i32) -> (i32, i32) {
    %c0_i32 = arith.constant 0 : i32
    %c0_i32_0 = arith.constant 0 : i32
    return %arg0, %c0_i32 : i32, i32
  }
  func.func @transform_5(%arg0: i32) -> (i32, i32) {
    %c0_i32 = arith.constant 0 : i32
    %c0_i32_0 = arith.constant 0 : i32
    return %arg0, %c0_i32 : i32, i32
  }
}

</mosaic_0001>

<llo_original>
// kernel: tpu_custom_call.1
$region0: #{tpu_custom_call.1}
  #allocation0 [shape = 'u32[]', space=smem, size = 0x4, offset = 0x4, fixed_abs, tag = 'smem constant byte address 0x4 - core index']
  #allocation1 [shape = 'u32[144,128]{1,0:T(1,128)}', space=vmem, size = 0x12000, scoped, tag = 'internal scratch']
  %s0 = inlined_call_operand.hbm [shape: f32[8,32], index: 0, kind: input, shape index: {}]
  %s1 = inlined_call_operand.vmem [shape: f32[1,32], index: 1, kind: input, shape index: {}]
  %s2 = inlined_call_operand.vmem [shape: f32[1,128], index: 2, kind: input, shape index: {}]
  %s3 = inlined_call_operand.vmem [shape: f32[1,128], index: 3, kind: input, shape index: {}]
  %s4 = inlined_call_operand.hbm [shape: f32[1,128], index: 4, kind: output, shape index: {0}]
  %s5 = inlined_call_operand.hbm [shape: f32[1,128], index: 5, kind: output, shape index: {1}]
  %6 = xla_tuple %s4, %s5
  %s7 = sld [smem:[#allocation0]]
  $region38: #{tpu_custom_call.1} parent=0
    _
  %s9 = ssub.s32 1, %s7
  %s10 = scalar_select 0, %s9, %s7
  $region1: #{tpu_custom_call.1} parent=0
    #allocation2 [shape = 'u8[524288]{0}', space=vmem, size = 0x80000, scoped, tag = 'input window, operand 0, single buffered']
    #allocation3 [shape = 's32[1]{0}', space=sflag, size = 0x4, scoped, tag = 'scoped memory for tpu_custom_call.1']
    #allocation4 [shape = 's32[1]{0}', space=sflag, size = 0x4, scoped, tag = 'scoped memory for tpu_custom_call.1']
    #allocation5 [shape = 'u8[4096]{0}', space=vmem, size = 0x1000, scoped, tag = 'output window, operand 0, single buffered']
    #allocation6 [shape = 'u8[4096]{0}', space=vmem, size = 0x1000, scoped, tag = 'output window, operand 1, single buffered']
    #allocation7 [shape = 's32[1]{0}', space=sflag, size = 0x4, scoped, tag = 'scoped memory for tpu_custom_call.1']
    %11 = vsyncpa [#allocation3], 0
    %12 = vsyncpa [#allocation4], 0
    %13 = vsyncpa [#allocation7], 0
    // Predicated region
    $region2: #{tpu_custom_call.1} parent=1 // pred_check
      _
    $region3: #{tpu_custom_call.1} parent=1 // pred_check_branch
      %15 = sbr.rel (0) target = $region5
    $region4: #{tpu_custom_call.1} parent=1 // pred_region
      %s17 = ssub.s32 16384, 128
      %18 = vsyncadd [#allocation3], %s17
      %s19 = sshll.u32 [#allocation2], 4
      %s20 = int_to_ptr.vmem [resolvable:$true] %s19
      %25 = dma.hbm_to_vmem [thread:$0]  %s0, 128, %s20, [#allocation3], 128, 128, 8
    $region5: #{tpu_custom_call.1} parent=1 // pred_fallthru
      _
    // Predicated region
    $region6: #{tpu_custom_call.1} parent=1 // pred_check
      _
    $region7: #{tpu_custom_call.1} parent=1 // pred_check_branch
      %27 = sbr.rel (0) target = $region9
    $region8: #{tpu_custom_call.1} parent=1 // pred_region
      _
    $region9: #{tpu_custom_call.1} parent=1 // pred_fallthru
      _
    // Predicated region
    $region10: #{tpu_custom_call.1} parent=1 // pred_check
      _
    $region11: #{tpu_custom_call.1} parent=1 // pred_check_branch
      %29 = sbr.rel (0) target = $region13
    $region12: #{tpu_custom_call.1} parent=1 // pred_region
      _
    $region13: #{tpu_custom_call.1} parent=1 // pred_fallthru
      _
    // Predicated region
    $region14: #{tpu_custom_call.1} parent=1 // pred_check
      _
    $region15: #{tpu_custom_call.1} parent=1 // pred_check_branch
      %31 = sbr.rel (0) target = $region17
    $region16: #{tpu_custom_call.1} parent=1 // pred_region
      _
    $region17: #{tpu_custom_call.1} parent=1 // pred_fallthru
      _
    // Predicated region
    $region18: #{tpu_custom_call.1} parent=1 // pred_check
      _
    $region19: #{tpu_custom_call.1} parent=1 // pred_check_branch
      %33 = sbr.rel (0) target = $region21
    $region20: #{tpu_custom_call.1} parent=1 // pred_region
      %34 = dma.done [#allocation3], 16384
    $region21: #{tpu_custom_call.1} parent=1 // pred_fallthru
      _
    %v35 = vld [vmem:[#allocation2] sm:$0xff]
    %v36 = vld [vmem:[#allocation2 + $0x8] sm:$0xff]
    %v37 = vld [vmem:[#allocation2 + $0x10] sm:$0xff]
    %v38 = vld [vmem:[#allocation2 + $0x18] sm:$0xff]
    %v39 = vld [vmem:[#allocation2 + $0x20] sm:$0xff]
    %v40 = vld [vmem:[#allocation2 + $0x28] sm:$0xff]
    %v41 = vld [vmem:[#allocation2 + $0x30] sm:$0xff]
    %v42 = vld [vmem:[#allocation2 + $0x38] sm:$0xff]
    %v43 = vld [vmem:[#allocation2 + $0x40] sm:$0xff]
    %v44 = vld [vmem:[#allocation2 + $0x48] sm:$0xff]
    %v45 = vld [vmem:[#allocation2 + $0x50] sm:$0xff]
    %v46 = vld [vmem:[#allocation2 + $0x58] sm:$0xff]
    %v47 = vld [vmem:[#allocation2 + $0x60] sm:$0xff]
    %v48 = vld [vmem:[#allocation2 + $0x68] sm:$0xff]
    %v49 = vld [vmem:[#allocation2 + $0x70] sm:$0xff]
    %v50 = vld [vmem:[#allocation2 + $0x78] sm:$0xff]
    %v51 = vld [vmem:[#allocation2 + $0x80] sm:$0xff]
    %v52 = vld [vmem:[#allocation2 + $0x88] sm:$0xff]
    %v53 = vld [vmem:[#allocation2 + $0x90] sm:$0xff]
    %v54 = vld [vmem:[#allocation2 + $0x98] sm:$0xff]
    %v55 = vld [vmem:[#allocation2 + $0xa0] sm:$0xff]
    %v56 = vld [vmem:[#allocation2 + $0xa8] sm:$0xff]
    %v57 = vld [vmem:[#allocation2 + $0xb0] sm:$0xff]
    %v58 = vld [vmem:[#allocation2 + $0xb8] sm:$0xff]
    %v59 = vld [vmem:[#allocation2 + $0xc0] sm:$0xff]
    %v60 = vld [vmem:[#allocation2 + $0xc8] sm:$0xff]
    %v61 = vld [vmem:[#allocation2 + $0xd0] sm:$0xff]
    %v62 = vld [vmem:[#allocation2 + $0xd8] sm:$0xff]
    %v63 = vld [vmem:[#allocation2 + $0xe0] sm:$0xff]
    %v64 = vld [vmem:[#allocation2 + $0xe8] sm:$0xff]
    %v65 = vld [vmem:[#allocation2 + $0xf0] sm:$0xff]
    %v66 = vld [vmem:[#allocation2 + $0xf8] sm:$0xff]
    %v67 = vld [vmem:[#allocation2 + $0x100] sm:$0xff]
    %v68 = vld [vmem:[#allocation2 + $0x108] sm:$0xff]
    %v69 = vld [vmem:[#allocation2 + $0x110] sm:$0xff]
    %v70 = vld [vmem:[#allocation2 + $0x118] sm:$0xff]
    %v71 = vld [vmem:[#allocation2 + $0x120] sm:$0xff]
    %v72 = vld [vmem:[#allocation2 + $0x128] sm:$0xff]
    %v73 = vld [vmem:[#allocation2 + $0x130] sm:$0xff]
    %v74 = vld [vmem:[#allocation2 + $0x138] sm:$0xff]
    %v75 = vld [vmem:[#allocation2 + $0x140] sm:$0xff]
    %v76 = vld [vmem:[#allocation2 + $0x148] sm:$0xff]
    %v77 = vld [vmem:[#allocation2 + $0x150] sm:$0xff]
    %v78 = vld [vmem:[#allocation2 + $0x158] sm:$0xff]
    %v79 = vld [vmem:[#allocation2 + $0x160] sm:$0xff]
    %v80 = vld [vmem:[#allocation2 + $0x168] sm:$0xff]
    %v81 = vld [vmem:[#allocation2 + $0x170] sm:$0xff]
    %v82 = vld [vmem:[#allocation2 + $0x178] sm:$0xff]
    %v83 = vld [vmem:[#allocation2 + $0x180] sm:$0xff]
    %v84 = vld [vmem:[#allocation2 + $0x188] sm:$0xff]
    %v85 = vld [vmem:[#allocation2 + $0x190] sm:$0xff]
    %v86 = vld [vmem:[#allocation2 + $0x198] sm:$0xff]
    %v87 = vld [vmem:[#allocation2 + $0x1a0] sm:$0xff]
    %v88 = vld [vmem:[#allocation2 + $0x1a8] sm:$0xff]
    %v89 = vld [vmem:[#allocation2 + $0x1b0] sm:$0xff]
    %v90 = vld [vmem:[#allocation2 + $0x1b8] sm:$0xff]
    %v91 = vld [vmem:[#allocation2 + $0x1c0] sm:$0xff]
    %v92 = vld [vmem:[#allocation2 + $0x1c8] sm:$0xff]
    %v93 = vld [vmem:[#allocation2 + $0x1d0] sm:$0xff]
    %v94 = vld [vmem:[#allocation2 + $0x1d8] sm:$0xff]
    %v95 = vld [vmem:[#allocation2 + $0x1e0] sm:$0xff]
    %v96 = vld [vmem:[#allocation2 + $0x1e8] sm:$0xff]
    %v97 = vld [vmem:[#allocation2 + $0x1f0] sm:$0xff]
    %v98 = vld [vmem:[#allocation2 + $0x1f8] sm:$0xff]
    %v99 = vld [vmem:[#allocation2 + $0x200] sm:$0xff]
    %v100 = vld [vmem:[#allocation2 + $0x208] sm:$0xff]
    %v101 = vld [vmem:[#allocation2 + $0x210] sm:$0xff]
    %v102 = vld [vmem:[#allocation2 + $0x218] sm:$0xff]
    %v103 = vld [vmem:[#allocation2 + $0x220] sm:$0xff]
    %v104 = vld [vmem:[#allocation2 + $0x228] sm:$0xff]
    %v105 = vld [vmem:[#allocation2 + $0x230] sm:$0xff]
    %v106 = vld [vmem:[#allocation2 + $0x238] sm:$0xff]
    %v107 = vld [vmem:[#allocation2 + $0x240] sm:$0xff]
    %v108 = vld [vmem:[#allocation2 + $0x248] sm:$0xff]
    %v109 = vld [vmem:[#allocation2 + $0x250] sm:$0xff]
    %v110 = vld [vmem:[#allocation2 + $0x258] sm:$0xff]
    %v111 = vld [vmem:[#allocation2 + $0x260] sm:$0xff]
    %v112 = vld [vmem:[#allocation2 + $0x268] sm:$0xff]
    %v113 = vld [vmem:[#allocation2 + $0x270] sm:$0xff]
    %v114 = vld [vmem:[#allocation2 + $0x278] sm:$0xff]
    %v115 = vld [vmem:[#allocation2 + $0x280] sm:$0xff]
    %v116 = vld [vmem:[#allocation2 + $0x288] sm:$0xff]
    %v117 = vld [vmem:[#allocation2 + $0x290] sm:$0xff]
    %v118 = vld [vmem:[#allocation2 + $0x298] sm:$0xff]
    %v119 = vld [vmem:[#allocation2 + $0x2a0] sm:$0xff]
    %v120 = vld [vmem:[#allocation2 + $0x2a8] sm:$0xff]
    %v121 = vld [vmem:[#allocation2 + $0x2b0] sm:$0xff]
    %v122 = vld [vmem:[#allocation2 + $0x2b8] sm:$0xff]
    %v123 = vld [vmem:[#allocation2 + $0x2c0] sm:$0xff]
    %v124 = vld [vmem:[#allocation2 + $0x2c8] sm:$0xff]
    %v125 = vld [vmem:[#allocation2 + $0x2d0] sm:$0xff]
    %v126 = vld [vmem:[#allocation2 + $0x2d8] sm:$0xff]
    %v127 = vld [vmem:[#allocation2 + $0x2e0] sm:$0xff]
    %v128 = vld [vmem:[#allocation2 + $0x2e8] sm:$0xff]
    %v129 = vld [vmem:[#allocation2 + $0x2f0] sm:$0xff]
    %v130 = vld [vmem:[#allocation2 + $0x2f8] sm:$0xff]
    %v131 = vld [vmem:[#allocation2 + $0x300] sm:$0xff]
    %v132 = vld [vmem:[#allocation2 + $0x308] sm:$0xff]
    %v133 = vld [vmem:[#allocation2 + $0x310] sm:$0xff]
    %v134 = vld [vmem:[#allocation2 + $0x318] sm:$0xff]
    %v135 = vld [vmem:[#allocation2 + $0x320] sm:$0xff]
    %v136 = vld [vmem:[#allocation2 + $0x328] sm:$0xff]
    %v137 = vld [vmem:[#allocation2 + $0x330] sm:$0xff]
    %v138 = vld [vmem:[#allocation2 + $0x338] sm:$0xff]
    %v139 = vld [vmem:[#allocation2 + $0x340] sm:$0xff]
    %v140 = vld [vmem:[#allocation2 + $0x348] sm:$0xff]
    %v141 = vld [vmem:[#allocation2 + $0x350] sm:$0xff]
    %v142 = vld [vmem:[#allocation2 + $0x358] sm:$0xff]
    %v143 = vld [vmem:[#allocation2 + $0x360] sm:$0xff]
    %v144 = vld [vmem:[#allocation2 + $0x368] sm:$0xff]
    %v145 = vld [vmem:[#allocation2 + $0x370] sm:$0xff]
    %v146 = vld [vmem:[#allocation2 + $0x378] sm:$0xff]
    %v147 = vld [vmem:[#allocation2 + $0x380] sm:$0xff]
    %v148 = vld [vmem:[#allocation2 + $0x388] sm:$0xff]
    %v149 = vld [vmem:[#allocation2 + $0x390] sm:$0xff]
    %v150 = vld [vmem:[#allocation2 + $0x398] sm:$0xff]
    %v151 = vld [vmem:[#allocation2 + $0x3a0] sm:$0xff]
    %v152 = vld [vmem:[#allocation2 + $0x3a8] sm:$0xff]
    %v153 = vld [vmem:[#allocation2 + $0x3b0] sm:$0xff]
    %v154 = vld [vmem:[#allocation2 + $0x3b8] sm:$0xff]
    %v155 = vld [vmem:[#allocation2 + $0x3c0] sm:$0xff]
    %v156 = vld [vmem:[#allocation2 + $0x3c8] sm:$0xff]
    %v157 = vld [vmem:[#allocation2 + $0x3d0] sm:$0xff]
    %v158 = vld [vmem:[#allocation2 + $0x3d8] sm:$0xff]
    %v159 = vld [vmem:[#allocation2 + $0x3e0] sm:$0xff]
    %v160 = vld [vmem:[#allocation2 + $0x3e8] sm:$0xff]
    %v161 = vld [vmem:[#allocation2 + $0x3f0] sm:$0xff]
    %v162 = vld [vmem:[#allocation2 + $0x3f8] sm:$0xff]
    %v163 = vld [vmem:[%s1] sm:$0x1]
    %v165 = vlaneseq
    %v166 = vshrl.u32 %v165, 7
    %v167 = vsub.s32 0, %v166
    %v168 = vrot.slane %v163, %v167
    %v170 = vmul.f32 %v35, %v168
    %v171 = vmul.f32 %v36, %v168
    %v172 = vmul.f32 %v37, %v168
    %v173 = vmul.f32 %v38, %v168
    %v174 = vmul.f32 %v39, %v168
    %v175 = vmul.f32 %v40, %v168
    %v176 = vmul.f32 %v41, %v168
    %v177 = vmul.f32 %v42, %v168
    %v178 = vmul.f32 %v43, %v168
    %v179 = vmul.f32 %v44, %v168
    %v180 = vmul.f32 %v45, %v168
    %v181 = vmul.f32 %v46, %v168
    %v182 = vmul.f32 %v47, %v168
    %v183 = vmul.f32 %v48, %v168
    %v184 = vmul.f32 %v49, %v168
    %v185 = vmul.f32 %v50, %v168
    %v186 = vmul.f32 %v51, %v168
    %v187 = vmul.f32 %v52, %v168
    %v188 = vmul.f32 %v53, %v168
    %v189 = vmul.f32 %v54, %v168
    %v190 = vmul.f32 %v55, %v168
    %v191 = vmul.f32 %v56, %v168
    %v192 = vmul.f32 %v57, %v168
    %v193 = vmul.f32 %v58, %v168
    %v194 = vmul.f32 %v59, %v168
    %v195 = vmul.f32 %v60, %v168
    %v196 = vmul.f32 %v61, %v168
    %v197 = vmul.f32 %v62, %v168
    %v198 = vmul.f32 %v63, %v168
    %v199 = vmul.f32 %v64, %v168
    %v200 = vmul.f32 %v65, %v168
    %v201 = vmul.f32 %v66, %v168
    %v202 = vmul.f32 %v67, %v168
    %v203 = vmul.f32 %v68, %v168
    %v204 = vmul.f32 %v69, %v168
    %v205 = vmul.f32 %v70, %v168
    %v206 = vmul.f32 %v71, %v168
    %v207 = vmul.f32 %v72, %v168
    %v208 = vmul.f32 %v73, %v168
    %v209 = vmul.f32 %v74, %v168
    %v210 = vmul.f32 %v75, %v168
    %v211 = vmul.f32 %v76, %v168
    %v212 = vmul.f32 %v77, %v168
    %v213 = vmul.f32 %v78, %v168
    %v214 = vmul.f32 %v79, %v168
    %v215 = vmul.f32 %v80, %v168
    %v216 = vmul.f32 %v81, %v168
    %v217 = vmul.f32 %v82, %v168
    %v218 = vmul.f32 %v83, %v168
    %v219 = vmul.f32 %v84, %v168
    %v220 = vmul.f32 %v85, %v168
    %v221 = vmul.f32 %v86, %v168
    %v222 = vmul.f32 %v87, %v168
    %v223 = vmul.f32 %v88, %v168
    %v224 = vmul.f32 %v89, %v168
    %v225 = vmul.f32 %v90, %v168
    %v226 = vmul.f32 %v91, %v168
    %v227 = vmul.f32 %v92, %v168
    %v228 = vmul.f32 %v93, %v168
    %v229 = vmul.f32 %v94, %v168
    %v230 = vmul.f32 %v95, %v168
    %v231 = vmul.f32 %v96, %v168
    %v232 = vmul.f32 %v97, %v168
    %v233 = vmul.f32 %v98, %v168
    %v234 = vmul.f32 %v99, %v168
    %v235 = vmul.f32 %v100, %v168
    %v236 = vmul.f32 %v101, %v168
    %v237 = vmul.f32 %v102, %v168
    %v238 = vmul.f32 %v103, %v168
    %v239 = vmul.f32 %v104, %v168
    %v240 = vmul.f32 %v105, %v168
    %v241 = vmul.f32 %v106, %v168
    %v242 = vmul.f32 %v107, %v168
    %v243 = vmul.f32 %v108, %v168
    %v244 = vmul.f32 %v109, %v168
    %v245 = vmul.f32 %v110, %v168
    %v246 = vmul.f32 %v111, %v168
    %v247 = vmul.f32 %v112, %v168
    %v248 = vmul.f32 %v113, %v168
    %v249 = vmul.f32 %v114, %v168
    %v250 = vmul.f32 %v115, %v168
    %v251 = vmul.f32 %v116, %v168
    %v252 = vmul.f32 %v117, %v168
    %v253 = vmul.f32 %v118, %v168
    %v254 = vmul.f32 %v119, %v168
    %v255 = vmul.f32 %v120, %v168
    %v256 = vmul.f32 %v121, %v168
    %v257 = vmul.f32 %v122, %v168
    %v258 = vmul.f32 %v123, %v168
    %v259 = vmul.f32 %v124, %v168
    %v260 = vmul.f32 %v125, %v168
    %v261 = vmul.f32 %v126, %v168
    %v262 = vmul.f32 %v127, %v168
    %v263 = vmul.f32 %v128, %v168
    %v264 = vmul.f32 %v129, %v168
    %v265 = vmul.f32 %v130, %v168
    %v266 = vmul.f32 %v131, %v168
    %v267 = vmul.f32 %v132, %v168
    %v268 = vmul.f32 %v133, %v168
    %v269 = vmul.f32 %v134, %v168
    %v270 = vmul.f32 %v135, %v168
    %v271 = vmul.f32 %v136, %v168
    %v272 = vmul.f32 %v137, %v168
    %v273 = vmul.f32 %v138, %v168
    %v274 = vmul.f32 %v139, %v168
    %v275 = vmul.f32 %v140, %v168
    %v276 = vmul.f32 %v141, %v168
    %v277 = vmul.f32 %v142, %v168
    %v278 = vmul.f32 %v143, %v168
    %v279 = vmul.f32 %v144, %v168
    %v280 = vmul.f32 %v145, %v168
    %v281 = vmul.f32 %v146, %v168
    %v282 = vmul.f32 %v147, %v168
    %v283 = vmul.f32 %v148, %v168
    %v284 = vmul.f32 %v149, %v168
    %v285 = vmul.f32 %v150, %v168
    %v286 = vmul.f32 %v151, %v168
    %v287 = vmul.f32 %v152, %v168
    %v288 = vmul.f32 %v153, %v168
    %v289 = vmul.f32 %v154, %v168
    %v290 = vmul.f32 %v155, %v168
    %v291 = vmul.f32 %v156, %v168
    %v292 = vmul.f32 %v157, %v168
    %v293 = vmul.f32 %v158, %v168
    %v294 = vmul.f32 %v159, %v168
    %v295 = vmul.f32 %v160, %v168
    %v296 = vmul.f32 %v161, %v168
    %v297 = vmul.f32 %v162, %v168
    %vm298 = vcmask 261120
    %v299 = vsel %vm298, %v170, 0.0
    %300 = vadd.xlane.f32.xlu0 %v299
    %v301 = vpop.xlane.xlu0 %300
    %v302 = vsel %vm298, %v171, 0.0
    %303 = vadd.xlane.f32.xlu0 %v302
    %v304 = vpop.xlane.xlu0 %303
    %v305 = vsel %vm298, %v172, 0.0
    %306 = vadd.xlane.f32.xlu0 %v305
    %v307 = vpop.xlane.xlu0 %306
    %v308 = vsel %vm298, %v173, 0.0
    %309 = vadd.xlane.f32.xlu0 %v308
    %v310 = vpop.xlane.xlu0 %309
    %v311 = vsel %vm298, %v174, 0.0
    %312 = vadd.xlane.f32.xlu0 %v311
    %v313 = vpop.xlane.xlu0 %312
    %v314 = vsel %vm298, %v175, 0.0
    %315 = vadd.xlane.f32.xlu0 %v314
    %v316 = vpop.xlane.xlu0 %315
    %v317 = vsel %vm298, %v176, 0.0
    %318 = vadd.xlane.f32.xlu0 %v317
    %v319 = vpop.xlane.xlu0 %318
    %v320 = vsel %vm298, %v177, 0.0
    %321 = vadd.xlane.f32.xlu0 %v320
    %v322 = vpop.xlane.xlu0 %321
    %v323 = vsel %vm298, %v178, 0.0
    %324 = vadd.xlane.f32.xlu0 %v323
    %v325 = vpop.xlane.xlu0 %324
    %v326 = vsel %vm298, %v179, 0.0
    %327 = vadd.xlane.f32.xlu0 %v326
    %v328 = vpop.xlane.xlu0 %327
    %v329 = vsel %vm298, %v180, 0.0
    %330 = vadd.xlane.f32.xlu0 %v329
    %v331 = vpop.xlane.xlu0 %330
    %v332 = vsel %vm298, %v181, 0.0
    %333 = vadd.xlane.f32.xlu0 %v332
    %v334 = vpop.xlane.xlu0 %333
    %v335 = vsel %vm298, %v182, 0.0
    %336 = vadd.xlane.f32.xlu0 %v335
    %v337 = vpop.xlane.xlu0 %336
    %v338 = vsel %vm298, %v183, 0.0
    %339 = vadd.xlane.f32.xlu0 %v338
    %v340 = vpop.xlane.xlu0 %339
    %v341 = vsel %vm298, %v184, 0.0
    %342 = vadd.xlane.f32.xlu0 %v341
    %v343 = vpop.xlane.xlu0 %342
    %v344 = vsel %vm298, %v185, 0.0
    %345 = vadd.xlane.f32.xlu0 %v344
    %v346 = vpop.xlane.xlu0 %345
    %v347 = vsel %vm298, %v186, 0.0
    %348 = vadd.xlane.f32.xlu0 %v347
    %v349 = vpop.xlane.xlu0 %348
    %v350 = vsel %vm298, %v187, 0.0
    %351 = vadd.xlane.f32.xlu0 %v350
    %v352 = vpop.xlane.xlu0 %351
    %v353 = vsel %vm298, %v188, 0.0
    %354 = vadd.xlane.f32.xlu0 %v353
    %v355 = vpop.xlane.xlu0 %354
    %v356 = vsel %vm298, %v189, 0.0
    %357 = vadd.xlane.f32.xlu0 %v356
    %v358 = vpop.xlane.xlu0 %357
    %v359 = vsel %vm298, %v190, 0.0
    %360 = vadd.xlane.f32.xlu0 %v359
    %v361 = vpop.xlane.xlu0 %360
    %v362 = vsel %vm298, %v191, 0.0
    %363 = vadd.xlane.f32.xlu0 %v362
    %v364 = vpop.xlane.xlu0 %363
    %v365 = vsel %vm298, %v192, 0.0
    %366 = vadd.xlane.f32.xlu0 %v365
    %v367 = vpop.xlane.xlu0 %366
    %v368 = vsel %vm298, %v193, 0.0
    %369 = vadd.xlane.f32.xlu0 %v368
    %v370 = vpop.xlane.xlu0 %369
    %v371 = vsel %vm298, %v194, 0.0
    %372 = vadd.xlane.f32.xlu0 %v371
    %v373 = vpop.xlane.xlu0 %372
    %v374 = vsel %vm298, %v195, 0.0
    %375 = vadd.xlane.f32.xlu0 %v374
    %v376 = vpop.xlane.xlu0 %375
    %v377 = vsel %vm298, %v196, 0.0
    %378 = vadd.xlane.f32.xlu0 %v377
    %v379 = vpop.xlane.xlu0 %378
    %v380 = vsel %vm298, %v197, 0.0
    %381 = vadd.xlane.f32.xlu0 %v380
    %v382 = vpop.xlane.xlu0 %381
    %v383 = vsel %vm298, %v198, 0.0
    %384 = vadd.xlane.f32.xlu0 %v383
    %v385 = vpop.xlane.xlu0 %384
    %v386 = vsel %vm298, %v199, 0.0
    %387 = vadd.xlane.f32.xlu0 %v386
    %v388 = vpop.xlane.xlu0 %387
    %v389 = vsel %vm298, %v200, 0.0
    %390 = vadd.xlane.f32.xlu0 %v389
    %v391 = vpop.xlane.xlu0 %390
    %v392 = vsel %vm298, %v201, 0.0
    %393 = vadd.xlane.f32.xlu0 %v392
    %v394 = vpop.xlane.xlu0 %393
    %v395 = vsel %vm298, %v202, 0.0
    %396 = vadd.xlane.f32.xlu0 %v395
    %v397 = vpop.xlane.xlu0 %396
    %v398 = vsel %vm298, %v203, 0.0
    %399 = vadd.xlane.f32.xlu0 %v398
    %v400 = vpop.xlane.xlu0 %399
    %v401 = vsel %vm298, %v204, 0.0
    %402 = vadd.xlane.f32.xlu0 %v401
    %v403 = vpop.xlane.xlu0 %402
    %v404 = vsel %vm298, %v205, 0.0
    %405 = vadd.xlane.f32.xlu0 %v404
    %v406 = vpop.xlane.xlu0 %405
    %v407 = vsel %vm298, %v206, 0.0
    %408 = vadd.xlane.f32.xlu0 %v407
    %v409 = vpop.xlane.xlu0 %408
    %v410 = vsel %vm298, %v207, 0.0
    %411 = vadd.xlane.f32.xlu0 %v410
    %v412 = vpop.xlane.xlu0 %411
    %v413 = vsel %vm298, %v208, 0.0
    %414 = vadd.xlane.f32.xlu0 %v413
    %v415 = vpop.xlane.xlu0 %414
    %v416 = vsel %vm298, %v209, 0.0
    %417 = vadd.xlane.f32.xlu0 %v416
    %v418 = vpop.xlane.xlu0 %417
    %v419 = vsel %vm298, %v210, 0.0
    %420 = vadd.xlane.f32.xlu0 %v419
    %v421 = vpop.xlane.xlu0 %420
    %v422 = vsel %vm298, %v211, 0.0
    %423 = vadd.xlane.f32.xlu0 %v422
    %v424 = vpop.xlane.xlu0 %423
    %v425 = vsel %vm298, %v212, 0.0
    %426 = vadd.xlane.f32.xlu0 %v425
    %v427 = vpop.xlane.xlu0 %426
    %v428 = vsel %vm298, %v213, 0.0
    %429 = vadd.xlane.f32.xlu0 %v428
    %v430 = vpop.xlane.xlu0 %429
    %v431 = vsel %vm298, %v214, 0.0
    %432 = vadd.xlane.f32.xlu0 %v431
    %v433 = vpop.xlane.xlu0 %432
    %v434 = vsel %vm298, %v215, 0.0
    %435 = vadd.xlane.f32.xlu0 %v434
    %v436 = vpop.xlane.xlu0 %435
    %v437 = vsel %vm298, %v216, 0.0
    %438 = vadd.xlane.f32.xlu0 %v437
    %v439 = vpop.xlane.xlu0 %438
    %v440 = vsel %vm298, %v217, 0.0
    %441 = vadd.xlane.f32.xlu0 %v440
    %v442 = vpop.xlane.xlu0 %441
    %v443 = vsel %vm298, %v218, 0.0
    %444 = vadd.xlane.f32.xlu0 %v443
    %v445 = vpop.xlane.xlu0 %444
    %v446 = vsel %vm298, %v219, 0.0
    %447 = vadd.xlane.f32.xlu0 %v446
    %v448 = vpop.xlane.xlu0 %447
    %v449 = vsel %vm298, %v220, 0.0
    %450 = vadd.xlane.f32.xlu0 %v449
    %v451 = vpop.xlane.xlu0 %450
    %v452 = vsel %vm298, %v221, 0.0
    %453 = vadd.xlane.f32.xlu0 %v452
    %v454 = vpop.xlane.xlu0 %453
    %v455 = vsel %vm298, %v222, 0.0
    %456 = vadd.xlane.f32.xlu0 %v455
    %v457 = vpop.xlane.xlu0 %456
    %v458 = vsel %vm298, %v223, 0.0
    %459 = vadd.xlane.f32.xlu0 %v458
    %v460 = vpop.xlane.xlu0 %459
    %v461 = vsel %vm298, %v224, 0.0
    %462 = vadd.xlane.f32.xlu0 %v461
    %v463 = vpop.xlane.xlu0 %462
    %v464 = vsel %vm298, %v225, 0.0
    %465 = vadd.xlane.f32.xlu0 %v464
    %v466 = vpop.xlane.xlu0 %465
    %v467 = vsel %vm298, %v226, 0.0
    %468 = vadd.xlane.f32.xlu0 %v467
    %v469 = vpop.xlane.xlu0 %468
    %v470 = vsel %vm298, %v227, 0.0
    %471 = vadd.xlane.f32.xlu0 %v470
    %v472 = vpop.xlane.xlu0 %471
    %v473 = vsel %vm298, %v228, 0.0
    %474 = vadd.xlane.f32.xlu0 %v473
    %v475 = vpop.xlane.xlu0 %474
    %v476 = vsel %vm298, %v229, 0.0
    %477 = vadd.xlane.f32.xlu0 %v476
    %v478 = vpop.xlane.xlu0 %477
    %v479 = vsel %vm298, %v230, 0.0
    %480 = vadd.xlane.f32.xlu0 %v479
    %v481 = vpop.xlane.xlu0 %480
    %v482 = vsel %vm298, %v231, 0.0
    %483 = vadd.xlane.f32.xlu0 %v482
    %v484 = vpop.xlane.xlu0 %483
    %v485 = vsel %vm298, %v232, 0.0
    %486 = vadd.xlane.f32.xlu0 %v485
    %v487 = vpop.xlane.xlu0 %486
    %v488 = vsel %vm298, %v233, 0.0
    %489 = vadd.xlane.f32.xlu0 %v488
    %v490 = vpop.xlane.xlu0 %489
    %v491 = vsel %vm298, %v234, 0.0
    %492 = vadd.xlane.f32.xlu0 %v491
    %v493 = vpop.xlane.xlu0 %492
    %v494 = vsel %vm298, %v235, 0.0
    %495 = vadd.xlane.f32.xlu0 %v494
    %v496 = vpop.xlane.xlu0 %495
    %v497 = vsel %vm298, %v236, 0.0
    %498 = vadd.xlane.f32.xlu0 %v497
    %v499 = vpop.xlane.xlu0 %498
    %v500 = vsel %vm298, %v237, 0.0
    %501 = vadd.xlane.f32.xlu0 %v500
    %v502 = vpop.xlane.xlu0 %501
    %v503 = vsel %vm298, %v238, 0.0
    %504 = vadd.xlane.f32.xlu0 %v503
    %v505 = vpop.xlane.xlu0 %504
    %v506 = vsel %vm298, %v239, 0.0
    %507 = vadd.xlane.f32.xlu0 %v506
    %v508 = vpop.xlane.xlu0 %507
    %v509 = vsel %vm298, %v240, 0.0
    %510 = vadd.xlane.f32.xlu0 %v509
    %v511 = vpop.xlane.xlu0 %510
    %v512 = vsel %vm298, %v241, 0.0
    %513 = vadd.xlane.f32.xlu0 %v512
    %v514 = vpop.xlane.xlu0 %513
    %v515 = vsel %vm298, %v242, 0.0
    %516 = vadd.xlane.f32.xlu0 %v515
    %v517 = vpop.xlane.xlu0 %516
    %v518 = vsel %vm298, %v243, 0.0
    %519 = vadd.xlane.f32.xlu0 %v518
    %v520 = vpop.xlane.xlu0 %519
    %v521 = vsel %vm298, %v244, 0.0
    %522 = vadd.xlane.f32.xlu0 %v521
    %v523 = vpop.xlane.xlu0 %522
    %v524 = vsel %vm298, %v245, 0.0
    %525 = vadd.xlane.f32.xlu0 %v524
    %v526 = vpop.xlane.xlu0 %525
    %v527 = vsel %vm298, %v246, 0.0
    %528 = vadd.xlane.f32.xlu0 %v527
    %v529 = vpop.xlane.xlu0 %528
    %v530 = vsel %vm298, %v247, 0.0
    %531 = vadd.xlane.f32.xlu0 %v530
    %v532 = vpop.xlane.xlu0 %531
    %v533 = vsel %vm298, %v248, 0.0
    %534 = vadd.xlane.f32.xlu0 %v533
    %v535 = vpop.xlane.xlu0 %534
    %v536 = vsel %vm298, %v249, 0.0
    %537 = vadd.xlane.f32.xlu0 %v536
    %v538 = vpop.xlane.xlu0 %537
    %v539 = vsel %vm298, %v250, 0.0
    %540 = vadd.xlane.f32.xlu0 %v539
    %v541 = vpop.xlane.xlu0 %540
    %v542 = vsel %vm298, %v251, 0.0
    %543 = vadd.xlane.f32.xlu0 %v542
    %v544 = vpop.xlane.xlu0 %543
    %v545 = vsel %vm298, %v252, 0.0
    %546 = vadd.xlane.f32.xlu0 %v545
    %v547 = vpop.xlane.xlu0 %546
    %v548 = vsel %vm298, %v253, 0.0
    %549 = vadd.xlane.f32.xlu0 %v548
    %v550 = vpop.xlane.xlu0 %549
    %v551 = vsel %vm298, %v254, 0.0
    %552 = vadd.xlane.f32.xlu0 %v551
    %v553 = vpop.xlane.xlu0 %552
    %v554 = vsel %vm298, %v255, 0.0
    %555 = vadd.xlane.f32.xlu0 %v554
    %v556 = vpop.xlane.xlu0 %555
    %v557 = vsel %vm298, %v256, 0.0
    %558 = vadd.xlane.f32.xlu0 %v557
    %v559 = vpop.xlane.xlu0 %558
    %v560 = vsel %vm298, %v257, 0.0
    %561 = vadd.xlane.f32.xlu0 %v560
    %v562 = vpop.xlane.xlu0 %561
    %v563 = vsel %vm298, %v258, 0.0
    %564 = vadd.xlane.f32.xlu0 %v563
    %v565 = vpop.xlane.xlu0 %564
    %v566 = vsel %vm298, %v259, 0.0
    %567 = vadd.xlane.f32.xlu0 %v566
    %v568 = vpop.xlane.xlu0 %567
    %v569 = vsel %vm298, %v260, 0.0
    %570 = vadd.xlane.f32.xlu0 %v569
    %v571 = vpop.xlane.xlu0 %570
    %v572 = vsel %vm298, %v261, 0.0
    %573 = vadd.xlane.f32.xlu0 %v572
    %v574 = vpop.xlane.xlu0 %573
    %v575 = vsel %vm298, %v262, 0.0
    %576 = vadd.xlane.f32.xlu0 %v575
    %v577 = vpop.xlane.xlu0 %576
    %v578 = vsel %vm298, %v263, 0.0
    %579 = vadd.xlane.f32.xlu0 %v578
    %v580 = vpop.xlane.xlu0 %579
    %v581 = vsel %vm298, %v264, 0.0
    %582 = vadd.xlane.f32.xlu0 %v581
    %v583 = vpop.xlane.xlu0 %582
    %v584 = vsel %vm298, %v265, 0.0
    %585 = vadd.xlane.f32.xlu0 %v584
    %v586 = vpop.xlane.xlu0 %585
    %v587 = vsel %vm298, %v266, 0.0
    %588 = vadd.xlane.f32.xlu0 %v587
    %v589 = vpop.xlane.xlu0 %588
    %v590 = vsel %vm298, %v267, 0.0
    %591 = vadd.xlane.f32.xlu0 %v590
    %v592 = vpop.xlane.xlu0 %591
    %v593 = vsel %vm298, %v268, 0.0
    %594 = vadd.xlane.f32.xlu0 %v593
    %v595 = vpop.xlane.xlu0 %594
    %v596 = vsel %vm298, %v269, 0.0
    %597 = vadd.xlane.f32.xlu0 %v596
    %v598 = vpop.xlane.xlu0 %597
    %v599 = vsel %vm298, %v270, 0.0
    %600 = vadd.xlane.f32.xlu0 %v599
    %v601 = vpop.xlane.xlu0 %600
    %v602 = vsel %vm298, %v271, 0.0
    %603 = vadd.xlane.f32.xlu0 %v602
    %v604 = vpop.xlane.xlu0 %603
    %v605 = vsel %vm298, %v272, 0.0
    %606 = vadd.xlane.f32.xlu0 %v605
    %v607 = vpop.xlane.xlu0 %606
    %v608 = vsel %vm298, %v273, 0.0
    %609 = vadd.xlane.f32.xlu0 %v608
    %v610 = vpop.xlane.xlu0 %609
    %v611 = vsel %vm298, %v274, 0.0
    %612 = vadd.xlane.f32.xlu0 %v611
    %v613 = vpop.xlane.xlu0 %612
    %v614 = vsel %vm298, %v275, 0.0
    %615 = vadd.xlane.f32.xlu0 %v614
    %v616 = vpop.xlane.xlu0 %615
    %v617 = vsel %vm298, %v276, 0.0
    %618 = vadd.xlane.f32.xlu0 %v617
    %v619 = vpop.xlane.xlu0 %618
    %v620 = vsel %vm298, %v277, 0.0
    %621 = vadd.xlane.f32.xlu0 %v620
    %v622 = vpop.xlane.xlu0 %621
    %v623 = vsel %vm298, %v278, 0.0
    %624 = vadd.xlane.f32.xlu0 %v623
    %v625 = vpop.xlane.xlu0 %624
    %v626 = vsel %vm298, %v279, 0.0
    %627 = vadd.xlane.f32.xlu0 %v626
    %v628 = vpop.xlane.xlu0 %627
    %v629 = vsel %vm298, %v280, 0.0
    %630 = vadd.xlane.f32.xlu0 %v629
    %v631 = vpop.xlane.xlu0 %630
    %v632 = vsel %vm298, %v281, 0.0
    %633 = vadd.xlane.f32.xlu0 %v632
    %v634 = vpop.xlane.xlu0 %633
    %v635 = vsel %vm298, %v282, 0.0
    %636 = vadd.xlane.f32.xlu0 %v635
    %v637 = vpop.xlane.xlu0 %636
    %v638 = vsel %vm298, %v283, 0.0
    %639 = vadd.xlane.f32.xlu0 %v638
    %v640 = vpop.xlane.xlu0 %639
    %v641 = vsel %vm298, %v284, 0.0
    %642 = vadd.xlane.f32.xlu0 %v641
    %v643 = vpop.xlane.xlu0 %642
    %v644 = vsel %vm298, %v285, 0.0
    %645 = vadd.xlane.f32.xlu0 %v644
    %v646 = vpop.xlane.xlu0 %645
    %v647 = vsel %vm298, %v286, 0.0
    %648 = vadd.xlane.f32.xlu0 %v647
    %v649 = vpop.xlane.xlu0 %648
    %v650 = vsel %vm298, %v287, 0.0
    %651 = vadd.xlane.f32.xlu0 %v650
    %v652 = vpop.xlane.xlu0 %651
    %v653 = vsel %vm298, %v288, 0.0
    %654 = vadd.xlane.f32.xlu0 %v653
    %v655 = vpop.xlane.xlu0 %654
    %v656 = vsel %vm298, %v289, 0.0
    %657 = vadd.xlane.f32.xlu0 %v656
    %v658 = vpop.xlane.xlu0 %657
    %v659 = vsel %vm298, %v290, 0.0
    %660 = vadd.xlane.f32.xlu0 %v659
    %v661 = vpop.xlane.xlu0 %660
    %v662 = vsel %vm298, %v291, 0.0
    %663 = vadd.xlane.f32.xlu0 %v662
    %v664 = vpop.xlane.xlu0 %663
    %v665 = vsel %vm298, %v292, 0.0
    %666 = vadd.xlane.f32.xlu0 %v665
    %v667 = vpop.xlane.xlu0 %666
    %v668 = vsel %vm298, %v293, 0.0
    %669 = vadd.xlane.f32.xlu0 %v668
    %v670 = vpop.xlane.xlu0 %669
    %v671 = vsel %vm298, %v294, 0.0
    %672 = vadd.xlane.f32.xlu0 %v671
    %v673 = vpop.xlane.xlu0 %672
    %v674 = vsel %vm298, %v295, 0.0
    %675 = vadd.xlane.f32.xlu0 %v674
    %v676 = vpop.xlane.xlu0 %675
    %v677 = vsel %vm298, %v296, 0.0
    %678 = vadd.xlane.f32.xlu0 %v677
    %v679 = vpop.xlane.xlu0 %678
    %v680 = vsel %vm298, %v297, 0.0
    %681 = vadd.xlane.f32.xlu0 %v680
    %v682 = vpop.xlane.xlu0 %681
    %v683 = vld [vmem:[%s2] sm:$0xff]
    %v685 = vlaneseq
    %v686 = vshrl.u32 %v685, 7
    %v687 = vsub.s32 0, %v686
    %v688 = vrot.slane %v683, %v687
    %690 = vbcast.lane.b32.xlu0 %v688, 256
    %v691 = vpop.permute.xlu0 %690
    %s693 = sor.u32 256, 8
    %694 = vbcast.lane.b32.xlu0 %v688, %s693
    %v695 = vpop.permute.xlu0 %694
    %s697 = sor.u32 256, 16
    %698 = vbcast.lane.b32.xlu0 %v688, %s697
    %v699 = vpop.permute.xlu0 %698
    %s701 = sor.u32 256, 24
    %702 = vbcast.lane.b32.xlu0 %v688, %s701
    %v703 = vpop.permute.xlu0 %702
    %s705 = sor.u32 256, 32
    %706 = vbcast.lane.b32.xlu0 %v688, %s705
    %v707 = vpop.permute.xlu0 %706
    %s709 = sor.u32 256, 40
    %710 = vbcast.lane.b32.xlu0 %v688, %s709
    %v711 = vpop.permute.xlu0 %710
    %s713 = sor.u32 256, 48
    %714 = vbcast.lane.b32.xlu0 %v688, %s713
    %v715 = vpop.permute.xlu0 %714
    %s717 = sor.u32 256, 56
    %718 = vbcast.lane.b32.xlu0 %v688, %s717
    %v719 = vpop.permute.xlu0 %718
    %s721 = sor.u32 256, 64
    %722 = vbcast.lane.b32.xlu0 %v688, %s721
    %v723 = vpop.permute.xlu0 %722
    %s725 = sor.u32 256, 72
    %726 = vbcast.lane.b32.xlu0 %v688, %s725
    %v727 = vpop.permute.xlu0 %726
    %s729 = sor.u32 256, 80
    %730 = vbcast.lane.b32.xlu0 %v688, %s729
    %v731 = vpop.permute.xlu0 %730
    %s733 = sor.u32 256, 88
    %734 = vbcast.lane.b32.xlu0 %v688, %s733
    %v735 = vpop.permute.xlu0 %734
    %s737 = sor.u32 256, 96
    %738 = vbcast.lane.b32.xlu0 %v688, %s737
    %v739 = vpop.permute.xlu0 %738
    %s741 = sor.u32 256, 104
    %742 = vbcast.lane.b32.xlu0 %v688, %s741
    %v743 = vpop.permute.xlu0 %742
    %s745 = sor.u32 256, 112
    %746 = vbcast.lane.b32.xlu0 %v688, %s745
    %v747 = vpop.permute.xlu0 %746
    %s749 = sor.u32 256, 120
    %750 = vbcast.lane.b32.xlu0 %v688, %s749
    %v751 = vpop.permute.xlu0 %750
    %v752 = vlaneseq
    %v753 = vshrl.u32 %v752, 7
    %v754 = vsub.s32 1, %v753
    %v755 = vrot.slane %v683, %v754
    %757 = vbcast.lane.b32.xlu0 %v755, 256
    %v758 = vpop.permute.xlu0 %757
    %s760 = sor.u32 256, 8
    %761 = vbcast.lane.b32.xlu0 %v755, %s760
    %v762 = vpop.permute.xlu0 %761
    %s764 = sor.u32 256, 16
    %765 = vbcast.lane.b32.xlu0 %v755, %s764
    %v766 = vpop.permute.xlu0 %765
    %s768 = sor.u32 256, 24
    %769 = vbcast.lane.b32.xlu0 %v755, %s768
    %v770 = vpop.permute.xlu0 %769
    %s772 = sor.u32 256, 32
    %773 = vbcast.lane.b32.xlu0 %v755, %s772
    %v774 = vpop.permute.xlu0 %773
    %s776 = sor.u32 256, 40
    %777 = vbcast.lane.b32.xlu0 %v755, %s776
    %v778 = vpop.permute.xlu0 %777
    %s780 = sor.u32 256, 48
    %781 = vbcast.lane.b32.xlu0 %v755, %s780
    %v782 = vpop.permute.xlu0 %781
    %s784 = sor.u32 256, 56
    %785 = vbcast.lane.b32.xlu0 %v755, %s784
    %v786 = vpop.permute.xlu0 %785
    %s788 = sor.u32 256, 64
    %789 = vbcast.lane.b32.xlu0 %v755, %s788
    %v790 = vpop.permute.xlu0 %789
    %s792 = sor.u32 256, 72
    %793 = vbcast.lane.b32.xlu0 %v755, %s792
    %v794 = vpop.permute.xlu0 %793
    %s796 = sor.u32 256, 80
    %797 = vbcast.lane.b32.xlu0 %v755, %s796
    %v798 = vpop.permute.xlu0 %797
    %s800 = sor.u32 256, 88
    %801 = vbcast.lane.b32.xlu0 %v755, %s800
    %v802 = vpop.permute.xlu0 %801
    %s804 = sor.u32 256, 96
    %805 = vbcast.lane.b32.xlu0 %v755, %s804
    %v806 = vpop.permute.xlu0 %805
    %s808 = sor.u32 256, 104
    %809 = vbcast.lane.b32.xlu0 %v755, %s808
    %v810 = vpop.permute.xlu0 %809
    %s812 = sor.u32 256, 112
    %813 = vbcast.lane.b32.xlu0 %v755, %s812
    %v814 = vpop.permute.xlu0 %813
    %s816 = sor.u32 256, 120
    %817 = vbcast.lane.b32.xlu0 %v755, %s816
    %v818 = vpop.permute.xlu0 %817
    %v819 = vlaneseq
    %v820 = vshrl.u32 %v819, 7
    %v821 = vsub.s32 2, %v820
    %v822 = vrot.slane %v683, %v821
    %824 = vbcast.lane.b32.xlu0 %v822, 256
    %v825 = vpop.permute.xlu0 %824
    %s827 = sor.u32 256, 8
    %828 = vbcast.lane.b32.xlu0 %v822, %s827
    %v829 = vpop.permute.xlu0 %828
    %s831 = sor.u32 256, 16
    %832 = vbcast.lane.b32.xlu0 %v822, %s831
    %v833 = vpop.permute.xlu0 %832
    %s835 = sor.u32 256, 24
    %836 = vbcast.lane.b32.xlu0 %v822, %s835
    %v837 = vpop.permute.xlu0 %836
    %s839 = sor.u32 256, 32
    %840 = vbcast.lane.b32.xlu0 %v822, %s839
    %v841 = vpop.permute.xlu0 %840
    %s843 = sor.u32 256, 40
    %844 = vbcast.lane.b32.xlu0 %v822, %s843
    %v845 = vpop.permute.xlu0 %844
    %s847 = sor.u32 256, 48
    %848 = vbcast.lane.b32.xlu0 %v822, %s847
    %v849 = vpop.permute.xlu0 %848
    %s851 = sor.u32 256, 56
    %852 = vbcast.lane.b32.xlu0 %v822, %s851
    %v853 = vpop.permute.xlu0 %852
    %s855 = sor.u32 256, 64
    %856 = vbcast.lane.b32.xlu0 %v822, %s855
    %v857 = vpop.permute.xlu0 %856
    %s859 = sor.u32 256, 72
    %860 = vbcast.lane.b32.xlu0 %v822, %s859
    %v861 = vpop.permute.xlu0 %860
    %s863 = sor.u32 256, 80
    %864 = vbcast.lane.b32.xlu0 %v822, %s863
    %v865 = vpop.permute.xlu0 %864
    %s867 = sor.u32 256, 88
    %868 = vbcast.lane.b32.xlu0 %v822, %s867
    %v869 = vpop.permute.xlu0 %868
    %s871 = sor.u32 256, 96
    %872 = vbcast.lane.b32.xlu0 %v822, %s871
    %v873 = vpop.permute.xlu0 %872
    %s875 = sor.u32 256, 104
    %876 = vbcast.lane.b32.xlu0 %v822, %s875
    %v877 = vpop.permute.xlu0 %876
    %s879 = sor.u32 256, 112
    %880 = vbcast.lane.b32.xlu0 %v822, %s879
    %v881 = vpop.permute.xlu0 %880
    %s883 = sor.u32 256, 120
    %884 = vbcast.lane.b32.xlu0 %v822, %s883
    %v885 = vpop.permute.xlu0 %884
    %v886 = vlaneseq
    %v887 = vshrl.u32 %v886, 7
    %v888 = vsub.s32 3, %v887
    %v889 = vrot.slane %v683, %v888
    %891 = vbcast.lane.b32.xlu0 %v889, 256
    %v892 = vpop.permute.xlu0 %891
    %s894 = sor.u32 256, 8
    %895 = vbcast.lane.b32.xlu0 %v889, %s894
    %v896 = vpop.permute.xlu0 %895
    %s898 = sor.u32 256, 16
    %899 = vbcast.lane.b32.xlu0 %v889, %s898
    %v900 = vpop.permute.xlu0 %899
    %s902 = sor.u32 256, 24
    %903 = vbcast.lane.b32.xlu0 %v889, %s902
    %v904 = vpop.permute.xlu0 %903
    %s906 = sor.u32 256, 32
    %907 = vbcast.lane.b32.xlu0 %v889, %s906
    %v908 = vpop.permute.xlu0 %907
    %s910 = sor.u32 256, 40
    %911 = vbcast.lane.b32.xlu0 %v889, %s910
    %v912 = vpop.permute.xlu0 %911
    %s914 = sor.u32 256, 48
    %915 = vbcast.lane.b32.xlu0 %v889, %s914
    %v916 = vpop.permute.xlu0 %915
    %s918 = sor.u32 256, 56
    %919 = vbcast.lane.b32.xlu0 %v889, %s918
    %v920 = vpop.permute.xlu0 %919
    %s922 = sor.u32 256, 64
    %923 = vbcast.lane.b32.xlu0 %v889, %s922
    %v924 = vpop.permute.xlu0 %923
    %s926 = sor.u32 256, 72
    %927 = vbcast.lane.b32.xlu0 %v889, %s926
    %v928 = vpop.permute.xlu0 %927
    %s930 = sor.u32 256, 80
    %931 = vbcast.lane.b32.xlu0 %v889, %s930
    %v932 = vpop.permute.xlu0 %931
    %s934 = sor.u32 256, 88
    %935 = vbcast.lane.b32.xlu0 %v889, %s934
    %v936 = vpop.permute.xlu0 %935
    %s938 = sor.u32 256, 96
    %939 = vbcast.lane.b32.xlu0 %v889, %s938
    %v940 = vpop.permute.xlu0 %939
    %s942 = sor.u32 256, 104
    %943 = vbcast.lane.b32.xlu0 %v889, %s942
    %v944 = vpop.permute.xlu0 %943
    %s946 = sor.u32 256, 112
    %947 = vbcast.lane.b32.xlu0 %v889, %s946
    %v948 = vpop.permute.xlu0 %947
    %s950 = sor.u32 256, 120
    %951 = vbcast.lane.b32.xlu0 %v889, %s950
    %v952 = vpop.permute.xlu0 %951
    %v953 = vlaneseq
    %v954 = vshrl.u32 %v953, 7
    %v955 = vsub.s32 4, %v954
    %v956 = vrot.slane %v683, %v955
    %958 = vbcast.lane.b32.xlu0 %v956, 256
    %v959 = vpop.permute.xlu0 %958
    %s961 = sor.u32 256, 8
    %962 = vbcast.lane.b32.xlu0 %v956, %s961
    %v963 = vpop.permute.xlu0 %962
    %s965 = sor.u32 256, 16
    %966 = vbcast.lane.b32.xlu0 %v956, %s965
    %v967 = vpop.permute.xlu0 %966
    %s969 = sor.u32 256, 24
    %970 = vbcast.lane.b32.xlu0 %v956, %s969
    %v971 = vpop.permute.xlu0 %970
    %s973 = sor.u32 256, 32
    %974 = vbcast.lane.b32.xlu0 %v956, %s973
    %v975 = vpop.permute.xlu0 %974
    %s977 = sor.u32 256, 40
    %978 = vbcast.lane.b32.xlu0 %v956, %s977
    %v979 = vpop.permute.xlu0 %978
    %s981 = sor.u32 256, 48
    %982 = vbcast.lane.b32.xlu0 %v956, %s981
    %v983 = vpop.permute.xlu0 %982
    %s985 = sor.u32 256, 56
    %986 = vbcast.lane.b32.xlu0 %v956, %s985
    %v987 = vpop.permute.xlu0 %986
    %s989 = sor.u32 256, 64
    %990 = vbcast.lane.b32.xlu0 %v956, %s989
    %v991 = vpop.permute.xlu0 %990
    %s993 = sor.u32 256, 72
    %994 = vbcast.lane.b32.xlu0 %v956, %s993
    %v995 = vpop.permute.xlu0 %994
    %s997 = sor.u32 256, 80
    %998 = vbcast.lane.b32.xlu0 %v956, %s997
    %v999 = vpop.permute.xlu0 %998
    %s1001 = sor.u32 256, 88
    %1002 = vbcast.lane.b32.xlu0 %v956, %s1001
    %v1003 = vpop.permute.xlu0 %1002
    %s1005 = sor.u32 256, 96
    %1006 = vbcast.lane.b32.xlu0 %v956, %s1005
    %v1007 = vpop.permute.xlu0 %1006
    %s1009 = sor.u32 256, 104
    %1010 = vbcast.lane.b32.xlu0 %v956, %s1009
    %v1011 = vpop.permute.xlu0 %1010
    %s1013 = sor.u32 256, 112
    %1014 = vbcast.lane.b32.xlu0 %v956, %s1013
    %v1015 = vpop.permute.xlu0 %1014
    %s1017 = sor.u32 256, 120
    %1018 = vbcast.lane.b32.xlu0 %v956, %s1017
    %v1019 = vpop.permute.xlu0 %1018
    %v1020 = vlaneseq
    %v1021 = vshrl.u32 %v1020, 7
    %v1022 = vsub.s32 5, %v1021
    %v1023 = vrot.slane %v683, %v1022
    %1025 = vbcast.lane.b32.xlu0 %v1023, 256
    %v1026 = vpop.permute.xlu0 %1025
    %s1028 = sor.u32 256, 8
    %1029 = vbcast.lane.b32.xlu0 %v1023, %s1028
    %v1030 = vpop.permute.xlu0 %1029
    %s1032 = sor.u32 256, 16
    %1033 = vbcast.lane.b32.xlu0 %v1023, %s1032
    %v1034 = vpop.permute.xlu0 %1033
    %s1036 = sor.u32 256, 24
    %1037 = vbcast.lane.b32.xlu0 %v1023, %s1036
    %v1038 = vpop.permute.xlu0 %1037
    %s1040 = sor.u32 256, 32
    %1041 = vbcast.lane.b32.xlu0 %v1023, %s1040
    %v1042 = vpop.permute.xlu0 %1041
    %s1044 = sor.u32 256, 40
    %1045 = vbcast.lane.b32.xlu0 %v1023, %s1044
    %v1046 = vpop.permute.xlu0 %1045
    %s1048 = sor.u32 256, 48
    %1049 = vbcast.lane.b32.xlu0 %v1023, %s1048
    %v1050 = vpop.permute.xlu0 %1049
    %s1052 = sor.u32 256, 56
    %1053 = vbcast.lane.b32.xlu0 %v1023, %s1052
    %v1054 = vpop.permute.xlu0 %1053
    %s1056 = sor.u32 256, 64
    %1057 = vbcast.lane.b32.xlu0 %v1023, %s1056
    %v1058 = vpop.permute.xlu0 %1057
    %s1060 = sor.u32 256, 72
    %1061 = vbcast.lane.b32.xlu0 %v1023, %s1060
    %v1062 = vpop.permute.xlu0 %1061
    %s1064 = sor.u32 256, 80
    %1065 = vbcast.lane.b32.xlu0 %v1023, %s1064
    %v1066 = vpop.permute.xlu0 %1065
    %s1068 = sor.u32 256, 88
    %1069 = vbcast.lane.b32.xlu0 %v1023, %s1068
    %v1070 = vpop.permute.xlu0 %1069
    %s1072 = sor.u32 256, 96
    %1073 = vbcast.lane.b32.xlu0 %v1023, %s1072
    %v1074 = vpop.permute.xlu0 %1073
    %s1076 = sor.u32 256, 104
    %1077 = vbcast.lane.b32.xlu0 %v1023, %s1076
    %v1078 = vpop.permute.xlu0 %1077
    %s1080 = sor.u32 256, 112
    %1081 = vbcast.lane.b32.xlu0 %v1023, %s1080
    %v1082 = vpop.permute.xlu0 %1081
    %s1084 = sor.u32 256, 120
    %1085 = vbcast.lane.b32.xlu0 %v1023, %s1084
    %v1086 = vpop.permute.xlu0 %1085
    %v1087 = vlaneseq
    %v1088 = vshrl.u32 %v1087, 7
    %v1089 = vsub.s32 6, %v1088
    %v1090 = vrot.slane %v683, %v1089
    %1092 = vbcast.lane.b32.xlu0 %v1090, 256
    %v1093 = vpop.permute.xlu0 %1092
    %s1095 = sor.u32 256, 8
    %1096 = vbcast.lane.b32.xlu0 %v1090, %s1095
    %v1097 = vpop.permute.xlu0 %1096
    %s1099 = sor.u32 256, 16
    %1100 = vbcast.lane.b32.xlu0 %v1090, %s1099
    %v1101 = vpop.permute.xlu0 %1100
    %s1103 = sor.u32 256, 24
    %1104 = vbcast.lane.b32.xlu0 %v1090, %s1103
    %v1105 = vpop.permute.xlu0 %1104
    %s1107 = sor.u32 256, 32
    %1108 = vbcast.lane.b32.xlu0 %v1090, %s1107
    %v1109 = vpop.permute.xlu0 %1108
    %s1111 = sor.u32 256, 40
    %1112 = vbcast.lane.b32.xlu0 %v1090, %s1111
    %v1113 = vpop.permute.xlu0 %1112
    %s1115 = sor.u32 256, 48
    %1116 = vbcast.lane.b32.xlu0 %v1090, %s1115
    %v1117 = vpop.permute.xlu0 %1116
    %s1119 = sor.u32 256, 56
    %1120 = vbcast.lane.b32.xlu0 %v1090, %s1119
    %v1121 = vpop.permute.xlu0 %1120
    %s1123 = sor.u32 256, 64
    %1124 = vbcast.lane.b32.xlu0 %v1090, %s1123
    %v1125 = vpop.permute.xlu0 %1124
    %s1127 = sor.u32 256, 72
    %1128 = vbcast.lane.b32.xlu0 %v1090, %s1127
    %v1129 = vpop.permute.xlu0 %1128
    %s1131 = sor.u32 256, 80
    %1132 = vbcast.lane.b32.xlu0 %v1090, %s1131
    %v1133 = vpop.permute.xlu0 %1132
    %s1135 = sor.u32 256, 88
    %1136 = vbcast.lane.b32.xlu0 %v1090, %s1135
    %v1137 = vpop.permute.xlu0 %1136
    %s1139 = sor.u32 256, 96
    %1140 = vbcast.lane.b32.xlu0 %v1090, %s1139
    %v1141 = vpop.permute.xlu0 %1140
    %s1143 = sor.u32 256, 104
    %1144 = vbcast.lane.b32.xlu0 %v1090, %s1143
    %v1145 = vpop.permute.xlu0 %1144
    %s1147 = sor.u32 256, 112
    %1148 = vbcast.lane.b32.xlu0 %v1090, %s1147
    %v1149 = vpop.permute.xlu0 %1148
    %s1151 = sor.u32 256, 120
    %1152 = vbcast.lane.b32.xlu0 %v1090, %s1151
    %v1153 = vpop.permute.xlu0 %1152
    %v1154 = vlaneseq
    %v1155 = vshrl.u32 %v1154, 7
    %v1156 = vsub.s32 7, %v1155
    %v1157 = vrot.slane %v683, %v1156
    %1159 = vbcast.lane.b32.xlu0 %v1157, 256
    %v1160 = vpop.permute.xlu0 %1159
    %s1162 = sor.u32 256, 8
    %1163 = vbcast.lane.b32.xlu0 %v1157, %s1162
    %v1164 = vpop.permute.xlu0 %1163
    %s1166 = sor.u32 256, 16
    %1167 = vbcast.lane.b32.xlu0 %v1157, %s1166
    %v1168 = vpop.permute.xlu0 %1167
    %s1170 = sor.u32 256, 24
    %1171 = vbcast.lane.b32.xlu0 %v1157, %s1170
    %v1172 = vpop.permute.xlu0 %1171
    %s1174 = sor.u32 256, 32
    %1175 = vbcast.lane.b32.xlu0 %v1157, %s1174
    %v1176 = vpop.permute.xlu0 %1175
    %s1178 = sor.u32 256, 40
    %1179 = vbcast.lane.b32.xlu0 %v1157, %s1178
    %v1180 = vpop.permute.xlu0 %1179
    %s1182 = sor.u32 256, 48
    %1183 = vbcast.lane.b32.xlu0 %v1157, %s1182
    %v1184 = vpop.permute.xlu0 %1183
    %s1186 = sor.u32 256, 56
    %1187 = vbcast.lane.b32.xlu0 %v1157, %s1186
    %v1188 = vpop.permute.xlu0 %1187
    %s1190 = sor.u32 256, 64
    %1191 = vbcast.lane.b32.xlu0 %v1157, %s1190
    %v1192 = vpop.permute.xlu0 %1191
    %s1194 = sor.u32 256, 72
    %1195 = vbcast.lane.b32.xlu0 %v1157, %s1194
    %v1196 = vpop.permute.xlu0 %1195
    %s1198 = sor.u32 256, 80
    %1199 = vbcast.lane.b32.xlu0 %v1157, %s1198
    %v1200 = vpop.permute.xlu0 %1199
    %s1202 = sor.u32 256, 88
    %1203 = vbcast.lane.b32.xlu0 %v1157, %s1202
    %v1204 = vpop.permute.xlu0 %1203
    %s1206 = sor.u32 256, 96
    %1207 = vbcast.lane.b32.xlu0 %v1157, %s1206
    %v1208 = vpop.permute.xlu0 %1207
    %s1210 = sor.u32 256, 104
    %1211 = vbcast.lane.b32.xlu0 %v1157, %s1210
    %v1212 = vpop.permute.xlu0 %1211
    %s1214 = sor.u32 256, 112
    %1215 = vbcast.lane.b32.xlu0 %v1157, %s1214
    %v1216 = vpop.permute.xlu0 %1215
    %s1218 = sor.u32 256, 120
    %1219 = vbcast.lane.b32.xlu0 %v1157, %s1218
    %v1220 = vpop.permute.xlu0 %1219
    %v1349 = vadd.f32 %v301, %v691
    %v1350 = vadd.f32 %v304, %v695
    %v1351 = vadd.f32 %v307, %v699
    %v1352 = vadd.f32 %v310, %v703
    %v1353 = vadd.f32 %v313, %v707
    %v1354 = vadd.f32 %v316, %v711
    %v1355 = vadd.f32 %v319, %v715
    %v1356 = vadd.f32 %v322, %v719
    %v1357 = vadd.f32 %v325, %v723
    %v1358 = vadd.f32 %v328, %v727
    %v1359 = vadd.f32 %v331, %v731
    %v1360 = vadd.f32 %v334, %v735
    %v1361 = vadd.f32 %v337, %v739
    %v1362 = vadd.f32 %v340, %v743
    %v1363 = vadd.f32 %v343, %v747
    %v1364 = vadd.f32 %v346, %v751
    %v1365 = vadd.f32 %v349, %v758
    %v1366 = vadd.f32 %v352, %v762
    %v1367 = vadd.f32 %v355, %v766
    %v1368 = vadd.f32 %v358, %v770
    %v1369 = vadd.f32 %v361, %v774
    %v1370 = vadd.f32 %v364, %v778
    %v1371 = vadd.f32 %v367, %v782
    %v1372 = vadd.f32 %v370, %v786
    %v1373 = vadd.f32 %v373, %v790
    %v1374 = vadd.f32 %v376, %v794
    %v1375 = vadd.f32 %v379, %v798
    %v1376 = vadd.f32 %v382, %v802
    %v1377 = vadd.f32 %v385, %v806
    %v1378 = vadd.f32 %v388, %v810
    %v1379 = vadd.f32 %v391, %v814
    %v1380 = vadd.f32 %v394, %v818
    %v1381 = vadd.f32 %v397, %v825
    %v1382 = vadd.f32 %v400, %v829
    %v1383 = vadd.f32 %v403, %v833
    %v1384 = vadd.f32 %v406, %v837
    %v1385 = vadd.f32 %v409, %v841
    %v1386 = vadd.f32 %v412, %v845
    %v1387 = vadd.f32 %v415, %v849
    %v1388 = vadd.f32 %v418, %v853
    %v1389 = vadd.f32 %v421, %v857
    %v1390 = vadd.f32 %v424, %v861
    %v1391 = vadd.f32 %v427, %v865
    %v1392 = vadd.f32 %v430, %v869
    %v1393 = vadd.f32 %v433, %v873
    %v1394 = vadd.f32 %v436, %v877
    %v1395 = vadd.f32 %v439, %v881
    %v1396 = vadd.f32 %v442, %v885
    %v1397 = vadd.f32 %v445, %v892
    %v1398 = vadd.f32 %v448, %v896
    %v1399 = vadd.f32 %v451, %v900
    %v1400 = vadd.f32 %v454, %v904
    %v1401 = vadd.f32 %v457, %v908
    %v1402 = vadd.f32 %v460, %v912
    %v1403 = vadd.f32 %v463, %v916
    %v1404 = vadd.f32 %v466, %v920
    %v1405 = vadd.f32 %v469, %v924
    %v1406 = vadd.f32 %v472, %v928
    %v1407 = vadd.f32 %v475, %v932
    %v1408 = vadd.f32 %v478, %v936
    %v1409 = vadd.f32 %v481, %v940
    %v1410 = vadd.f32 %v484, %v944
    %v1411 = vadd.f32 %v487, %v948
    %v1412 = vadd.f32 %v490, %v952
    %v1413 = vadd.f32 %v493, %v959
    %v1414 = vadd.f32 %v496, %v963
    %v1415 = vadd.f32 %v499, %v967
    %v1416 = vadd.f32 %v502, %v971
    %v1417 = vadd.f32 %v505, %v975
    %v1418 = vadd.f32 %v508, %v979
    %v1419 = vadd.f32 %v511, %v983
    %v1420 = vadd.f32 %v514, %v987
    %v1421 = vadd.f32 %v517, %v991
    %v1422 = vadd.f32 %v520, %v995
    %v1423 = vadd.f32 %v523, %v999
    %v1424 = vadd.f32 %v526, %v1003
    %v1425 = vadd.f32 %v529, %v1007
    %v1426 = vadd.f32 %v532, %v1011
    %v1427 = vadd.f32 %v535, %v1015
    %v1428 = vadd.f32 %v538, %v1019
    %v1429 = vadd.f32 %v541, %v1026
    %v1430 = vadd.f32 %v544, %v1030
    %v1431 = vadd.f32 %v547, %v1034
    %v1432 = vadd.f32 %v550, %v1038
    %v1433 = vadd.f32 %v553, %v1042
    %v1434 = vadd.f32 %v556, %v1046
    %v1435 = vadd.f32 %v559, %v1050
    %v1436 = vadd.f32 %v562, %v1054
    %v1437 = vadd.f32 %v565, %v1058
    %v1438 = vadd.f32 %v568, %v1062
    %v1439 = vadd.f32 %v571, %v1066
    %v1440 = vadd.f32 %v574, %v1070
    %v1441 = vadd.f32 %v577, %v1074
    %v1442 = vadd.f32 %v580, %v1078
    %v1443 = vadd.f32 %v583, %v1082
    %v1444 = vadd.f32 %v586, %v1086
    %v1445 = vadd.f32 %v589, %v1093
    %v1446 = vadd.f32 %v592, %v1097
    %v1447 = vadd.f32 %v595, %v1101
    %v1448 = vadd.f32 %v598, %v1105
    %v1449 = vadd.f32 %v601, %v1109
    %v1450 = vadd.f32 %v604, %v1113
    %v1451 = vadd.f32 %v607, %v1117
    %v1452 = vadd.f32 %v610, %v1121
    %v1453 = vadd.f32 %v613, %v1125
    %v1454 = vadd.f32 %v616, %v1129
    %v1455 = vadd.f32 %v619, %v1133
    %v1456 = vadd.f32 %v622, %v1137
    %v1457 = vadd.f32 %v625, %v1141
    %v1458 = vadd.f32 %v628, %v1145
    %v1459 = vadd.f32 %v631, %v1149
    %v1460 = vadd.f32 %v634, %v1153
    %v1461 = vadd.f32 %v637, %v1160
    %v1462 = vadd.f32 %v640, %v1164
    %v1463 = vadd.f32 %v643, %v1168
    %v1464 = vadd.f32 %v646, %v1172
    %v1465 = vadd.f32 %v649, %v1176
    %v1466 = vadd.f32 %v652, %v1180
    %v1467 = vadd.f32 %v655, %v1184
    %v1468 = vadd.f32 %v658, %v1188
    %v1469 = vadd.f32 %v661, %v1192
    %v1470 = vadd.f32 %v664, %v1196
    %v1471 = vadd.f32 %v667, %v1200
    %v1472 = vadd.f32 %v670, %v1204
    %v1473 = vadd.f32 %v673, %v1208
    %v1474 = vadd.f32 %v676, %v1212
    %v1475 = vadd.f32 %v679, %v1216
    %v1476 = vadd.f32 %v682, %v1220
    %v1477 = vxor.u32 %v1349, 2147483648
    %v1478 = vxor.u32 %v1350, 2147483648
    %v1479 = vxor.u32 %v1351, 2147483648
    %v1480 = vxor.u32 %v1352, 2147483648
    %v1481 = vxor.u32 %v1353, 2147483648
    %v1482 = vxor.u32 %v1354, 2147483648
    %v1483 = vxor.u32 %v1355, 2147483648
    %v1484 = vxor.u32 %v1356, 2147483648
    %v1485 = vxor.u32 %v1357, 2147483648
    %v1486 = vxor.u32 %v1358, 2147483648
    %v1487 = vxor.u32 %v1359, 2147483648
    %v1488 = vxor.u32 %v1360, 2147483648
    %v1489 = vxor.u32 %v1361, 2147483648
    %v1490 = vxor.u32 %v1362, 2147483648
    %v1491 = vxor.u32 %v1363, 2147483648
    %v1492 = vxor.u32 %v1364, 2147483648
    %v1493 = vxor.u32 %v1365, 2147483648
    %v1494 = vxor.u32 %v1366, 2147483648
    %v1495 = vxor.u32 %v1367, 2147483648
    %v1496 = vxor.u32 %v1368, 2147483648
    %v1497 = vxor.u32 %v1369, 2147483648
    %v1498 = vxor.u32 %v1370, 2147483648
    %v1499 = vxor.u32 %v1371, 2147483648
    %v1500 = vxor.u32 %v1372, 2147483648
    %v1501 = vxor.u32 %v1373, 2147483648
    %v1502 = vxor.u32 %v1374, 2147483648
    %v1503 = vxor.u32 %v1375, 2147483648
    %v1504 = vxor.u32 %v1376, 2147483648
    %v1505 = vxor.u32 %v1377, 2147483648
    %v1506 = vxor.u32 %v1378, 2147483648
    %v1507 = vxor.u32 %v1379, 2147483648
    %v1508 = vxor.u32 %v1380, 2147483648
    %v1509 = vxor.u32 %v1381, 2147483648
    %v1510 = vxor.u32 %v1382, 2147483648
    %v1511 = vxor.u32 %v1383, 2147483648
    %v1512 = vxor.u32 %v1384, 2147483648
    %v1513 = vxor.u32 %v1385, 2147483648
    %v1514 = vxor.u32 %v1386, 2147483648
    %v1515 = vxor.u32 %v1387, 2147483648
    %v1516 = vxor.u32 %v1388, 2147483648
    %v1517 = vxor.u32 %v1389, 2147483648
    %v1518 = vxor.u32 %v1390, 2147483648
    %v1519 = vxor.u32 %v1391, 2147483648
    %v1520 = vxor.u32 %v1392, 2147483648
    %v1521 = vxor.u32 %v1393, 2147483648
    %v1522 = vxor.u32 %v1394, 2147483648
    %v1523 = vxor.u32 %v1395, 2147483648
    %v1524 = vxor.u32 %v1396, 2147483648
    %v1525 = vxor.u32 %v1397, 2147483648
    %v1526 = vxor.u32 %v1398, 2147483648
    %v1527 = vxor.u32 %v1399, 2147483648
    %v1528 = vxor.u32 %v1400, 2147483648
    %v1529 = vxor.u32 %v1401, 2147483648
    %v1530 = vxor.u32 %v1402, 2147483648
    %v1531 = vxor.u32 %v1403, 2147483648
    %v1532 = vxor.u32 %v1404, 2147483648
    %v1533 = vxor.u32 %v1405, 2147483648
    %v1534 = vxor.u32 %v1406, 2147483648
    %v1535 = vxor.u32 %v1407, 2147483648
    %v1536 = vxor.u32 %v1408, 2147483648
    %v1537 = vxor.u32 %v1409, 2147483648
    %v1538 = vxor.u32 %v1410, 2147483648
    %v1539 = vxor.u32 %v1411, 2147483648
    %v1540 = vxor.u32 %v1412, 2147483648
    %v1541 = vxor.u32 %v1413, 2147483648
    %v1542 = vxor.u32 %v1414, 2147483648
    %v1543 = vxor.u32 %v1415, 2147483648
    %v1544 = vxor.u32 %v1416, 2147483648
    %v1545 = vxor.u32 %v1417, 2147483648
    %v1546 = vxor.u32 %v1418, 2147483648
    %v1547 = vxor.u32 %v1419, 2147483648
    %v1548 = vxor.u32 %v1420, 2147483648
    %v1549 = vxor.u32 %v1421, 2147483648
    %v1550 = vxor.u32 %v1422, 2147483648
    %v1551 = vxor.u32 %v1423, 2147483648
    %v1552 = vxor.u32 %v1424, 2147483648
    %v1553 = vxor.u32 %v1425, 2147483648
    %v1554 = vxor.u32 %v1426, 2147483648
    %v1555 = vxor.u32 %v1427, 2147483648
    %v1556 = vxor.u32 %v1428, 2147483648
    %v1557 = vxor.u32 %v1429, 2147483648
    %v1558 = vxor.u32 %v1430, 2147483648
    %v1559 = vxor.u32 %v1431, 2147483648
    %v1560 = vxor.u32 %v1432, 2147483648
    %v1561 = vxor.u32 %v1433, 2147483648
    %v1562 = vxor.u32 %v1434, 2147483648
    %v1563 = vxor.u32 %v1435, 2147483648
    %v1564 = vxor.u32 %v1436, 2147483648
    %v1565 = vxor.u32 %v1437, 2147483648
    %v1566 = vxor.u32 %v1438, 2147483648
    %v1567 = vxor.u32 %v1439, 2147483648
    %v1568 = vxor.u32 %v1440, 2147483648
    %v1569 = vxor.u32 %v1441, 2147483648
    %v1570 = vxor.u32 %v1442, 2147483648
    %v1571 = vxor.u32 %v1443, 2147483648
    %v1572 = vxor.u32 %v1444, 2147483648
    %v1573 = vxor.u32 %v1445, 2147483648
    %v1574 = vxor.u32 %v1446, 2147483648
    %v1575 = vxor.u32 %v1447, 2147483648
    %v1576 = vxor.u32 %v1448, 2147483648
    %v1577 = vxor.u32 %v1449, 2147483648
    %v1578 = vxor.u32 %v1450, 2147483648
    %v1579 = vxor.u32 %v1451, 2147483648
    %v1580 = vxor.u32 %v1452, 2147483648
    %v1581 = vxor.u32 %v1453, 2147483648
    %v1582 = vxor.u32 %v1454, 2147483648
    %v1583 = vxor.u32 %v1455, 2147483648
    %v1584 = vxor.u32 %v1456, 2147483648
    %v1585 = vxor.u32 %v1457, 2147483648
    %v1586 = vxor.u32 %v1458, 2147483648
    %v1587 = vxor.u32 %v1459, 2147483648
    %v1588 = vxor.u32 %v1460, 2147483648
    %v1589 = vxor.u32 %v1461, 2147483648
    %v1590 = vxor.u32 %v1462, 2147483648
    %v1591 = vxor.u32 %v1463, 2147483648
    %v1592 = vxor.u32 %v1464, 2147483648
    %v1593 = vxor.u32 %v1465, 2147483648
    %v1594 = vxor.u32 %v1466, 2147483648
    %v1595 = vxor.u32 %v1467, 2147483648
    %v1596 = vxor.u32 %v1468, 2147483648
    %v1597 = vxor.u32 %v1469, 2147483648
    %v1598 = vxor.u32 %v1470, 2147483648
    %v1599 = vxor.u32 %v1471, 2147483648
    %v1600 = vxor.u32 %v1472, 2147483648
    %v1601 = vxor.u32 %v1473, 2147483648
    %v1602 = vxor.u32 %v1474, 2147483648
    %v1603 = vxor.u32 %v1475, 2147483648
    %v1604 = vxor.u32 %v1476, 2147483648
    %v1605 = vmul.f32 %v1477, 1.442695
    %v1606 = vpow.pop %v1605
    %v1607 = vmul.f32 %v1478, 1.442695
    %v1608 = vpow.pop %v1607
    %v1609 = vmul.f32 %v1479, 1.442695
    %v1610 = vpow.pop %v1609
    %v1611 = vmul.f32 %v1480, 1.442695
    %v1612 = vpow.pop %v1611
    %v1613 = vmul.f32 %v1481, 1.442695
    %v1614 = vpow.pop %v1613
    %v1615 = vmul.f32 %v1482, 1.442695
    %v1616 = vpow.pop %v1615
    %v1617 = vmul.f32 %v1483, 1.442695
    %v1618 = vpow.pop %v1617
    %v1619 = vmul.f32 %v1484, 1.442695
    %v1620 = vpow.pop %v1619
    %v1621 = vmul.f32 %v1485, 1.442695
    %v1622 = vpow.pop %v1621
    %v1623 = vmul.f32 %v1486, 1.442695
    %v1624 = vpow.pop %v1623
    %v1625 = vmul.f32 %v1487, 1.442695
    %v1626 = vpow.pop %v1625
    %v1627 = vmul.f32 %v1488, 1.442695
    %v1628 = vpow.pop %v1627
    %v1629 = vmul.f32 %v1489, 1.442695
    %v1630 = vpow.pop %v1629
    %v1631 = vmul.f32 %v1490, 1.442695
    %v1632 = vpow.pop %v1631
    %v1633 = vmul.f32 %v1491, 1.442695
    %v1634 = vpow.pop %v1633
    %v1635 = vmul.f32 %v1492, 1.442695
    %v1636 = vpow.pop %v1635
    %v1637 = vmul.f32 %v1493, 1.442695
    %v1638 = vpow.pop %v1637
    %v1639 = vmul.f32 %v1494, 1.442695
    %v1640 = vpow.pop %v1639
    %v1641 = vmul.f32 %v1495, 1.442695
    %v1642 = vpow.pop %v1641
    %v1643 = vmul.f32 %v1496, 1.442695
    %v1644 = vpow.pop %v1643
    %v1645 = vmul.f32 %v1497, 1.442695
    %v1646 = vpow.pop %v1645
    %v1647 = vmul.f32 %v1498, 1.442695
    %v1648 = vpow.pop %v1647
    %v1649 = vmul.f32 %v1499, 1.442695
    %v1650 = vpow.pop %v1649
    %v1651 = vmul.f32 %v1500, 1.442695
    %v1652 = vpow.pop %v1651
    %v1653 = vmul.f32 %v1501, 1.442695
    %v1654 = vpow.pop %v1653
    %v1655 = vmul.f32 %v1502, 1.442695
    %v1656 = vpow.pop %v1655
    %v1657 = vmul.f32 %v1503, 1.442695
    %v1658 = vpow.pop %v1657
    %v1659 = vmul.f32 %v1504, 1.442695
    %v1660 = vpow.pop %v1659
    %v1661 = vmul.f32 %v1505, 1.442695
    %v1662 = vpow.pop %v1661
    %v1663 = vmul.f32 %v1506, 1.442695
    %v1664 = vpow.pop %v1663
    %v1665 = vmul.f32 %v1507, 1.442695
    %v1666 = vpow.pop %v1665
    %v1667 = vmul.f32 %v1508, 1.442695
    %v1668 = vpow.pop %v1667
    %v1669 = vmul.f32 %v1509, 1.442695
    %v1670 = vpow.pop %v1669
    %v1671 = vmul.f32 %v1510, 1.442695
    %v1672 = vpow.pop %v1671
    %v1673 = vmul.f32 %v1511, 1.442695
    %v1674 = vpow.pop %v1673
    %v1675 = vmul.f32 %v1512, 1.442695
    %v1676 = vpow.pop %v1675
    %v1677 = vmul.f32 %v1513, 1.442695
    %v1678 = vpow.pop %v1677
    %v1679 = vmul.f32 %v1514, 1.442695
    %v1680 = vpow.pop %v1679
    %v1681 = vmul.f32 %v1515, 1.442695
    %v1682 = vpow.pop %v1681
    %v1683 = vmul.f32 %v1516, 1.442695
    %v1684 = vpow.pop %v1683
    %v1685 = vmul.f32 %v1517, 1.442695
    %v1686 = vpow.pop %v1685
    %v1687 = vmul.f32 %v1518, 1.442695
    %v1688 = vpow.pop %v1687
    %v1689 = vmul.f32 %v1519, 1.442695
    %v1690 = vpow.pop %v1689
    %v1691 = vmul.f32 %v1520, 1.442695
    %v1692 = vpow.pop %v1691
    %v1693 = vmul.f32 %v1521, 1.442695
    %v1694 = vpow.pop %v1693
    %v1695 = vmul.f32 %v1522, 1.442695
    %v1696 = vpow.pop %v1695
    %v1697 = vmul.f32 %v1523, 1.442695
    %v1698 = vpow.pop %v1697
    %v1699 = vmul.f32 %v1524, 1.442695
    %v1700 = vpow.pop %v1699
    %v1701 = vmul.f32 %v1525, 1.442695
    %v1702 = vpow.pop %v1701
    %v1703 = vmul.f32 %v1526, 1.442695
    %v1704 = vpow.pop %v1703
    %v1705 = vmul.f32 %v1527, 1.442695
    %v1706 = vpow.pop %v1705
    %v1707 = vmul.f32 %v1528, 1.442695
    %v1708 = vpow.pop %v1707
    %v1709 = vmul.f32 %v1529, 1.442695
    %v1710 = vpow.pop %v1709
    %v1711 = vmul.f32 %v1530, 1.442695
    %v1712 = vpow.pop %v1711
    %v1713 = vmul.f32 %v1531, 1.442695
    %v1714 = vpow.pop %v1713
    %v1715 = vmul.f32 %v1532, 1.442695
    %v1716 = vpow.pop %v1715
    %v1717 = vmul.f32 %v1533, 1.442695
    %v1718 = vpow.pop %v1717
    %v1719 = vmul.f32 %v1534, 1.442695
    %v1720 = vpow.pop %v1719
    %v1721 = vmul.f32 %v1535, 1.442695
    %v1722 = vpow.pop %v1721
    %v1723 = vmul.f32 %v1536, 1.442695
    %v1724 = vpow.pop %v1723
    %v1725 = vmul.f32 %v1537, 1.442695
    %v1726 = vpow.pop %v1725
    %v1727 = vmul.f32 %v1538, 1.442695
    %v1728 = vpow.pop %v1727
    %v1729 = vmul.f32 %v1539, 1.442695
    %v1730 = vpow.pop %v1729
    %v1731 = vmul.f32 %v1540, 1.442695
    %v1732 = vpow.pop %v1731
    %v1733 = vmul.f32 %v1541, 1.442695
    %v1734 = vpow.pop %v1733
    %v1735 = vmul.f32 %v1542, 1.442695
    %v1736 = vpow.pop %v1735
    %v1737 = vmul.f32 %v1543, 1.442695
    %v1738 = vpow.pop %v1737
    %v1739 = vmul.f32 %v1544, 1.442695
    %v1740 = vpow.pop %v1739
    %v1741 = vmul.f32 %v1545, 1.442695
    %v1742 = vpow.pop %v1741
    %v1743 = vmul.f32 %v1546, 1.442695
    %v1744 = vpow.pop %v1743
    %v1745 = vmul.f32 %v1547, 1.442695
    %v1746 = vpow.pop %v1745
    %v1747 = vmul.f32 %v1548, 1.442695
    %v1748 = vpow.pop %v1747
    %v1749 = vmul.f32 %v1549, 1.442695
    %v1750 = vpow.pop %v1749
    %v1751 = vmul.f32 %v1550, 1.442695
    %v1752 = vpow.pop %v1751
    %v1753 = vmul.f32 %v1551, 1.442695
    %v1754 = vpow.pop %v1753
    %v1755 = vmul.f32 %v1552, 1.442695
    %v1756 = vpow.pop %v1755
    %v1757 = vmul.f32 %v1553, 1.442695
    %v1758 = vpow.pop %v1757
    %v1759 = vmul.f32 %v1554, 1.442695
    %v1760 = vpow.pop %v1759
    %v1761 = vmul.f32 %v1555, 1.442695
    %v1762 = vpow.pop %v1761
    %v1763 = vmul.f32 %v1556, 1.442695
    %v1764 = vpow.pop %v1763
    %v1765 = vmul.f32 %v1557, 1.442695
    %v1766 = vpow.pop %v1765
    %v1767 = vmul.f32 %v1558, 1.442695
    %v1768 = vpow.pop %v1767
    %v1769 = vmul.f32 %v1559, 1.442695
    %v1770 = vpow.pop %v1769
    %v1771 = vmul.f32 %v1560, 1.442695
    %v1772 = vpow.pop %v1771
    %v1773 = vmul.f32 %v1561, 1.442695
    %v1774 = vpow.pop %v1773
    %v1775 = vmul.f32 %v1562, 1.442695
    %v1776 = vpow.pop %v1775
    %v1777 = vmul.f32 %v1563, 1.442695
    %v1778 = vpow.pop %v1777
    %v1779 = vmul.f32 %v1564, 1.442695
    %v1780 = vpow.pop %v1779
    %v1781 = vmul.f32 %v1565, 1.442695
    %v1782 = vpow.pop %v1781
    %v1783 = vmul.f32 %v1566, 1.442695
    %v1784 = vpow.pop %v1783
    %v1785 = vmul.f32 %v1567, 1.442695
    %v1786 = vpow.pop %v1785
    %v1787 = vmul.f32 %v1568, 1.442695
    %v1788 = vpow.pop %v1787
    %v1789 = vmul.f32 %v1569, 1.442695
    %v1790 = vpow.pop %v1789
    %v1791 = vmul.f32 %v1570, 1.442695
    %v1792 = vpow.pop %v1791
    %v1793 = vmul.f32 %v1571, 1.442695
    %v1794 = vpow.pop %v1793
    %v1795 = vmul.f32 %v1572, 1.442695
    %v1796 = vpow.pop %v1795
    %v1797 = vmul.f32 %v1573, 1.442695
    %v1798 = vpow.pop %v1797
    %v1799 = vmul.f32 %v1574, 1.442695
    %v1800 = vpow.pop %v1799
    %v1801 = vmul.f32 %v1575, 1.442695
    %v1802 = vpow.pop %v1801
    %v1803 = vmul.f32 %v1576, 1.442695
    %v1804 = vpow.pop %v1803
    %v1805 = vmul.f32 %v1577, 1.442695
    %v1806 = vpow.pop %v1805
    %v1807 = vmul.f32 %v1578, 1.442695
    %v1808 = vpow.pop %v1807
    %v1809 = vmul.f32 %v1579, 1.442695
    %v1810 = vpow.pop %v1809
    %v1811 = vmul.f32 %v1580, 1.442695
    %v1812 = vpow.pop %v1811
    %v1813 = vmul.f32 %v1581, 1.442695
    %v1814 = vpow.pop %v1813
    %v1815 = vmul.f32 %v1582, 1.442695
    %v1816 = vpow.pop %v1815
    %v1817 = vmul.f32 %v1583, 1.442695
    %v1818 = vpow.pop %v1817
    %v1819 = vmul.f32 %v1584, 1.442695
    %v1820 = vpow.pop %v1819
    %v1821 = vmul.f32 %v1585, 1.442695
    %v1822 = vpow.pop %v1821
    %v1823 = vmul.f32 %v1586, 1.442695
    %v1824 = vpow.pop %v1823
    %v1825 = vmul.f32 %v1587, 1.442695
    %v1826 = vpow.pop %v1825
    %v1827 = vmul.f32 %v1588, 1.442695
    %v1828 = vpow.pop %v1827
    %v1829 = vmul.f32 %v1589, 1.442695
    %v1830 = vpow.pop %v1829
    %v1831 = vmul.f32 %v1590, 1.442695
    %v1832 = vpow.pop %v1831
    %v1833 = vmul.f32 %v1591, 1.442695
    %v1834 = vpow.pop %v1833
    %v1835 = vmul.f32 %v1592, 1.442695
    %v1836 = vpow.pop %v1835
    %v1837 = vmul.f32 %v1593, 1.442695
    %v1838 = vpow.pop %v1837
    %v1839 = vmul.f32 %v1594, 1.442695
    %v1840 = vpow.pop %v1839
    %v1841 = vmul.f32 %v1595, 1.442695
    %v1842 = vpow.pop %v1841
    %v1843 = vmul.f32 %v1596, 1.442695
    %v1844 = vpow.pop %v1843
    %v1845 = vmul.f32 %v1597, 1.442695
    %v1846 = vpow.pop %v1845
    %v1847 = vmul.f32 %v1598, 1.442695
    %v1848 = vpow.pop %v1847
    %v1849 = vmul.f32 %v1599, 1.442695
    %v1850 = vpow.pop %v1849
    %v1851 = vmul.f32 %v1600, 1.442695
    %v1852 = vpow.pop %v1851
    %v1853 = vmul.f32 %v1601, 1.442695
    %v1854 = vpow.pop %v1853
    %v1855 = vmul.f32 %v1602, 1.442695
    %v1856 = vpow.pop %v1855
    %v1857 = vmul.f32 %v1603, 1.442695
    %v1858 = vpow.pop %v1857
    %v1859 = vmul.f32 %v1604, 1.442695
    %v1860 = vpow.pop %v1859
    %v1861 = vadd.f32 %v1606, 1.0
    %v1862 = vadd.f32 %v1608, 1.0
    %v1863 = vadd.f32 %v1610, 1.0
    %v1864 = vadd.f32 %v1612, 1.0
    %v1865 = vadd.f32 %v1614, 1.0
    %v1866 = vadd.f32 %v1616, 1.0
    %v1867 = vadd.f32 %v1618, 1.0
    %v1868 = vadd.f32 %v1620, 1.0
    %v1869 = vadd.f32 %v1622, 1.0
    %v1870 = vadd.f32 %v1624, 1.0
    %v1871 = vadd.f32 %v1626, 1.0
    %v1872 = vadd.f32 %v1628, 1.0
    %v1873 = vadd.f32 %v1630, 1.0
    %v1874 = vadd.f32 %v1632, 1.0
    %v1875 = vadd.f32 %v1634, 1.0
    %v1876 = vadd.f32 %v1636, 1.0
    %v1877 = vadd.f32 %v1638, 1.0
    %v1878 = vadd.f32 %v1640, 1.0
    %v1879 = vadd.f32 %v1642, 1.0
    %v1880 = vadd.f32 %v1644, 1.0
    %v1881 = vadd.f32 %v1646, 1.0
    %v1882 = vadd.f32 %v1648, 1.0
    %v1883 = vadd.f32 %v1650, 1.0
    %v1884 = vadd.f32 %v1652, 1.0
    %v1885 = vadd.f32 %v1654, 1.0
    %v1886 = vadd.f32 %v1656, 1.0
    %v1887 = vadd.f32 %v1658, 1.0
    %v1888 = vadd.f32 %v1660, 1.0
    %v1889 = vadd.f32 %v1662, 1.0
    %v1890 = vadd.f32 %v1664, 1.0
    %v1891 = vadd.f32 %v1666, 1.0
    %v1892 = vadd.f32 %v1668, 1.0
    %v1893 = vadd.f32 %v1670, 1.0
    %v1894 = vadd.f32 %v1672, 1.0
    %v1895 = vadd.f32 %v1674, 1.0
    %v1896 = vadd.f32 %v1676, 1.0
    %v1897 = vadd.f32 %v1678, 1.0
    %v1898 = vadd.f32 %v1680, 1.0
    %v1899 = vadd.f32 %v1682, 1.0
    %v1900 = vadd.f32 %v1684, 1.0
    %v1901 = vadd.f32 %v1686, 1.0
    %v1902 = vadd.f32 %v1688, 1.0
    %v1903 = vadd.f32 %v1690, 1.0
    %v1904 = vadd.f32 %v1692, 1.0
    %v1905 = vadd.f32 %v1694, 1.0
    %v1906 = vadd.f32 %v1696, 1.0
    %v1907 = vadd.f32 %v1698, 1.0
    %v1908 = vadd.f32 %v1700, 1.0
    %v1909 = vadd.f32 %v1702, 1.0
    %v1910 = vadd.f32 %v1704, 1.0
    %v1911 = vadd.f32 %v1706, 1.0
    %v1912 = vadd.f32 %v1708, 1.0
    %v1913 = vadd.f32 %v1710, 1.0
    %v1914 = vadd.f32 %v1712, 1.0
    %v1915 = vadd.f32 %v1714, 1.0
    %v1916 = vadd.f32 %v1716, 1.0
    %v1917 = vadd.f32 %v1718, 1.0
    %v1918 = vadd.f32 %v1720, 1.0
    %v1919 = vadd.f32 %v1722, 1.0
    %v1920 = vadd.f32 %v1724, 1.0
    %v1921 = vadd.f32 %v1726, 1.0
    %v1922 = vadd.f32 %v1728, 1.0
    %v1923 = vadd.f32 %v1730, 1.0
    %v1924 = vadd.f32 %v1732, 1.0
    %v1925 = vadd.f32 %v1734, 1.0
    %v1926 = vadd.f32 %v1736, 1.0
    %v1927 = vadd.f32 %v1738, 1.0
    %v1928 = vadd.f32 %v1740, 1.0
    %v1929 = vadd.f32 %v1742, 1.0
    %v1930 = vadd.f32 %v1744, 1.0
    %v1931 = vadd.f32 %v1746, 1.0
    %v1932 = vadd.f32 %v1748, 1.0
    %v1933 = vadd.f32 %v1750, 1.0
    %v1934 = vadd.f32 %v1752, 1.0
    %v1935 = vadd.f32 %v1754, 1.0
    %v1936 = vadd.f32 %v1756, 1.0
    %v1937 = vadd.f32 %v1758, 1.0
    %v1938 = vadd.f32 %v1760, 1.0
    %v1939 = vadd.f32 %v1762, 1.0
    %v1940 = vadd.f32 %v1764, 1.0
    %v1941 = vadd.f32 %v1766, 1.0
    %v1942 = vadd.f32 %v1768, 1.0
    %v1943 = vadd.f32 %v1770, 1.0
    %v1944 = vadd.f32 %v1772, 1.0
    %v1945 = vadd.f32 %v1774, 1.0
    %v1946 = vadd.f32 %v1776, 1.0
    %v1947 = vadd.f32 %v1778, 1.0
    %v1948 = vadd.f32 %v1780, 1.0
    %v1949 = vadd.f32 %v1782, 1.0
    %v1950 = vadd.f32 %v1784, 1.0
    %v1951 = vadd.f32 %v1786, 1.0
    %v1952 = vadd.f32 %v1788, 1.0
    %v1953 = vadd.f32 %v1790, 1.0
    %v1954 = vadd.f32 %v1792, 1.0
    %v1955 = vadd.f32 %v1794, 1.0
    %v1956 = vadd.f32 %v1796, 1.0
    %v1957 = vadd.f32 %v1798, 1.0
    %v1958 = vadd.f32 %v1800, 1.0
    %v1959 = vadd.f32 %v1802, 1.0
    %v1960 = vadd.f32 %v1804, 1.0
    %v1961 = vadd.f32 %v1806, 1.0
    %v1962 = vadd.f32 %v1808, 1.0
    %v1963 = vadd.f32 %v1810, 1.0
    %v1964 = vadd.f32 %v1812, 1.0
    %v1965 = vadd.f32 %v1814, 1.0
    %v1966 = vadd.f32 %v1816, 1.0
    %v1967 = vadd.f32 %v1818, 1.0
    %v1968 = vadd.f32 %v1820, 1.0
    %v1969 = vadd.f32 %v1822, 1.0
    %v1970 = vadd.f32 %v1824, 1.0
    %v1971 = vadd.f32 %v1826, 1.0
    %v1972 = vadd.f32 %v1828, 1.0
    %v1973 = vadd.f32 %v1830, 1.0
    %v1974 = vadd.f32 %v1832, 1.0
    %v1975 = vadd.f32 %v1834, 1.0
    %v1976 = vadd.f32 %v1836, 1.0
    %v1977 = vadd.f32 %v1838, 1.0
    %v1978 = vadd.f32 %v1840, 1.0
    %v1979 = vadd.f32 %v1842, 1.0
    %v1980 = vadd.f32 %v1844, 1.0
    %v1981 = vadd.f32 %v1846, 1.0
    %v1982 = vadd.f32 %v1848, 1.0
    %v1983 = vadd.f32 %v1850, 1.0
    %v1984 = vadd.f32 %v1852, 1.0
    %v1985 = vadd.f32 %v1854, 1.0
    %v1986 = vadd.f32 %v1856, 1.0
    %v1987 = vadd.f32 %v1858, 1.0
    %v1988 = vadd.f32 %v1860, 1.0
    %v1989 = vrcp.pop %v1861
    %v1990 = vmul.f32 1.0, %v1989
    %v1991 = vrcp.pop %v1862
    %v1992 = vmul.f32 1.0, %v1991
    %v1993 = vrcp.pop %v1863
    %v1994 = vmul.f32 1.0, %v1993
    %v1995 = vrcp.pop %v1864
    %v1996 = vmul.f32 1.0, %v1995
    %v1997 = vrcp.pop %v1865
    %v1998 = vmul.f32 1.0, %v1997
    %v1999 = vrcp.pop %v1866
    %v2000 = vmul.f32 1.0, %v1999
    %v2001 = vrcp.pop %v1867
    %v2002 = vmul.f32 1.0, %v2001
    %v2003 = vrcp.pop %v1868
    %v2004 = vmul.f32 1.0, %v2003
    %v2005 = vrcp.pop %v1869
    %v2006 = vmul.f32 1.0, %v2005
    %v2007 = vrcp.pop %v1870
    %v2008 = vmul.f32 1.0, %v2007
    %v2009 = vrcp.pop %v1871
    %v2010 = vmul.f32 1.0, %v2009
    %v2011 = vrcp.pop %v1872
    %v2012 = vmul.f32 1.0, %v2011
    %v2013 = vrcp.pop %v1873
    %v2014 = vmul.f32 1.0, %v2013
    %v2015 = vrcp.pop %v1874
    %v2016 = vmul.f32 1.0, %v2015
    %v2017 = vrcp.pop %v1875
    %v2018 = vmul.f32 1.0, %v2017
    %v2019 = vrcp.pop %v1876
    %v2020 = vmul.f32 1.0, %v2019
    %v2021 = vrcp.pop %v1877
    %v2022 = vmul.f32 1.0, %v2021
    %v2023 = vrcp.pop %v1878
    %v2024 = vmul.f32 1.0, %v2023
    %v2025 = vrcp.pop %v1879
    %v2026 = vmul.f32 1.0, %v2025
    %v2027 = vrcp.pop %v1880
    %v2028 = vmul.f32 1.0, %v2027
    %v2029 = vrcp.pop %v1881
    %v2030 = vmul.f32 1.0, %v2029
    %v2031 = vrcp.pop %v1882
    %v2032 = vmul.f32 1.0, %v2031
    %v2033 = vrcp.pop %v1883
    %v2034 = vmul.f32 1.0, %v2033
    %v2035 = vrcp.pop %v1884
    %v2036 = vmul.f32 1.0, %v2035
    %v2037 = vrcp.pop %v1885
    %v2038 = vmul.f32 1.0, %v2037
    %v2039 = vrcp.pop %v1886
    %v2040 = vmul.f32 1.0, %v2039
    %v2041 = vrcp.pop %v1887
    %v2042 = vmul.f32 1.0, %v2041
    %v2043 = vrcp.pop %v1888
    %v2044 = vmul.f32 1.0, %v2043
    %v2045 = vrcp.pop %v1889
    %v2046 = vmul.f32 1.0, %v2045
    %v2047 = vrcp.pop %v1890
    %v2048 = vmul.f32 1.0, %v2047
    %v2049 = vrcp.pop %v1891
    %v2050 = vmul.f32 1.0, %v2049
    %v2051 = vrcp.pop %v1892
    %v2052 = vmul.f32 1.0, %v2051
    %v2053 = vrcp.pop %v1893
    %v2054 = vmul.f32 1.0, %v2053
    %v2055 = vrcp.pop %v1894
    %v2056 = vmul.f32 1.0, %v2055
    %v2057 = vrcp.pop %v1895
    %v2058 = vmul.f32 1.0, %v2057
    %v2059 = vrcp.pop %v1896
    %v2060 = vmul.f32 1.0, %v2059
    %v2061 = vrcp.pop %v1897
    %v2062 = vmul.f32 1.0, %v2061
    %v2063 = vrcp.pop %v1898
    %v2064 = vmul.f32 1.0, %v2063
    %v2065 = vrcp.pop %v1899
    %v2066 = vmul.f32 1.0, %v2065
    %v2067 = vrcp.pop %v1900
    %v2068 = vmul.f32 1.0, %v2067
    %v2069 = vrcp.pop %v1901
    %v2070 = vmul.f32 1.0, %v2069
    %v2071 = vrcp.pop %v1902
    %v2072 = vmul.f32 1.0, %v2071
    %v2073 = vrcp.pop %v1903
    %v2074 = vmul.f32 1.0, %v2073
    %v2075 = vrcp.pop %v1904
    %v2076 = vmul.f32 1.0, %v2075
    %v2077 = vrcp.pop %v1905
    %v2078 = vmul.f32 1.0, %v2077
    %v2079 = vrcp.pop %v1906
    %v2080 = vmul.f32 1.0, %v2079
    %v2081 = vrcp.pop %v1907
    %v2082 = vmul.f32 1.0, %v2081
    %v2083 = vrcp.pop %v1908
    %v2084 = vmul.f32 1.0, %v2083
    %v2085 = vrcp.pop %v1909
    %v2086 = vmul.f32 1.0, %v2085
    %v2087 = vrcp.pop %v1910
    %v2088 = vmul.f32 1.0, %v2087
    %v2089 = vrcp.pop %v1911
    %v2090 = vmul.f32 1.0, %v2089
    %v2091 = vrcp.pop %v1912
    %v2092 = vmul.f32 1.0, %v2091
    %v2093 = vrcp.pop %v1913
    %v2094 = vmul.f32 1.0, %v2093
    %v2095 = vrcp.pop %v1914
    %v2096 = vmul.f32 1.0, %v2095
    %v2097 = vrcp.pop %v1915
    %v2098 = vmul.f32 1.0, %v2097
    %v2099 = vrcp.pop %v1916
    %v2100 = vmul.f32 1.0, %v2099
    %v2101 = vrcp.pop %v1917
    %v2102 = vmul.f32 1.0, %v2101
    %v2103 = vrcp.pop %v1918
    %v2104 = vmul.f32 1.0, %v2103
    %v2105 = vrcp.pop %v1919
    %v2106 = vmul.f32 1.0, %v2105
    %v2107 = vrcp.pop %v1920
    %v2108 = vmul.f32 1.0, %v2107
    %v2109 = vrcp.pop %v1921
    %v2110 = vmul.f32 1.0, %v2109
    %v2111 = vrcp.pop %v1922
    %v2112 = vmul.f32 1.0, %v2111
    %v2113 = vrcp.pop %v1923
    %v2114 = vmul.f32 1.0, %v2113
    %v2115 = vrcp.pop %v1924
    %v2116 = vmul.f32 1.0, %v2115
    %v2117 = vrcp.pop %v1925
    %v2118 = vmul.f32 1.0, %v2117
    %v2119 = vrcp.pop %v1926
    %v2120 = vmul.f32 1.0, %v2119
    %v2121 = vrcp.pop %v1927
    %v2122 = vmul.f32 1.0, %v2121
    %v2123 = vrcp.pop %v1928
    %v2124 = vmul.f32 1.0, %v2123
    %v2125 = vrcp.pop %v1929
    %v2126 = vmul.f32 1.0, %v2125
    %v2127 = vrcp.pop %v1930
    %v2128 = vmul.f32 1.0, %v2127
    %v2129 = vrcp.pop %v1931
    %v2130 = vmul.f32 1.0, %v2129
    %v2131 = vrcp.pop %v1932
    %v2132 = vmul.f32 1.0, %v2131
    %v2133 = vrcp.pop %v1933
    %v2134 = vmul.f32 1.0, %v2133
    %v2135 = vrcp.pop %v1934
    %v2136 = vmul.f32 1.0, %v2135
    %v2137 = vrcp.pop %v1935
    %v2138 = vmul.f32 1.0, %v2137
    %v2139 = vrcp.pop %v1936
    %v2140 = vmul.f32 1.0, %v2139
    %v2141 = vrcp.pop %v1937
    %v2142 = vmul.f32 1.0, %v2141
    %v2143 = vrcp.pop %v1938
    %v2144 = vmul.f32 1.0, %v2143
    %v2145 = vrcp.pop %v1939
    %v2146 = vmul.f32 1.0, %v2145
    %v2147 = vrcp.pop %v1940
    %v2148 = vmul.f32 1.0, %v2147
    %v2149 = vrcp.pop %v1941
    %v2150 = vmul.f32 1.0, %v2149
    %v2151 = vrcp.pop %v1942
    %v2152 = vmul.f32 1.0, %v2151
    %v2153 = vrcp.pop %v1943
    %v2154 = vmul.f32 1.0, %v2153
    %v2155 = vrcp.pop %v1944
    %v2156 = vmul.f32 1.0, %v2155
    %v2157 = vrcp.pop %v1945
    %v2158 = vmul.f32 1.0, %v2157
    %v2159 = vrcp.pop %v1946
    %v2160 = vmul.f32 1.0, %v2159
    %v2161 = vrcp.pop %v1947
    %v2162 = vmul.f32 1.0, %v2161
    %v2163 = vrcp.pop %v1948
    %v2164 = vmul.f32 1.0, %v2163
    %v2165 = vrcp.pop %v1949
    %v2166 = vmul.f32 1.0, %v2165
    %v2167 = vrcp.pop %v1950
    %v2168 = vmul.f32 1.0, %v2167
    %v2169 = vrcp.pop %v1951
    %v2170 = vmul.f32 1.0, %v2169
    %v2171 = vrcp.pop %v1952
    %v2172 = vmul.f32 1.0, %v2171
    %v2173 = vrcp.pop %v1953
    %v2174 = vmul.f32 1.0, %v2173
    %v2175 = vrcp.pop %v1954
    %v2176 = vmul.f32 1.0, %v2175
    %v2177 = vrcp.pop %v1955
    %v2178 = vmul.f32 1.0, %v2177
    %v2179 = vrcp.pop %v1956
    %v2180 = vmul.f32 1.0, %v2179
    %v2181 = vrcp.pop %v1957
    %v2182 = vmul.f32 1.0, %v2181
    %v2183 = vrcp.pop %v1958
    %v2184 = vmul.f32 1.0, %v2183
    %v2185 = vrcp.pop %v1959
    %v2186 = vmul.f32 1.0, %v2185
    %v2187 = vrcp.pop %v1960
    %v2188 = vmul.f32 1.0, %v2187
    %v2189 = vrcp.pop %v1961
    %v2190 = vmul.f32 1.0, %v2189
    %v2191 = vrcp.pop %v1962
    %v2192 = vmul.f32 1.0, %v2191
    %v2193 = vrcp.pop %v1963
    %v2194 = vmul.f32 1.0, %v2193
    %v2195 = vrcp.pop %v1964
    %v2196 = vmul.f32 1.0, %v2195
    %v2197 = vrcp.pop %v1965
    %v2198 = vmul.f32 1.0, %v2197
    %v2199 = vrcp.pop %v1966
    %v2200 = vmul.f32 1.0, %v2199
    %v2201 = vrcp.pop %v1967
    %v2202 = vmul.f32 1.0, %v2201
    %v2203 = vrcp.pop %v1968
    %v2204 = vmul.f32 1.0, %v2203
    %v2205 = vrcp.pop %v1969
    %v2206 = vmul.f32 1.0, %v2205
    %v2207 = vrcp.pop %v1970
    %v2208 = vmul.f32 1.0, %v2207
    %v2209 = vrcp.pop %v1971
    %v2210 = vmul.f32 1.0, %v2209
    %v2211 = vrcp.pop %v1972
    %v2212 = vmul.f32 1.0, %v2211
    %v2213 = vrcp.pop %v1973
    %v2214 = vmul.f32 1.0, %v2213
    %v2215 = vrcp.pop %v1974
    %v2216 = vmul.f32 1.0, %v2215
    %v2217 = vrcp.pop %v1975
    %v2218 = vmul.f32 1.0, %v2217
    %v2219 = vrcp.pop %v1976
    %v2220 = vmul.f32 1.0, %v2219
    %v2221 = vrcp.pop %v1977
    %v2222 = vmul.f32 1.0, %v2221
    %v2223 = vrcp.pop %v1978
    %v2224 = vmul.f32 1.0, %v2223
    %v2225 = vrcp.pop %v1979
    %v2226 = vmul.f32 1.0, %v2225
    %v2227 = vrcp.pop %v1980
    %v2228 = vmul.f32 1.0, %v2227
    %v2229 = vrcp.pop %v1981
    %v2230 = vmul.f32 1.0, %v2229
    %v2231 = vrcp.pop %v1982
    %v2232 = vmul.f32 1.0, %v2231
    %v2233 = vrcp.pop %v1983
    %v2234 = vmul.f32 1.0, %v2233
    %v2235 = vrcp.pop %v1984
    %v2236 = vmul.f32 1.0, %v2235
    %v2237 = vrcp.pop %v1985
    %v2238 = vmul.f32 1.0, %v2237
    %v2239 = vrcp.pop %v1986
    %v2240 = vmul.f32 1.0, %v2239
    %v2241 = vrcp.pop %v1987
    %v2242 = vmul.f32 1.0, %v2241
    %v2243 = vrcp.pop %v1988
    %v2244 = vmul.f32 1.0, %v2243
    %v2245 = vmax.f32 %v1990, 0.0001
    %v2246 = vmax.f32 %v1992, 0.0001
    %v2247 = vmax.f32 %v1994, 0.0001
    %v2248 = vmax.f32 %v1996, 0.0001
    %v2249 = vmax.f32 %v1998, 0.0001
    %v2250 = vmax.f32 %v2000, 0.0001
    %v2251 = vmax.f32 %v2002, 0.0001
    %v2252 = vmax.f32 %v2004, 0.0001
    %v2253 = vmax.f32 %v2006, 0.0001
    %v2254 = vmax.f32 %v2008, 0.0001
    %v2255 = vmax.f32 %v2010, 0.0001
    %v2256 = vmax.f32 %v2012, 0.0001
    %v2257 = vmax.f32 %v2014, 0.0001
    %v2258 = vmax.f32 %v2016, 0.0001
    %v2259 = vmax.f32 %v2018, 0.0001
    %v2260 = vmax.f32 %v2020, 0.0001
    %v2261 = vmax.f32 %v2022, 0.0001
    %v2262 = vmax.f32 %v2024, 0.0001
    %v2263 = vmax.f32 %v2026, 0.0001
    %v2264 = vmax.f32 %v2028, 0.0001
    %v2265 = vmax.f32 %v2030, 0.0001
    %v2266 = vmax.f32 %v2032, 0.0001
    %v2267 = vmax.f32 %v2034, 0.0001
    %v2268 = vmax.f32 %v2036, 0.0001
    %v2269 = vmax.f32 %v2038, 0.0001
    %v2270 = vmax.f32 %v2040, 0.0001
    %v2271 = vmax.f32 %v2042, 0.0001
    %v2272 = vmax.f32 %v2044, 0.0001
    %v2273 = vmax.f32 %v2046, 0.0001
    %v2274 = vmax.f32 %v2048, 0.0001
    %v2275 = vmax.f32 %v2050, 0.0001
    %v2276 = vmax.f32 %v2052, 0.0001
    %v2277 = vmax.f32 %v2054, 0.0001
    %v2278 = vmax.f32 %v2056, 0.0001
    %v2279 = vmax.f32 %v2058, 0.0001
    %v2280 = vmax.f32 %v2060, 0.0001
    %v2281 = vmax.f32 %v2062, 0.0001
    %v2282 = vmax.f32 %v2064, 0.0001
    %v2283 = vmax.f32 %v2066, 0.0001
    %v2284 = vmax.f32 %v2068, 0.0001
    %v2285 = vmax.f32 %v2070, 0.0001
    %v2286 = vmax.f32 %v2072, 0.0001
    %v2287 = vmax.f32 %v2074, 0.0001
    %v2288 = vmax.f32 %v2076, 0.0001
    %v2289 = vmax.f32 %v2078, 0.0001
    %v2290 = vmax.f32 %v2080, 0.0001
    %v2291 = vmax.f32 %v2082, 0.0001
    %v2292 = vmax.f32 %v2084, 0.0001
    %v2293 = vmax.f32 %v2086, 0.0001
    %v2294 = vmax.f32 %v2088, 0.0001
    %v2295 = vmax.f32 %v2090, 0.0001
    %v2296 = vmax.f32 %v2092, 0.0001
    %v2297 = vmax.f32 %v2094, 0.0001
    %v2298 = vmax.f32 %v2096, 0.0001
    %v2299 = vmax.f32 %v2098, 0.0001
    %v2300 = vmax.f32 %v2100, 0.0001
    %v2301 = vmax.f32 %v2102, 0.0001
    %v2302 = vmax.f32 %v2104, 0.0001
    %v2303 = vmax.f32 %v2106, 0.0001
    %v2304 = vmax.f32 %v2108, 0.0001
    %v2305 = vmax.f32 %v2110, 0.0001
    %v2306 = vmax.f32 %v2112, 0.0001
    %v2307 = vmax.f32 %v2114, 0.0001
    %v2308 = vmax.f32 %v2116, 0.0001
    %v2309 = vmax.f32 %v2118, 0.0001
    %v2310 = vmax.f32 %v2120, 0.0001
    %v2311 = vmax.f32 %v2122, 0.0001
    %v2312 = vmax.f32 %v2124, 0.0001
    %v2313 = vmax.f32 %v2126, 0.0001
    %v2314 = vmax.f32 %v2128, 0.0001
    %v2315 = vmax.f32 %v2130, 0.0001
    %v2316 = vmax.f32 %v2132, 0.0001
    %v2317 = vmax.f32 %v2134, 0.0001
    %v2318 = vmax.f32 %v2136, 0.0001
    %v2319 = vmax.f32 %v2138, 0.0001
    %v2320 = vmax.f32 %v2140, 0.0001
    %v2321 = vmax.f32 %v2142, 0.0001
    %v2322 = vmax.f32 %v2144, 0.0001
    %v2323 = vmax.f32 %v2146, 0.0001
    %v2324 = vmax.f32 %v2148, 0.0001
    %v2325 = vmax.f32 %v2150, 0.0001
    %v2326 = vmax.f32 %v2152, 0.0001
    %v2327 = vmax.f32 %v2154, 0.0001
    %v2328 = vmax.f32 %v2156, 0.0001
    %v2329 = vmax.f32 %v2158, 0.0001
    %v2330 = vmax.f32 %v2160, 0.0001
    %v2331 = vmax.f32 %v2162, 0.0001
    %v2332 = vmax.f32 %v2164, 0.0001
    %v2333 = vmax.f32 %v2166, 0.0001
    %v2334 = vmax.f32 %v2168, 0.0001
    %v2335 = vmax.f32 %v2170, 0.0001
    %v2336 = vmax.f32 %v2172, 0.0001
    %v2337 = vmax.f32 %v2174, 0.0001
    %v2338 = vmax.f32 %v2176, 0.0001
    %v2339 = vmax.f32 %v2178, 0.0001
    %v2340 = vmax.f32 %v2180, 0.0001
    %v2341 = vmax.f32 %v2182, 0.0001
    %v2342 = vmax.f32 %v2184, 0.0001
    %v2343 = vmax.f32 %v2186, 0.0001
    %v2344 = vmax.f32 %v2188, 0.0001
    %v2345 = vmax.f32 %v2190, 0.0001
    %v2346 = vmax.f32 %v2192, 0.0001
    %v2347 = vmax.f32 %v2194, 0.0001
    %v2348 = vmax.f32 %v2196, 0.0001
    %v2349 = vmax.f32 %v2198, 0.0001
    %v2350 = vmax.f32 %v2200, 0.0001
    %v2351 = vmax.f32 %v2202, 0.0001
    %v2352 = vmax.f32 %v2204, 0.0001
    %v2353 = vmax.f32 %v2206, 0.0001
    %v2354 = vmax.f32 %v2208, 0.0001
    %v2355 = vmax.f32 %v2210, 0.0001
    %v2356 = vmax.f32 %v2212, 0.0001
    %v2357 = vmax.f32 %v2214, 0.0001
    %v2358 = vmax.f32 %v2216, 0.0001
    %v2359 = vmax.f32 %v2218, 0.0001
    %v2360 = vmax.f32 %v2220, 0.0001
    %v2361 = vmax.f32 %v2222, 0.0001
    %v2362 = vmax.f32 %v2224, 0.0001
    %v2363 = vmax.f32 %v2226, 0.0001
    %v2364 = vmax.f32 %v2228, 0.0001
    %v2365 = vmax.f32 %v2230, 0.0001
    %v2366 = vmax.f32 %v2232, 0.0001
    %v2367 = vmax.f32 %v2234, 0.0001
    %v2368 = vmax.f32 %v2236, 0.0001
    %v2369 = vmax.f32 %v2238, 0.0001
    %v2370 = vmax.f32 %v2240, 0.0001
    %v2371 = vmax.f32 %v2242, 0.0001
    %v2372 = vmax.f32 %v2244, 0.0001
    %v2373 = vmin.f32 %v2245, 0.9999
    %v2374 = vmin.f32 %v2246, 0.9999
    %v2375 = vmin.f32 %v2247, 0.9999
    %v2376 = vmin.f32 %v2248, 0.9999
    %v2377 = vmin.f32 %v2249, 0.9999
    %v2378 = vmin.f32 %v2250, 0.9999
    %v2379 = vmin.f32 %v2251, 0.9999
    %v2380 = vmin.f32 %v2252, 0.9999
    %v2381 = vmin.f32 %v2253, 0.9999
    %v2382 = vmin.f32 %v2254, 0.9999
    %v2383 = vmin.f32 %v2255, 0.9999
    %v2384 = vmin.f32 %v2256, 0.9999
    %v2385 = vmin.f32 %v2257, 0.9999
    %v2386 = vmin.f32 %v2258, 0.9999
    %v2387 = vmin.f32 %v2259, 0.9999
    %v2388 = vmin.f32 %v2260, 0.9999
    %v2389 = vmin.f32 %v2261, 0.9999
    %v2390 = vmin.f32 %v2262, 0.9999
    %v2391 = vmin.f32 %v2263, 0.9999
    %v2392 = vmin.f32 %v2264, 0.9999
    %v2393 = vmin.f32 %v2265, 0.9999
    %v2394 = vmin.f32 %v2266, 0.9999
    %v2395 = vmin.f32 %v2267, 0.9999
    %v2396 = vmin.f32 %v2268, 0.9999
    %v2397 = vmin.f32 %v2269, 0.9999
    %v2398 = vmin.f32 %v2270, 0.9999
    %v2399 = vmin.f32 %v2271, 0.9999
    %v2400 = vmin.f32 %v2272, 0.9999
    %v2401 = vmin.f32 %v2273, 0.9999
    %v2402 = vmin.f32 %v2274, 0.9999
    %v2403 = vmin.f32 %v2275, 0.9999
    %v2404 = vmin.f32 %v2276, 0.9999
    %v2405 = vmin.f32 %v2277, 0.9999
    %v2406 = vmin.f32 %v2278, 0.9999
    %v2407 = vmin.f32 %v2279, 0.9999
    %v2408 = vmin.f32 %v2280, 0.9999
    %v2409 = vmin.f32 %v2281, 0.9999
    %v2410 = vmin.f32 %v2282, 0.9999
    %v2411 = vmin.f32 %v2283, 0.9999
    %v2412 = vmin.f32 %v2284, 0.9999
    %v2413 = vmin.f32 %v2285, 0.9999
    %v2414 = vmin.f32 %v2286, 0.9999
    %v2415 = vmin.f32 %v2287, 0.9999
    %v2416 = vmin.f32 %v2288, 0.9999
    %v2417 = vmin.f32 %v2289, 0.9999
    %v2418 = vmin.f32 %v2290, 0.9999
    %v2419 = vmin.f32 %v2291, 0.9999
    %v2420 = vmin.f32 %v2292, 0.9999
    %v2421 = vmin.f32 %v2293, 0.9999
    %v2422 = vmin.f32 %v2294, 0.9999
    %v2423 = vmin.f32 %v2295, 0.9999
    %v2424 = vmin.f32 %v2296, 0.9999
    %v2425 = vmin.f32 %v2297, 0.9999
    %v2426 = vmin.f32 %v2298, 0.9999
    %v2427 = vmin.f32 %v2299, 0.9999
    %v2428 = vmin.f32 %v2300, 0.9999
    %v2429 = vmin.f32 %v2301, 0.9999
    %v2430 = vmin.f32 %v2302, 0.9999
    %v2431 = vmin.f32 %v2303, 0.9999
    %v2432 = vmin.f32 %v2304, 0.9999
    %v2433 = vmin.f32 %v2305, 0.9999
    %v2434 = vmin.f32 %v2306, 0.9999
    %v2435 = vmin.f32 %v2307, 0.9999
    %v2436 = vmin.f32 %v2308, 0.9999
    %v2437 = vmin.f32 %v2309, 0.9999
    %v2438 = vmin.f32 %v2310, 0.9999
    %v2439 = vmin.f32 %v2311, 0.9999
    %v2440 = vmin.f32 %v2312, 0.9999
    %v2441 = vmin.f32 %v2313, 0.9999
    %v2442 = vmin.f32 %v2314, 0.9999
    %v2443 = vmin.f32 %v2315, 0.9999
    %v2444 = vmin.f32 %v2316, 0.9999
    %v2445 = vmin.f32 %v2317, 0.9999
    %v2446 = vmin.f32 %v2318, 0.9999
    %v2447 = vmin.f32 %v2319, 0.9999
    %v2448 = vmin.f32 %v2320, 0.9999
    %v2449 = vmin.f32 %v2321, 0.9999
    %v2450 = vmin.f32 %v2322, 0.9999
    %v2451 = vmin.f32 %v2323, 0.9999
    %v2452 = vmin.f32 %v2324, 0.9999
    %v2453 = vmin.f32 %v2325, 0.9999
    %v2454 = vmin.f32 %v2326, 0.9999
    %v2455 = vmin.f32 %v2327, 0.9999
    %v2456 = vmin.f32 %v2328, 0.9999
    %v2457 = vmin.f32 %v2329, 0.9999
    %v2458 = vmin.f32 %v2330, 0.9999
    %v2459 = vmin.f32 %v2331, 0.9999
    %v2460 = vmin.f32 %v2332, 0.9999
    %v2461 = vmin.f32 %v2333, 0.9999
    %v2462 = vmin.f32 %v2334, 0.9999
    %v2463 = vmin.f32 %v2335, 0.9999
    %v2464 = vmin.f32 %v2336, 0.9999
    %v2465 = vmin.f32 %v2337, 0.9999
    %v2466 = vmin.f32 %v2338, 0.9999
    %v2467 = vmin.f32 %v2339, 0.9999
    %v2468 = vmin.f32 %v2340, 0.9999
    %v2469 = vmin.f32 %v2341, 0.9999
    %v2470 = vmin.f32 %v2342, 0.9999
    %v2471 = vmin.f32 %v2343, 0.9999
    %v2472 = vmin.f32 %v2344, 0.9999
    %v2473 = vmin.f32 %v2345, 0.9999
    %v2474 = vmin.f32 %v2346, 0.9999
    %v2475 = vmin.f32 %v2347, 0.9999
    %v2476 = vmin.f32 %v2348, 0.9999
    %v2477 = vmin.f32 %v2349, 0.9999
    %v2478 = vmin.f32 %v2350, 0.9999
    %v2479 = vmin.f32 %v2351, 0.9999
    %v2480 = vmin.f32 %v2352, 0.9999
    %v2481 = vmin.f32 %v2353, 0.9999
    %v2482 = vmin.f32 %v2354, 0.9999
    %v2483 = vmin.f32 %v2355, 0.9999
    %v2484 = vmin.f32 %v2356, 0.9999
    %v2485 = vmin.f32 %v2357, 0.9999
    %v2486 = vmin.f32 %v2358, 0.9999
    %v2487 = vmin.f32 %v2359, 0.9999
    %v2488 = vmin.f32 %v2360, 0.9999
    %v2489 = vmin.f32 %v2361, 0.9999
    %v2490 = vmin.f32 %v2362, 0.9999
    %v2491 = vmin.f32 %v2363, 0.9999
    %v2492 = vmin.f32 %v2364, 0.9999
    %v2493 = vmin.f32 %v2365, 0.9999
    %v2494 = vmin.f32 %v2366, 0.9999
    %v2495 = vmin.f32 %v2367, 0.9999
    %v2496 = vmin.f32 %v2368, 0.9999
    %v2497 = vmin.f32 %v2369, 0.9999
    %v2498 = vmin.f32 %v2370, 0.9999
    %v2499 = vmin.f32 %v2371, 0.9999
    %v2500 = vmin.f32 %v2372, 0.9999
    %v2501 = vld [vmem:[%s3] sm:$0xff]
    %v2502 = vsub.f32 0.0, %v2501
    %v2503 = vlog2.pop %v2373
    %v2504 = vmul.f32 %v2503, 0.6931472
    %v2505 = vlog2.pop %v2374
    %v2506 = vmul.f32 %v2505, 0.6931472
    %v2507 = vlog2.pop %v2375
    %v2508 = vmul.f32 %v2507, 0.6931472
    %v2509 = vlog2.pop %v2376
    %v2510 = vmul.f32 %v2509, 0.6931472
    %v2511 = vlog2.pop %v2377
    %v2512 = vmul.f32 %v2511, 0.6931472
    %v2513 = vlog2.pop %v2378
    %v2514 = vmul.f32 %v2513, 0.6931472
    %v2515 = vlog2.pop %v2379
    %v2516 = vmul.f32 %v2515, 0.6931472
    %v2517 = vlog2.pop %v2380
    %v2518 = vmul.f32 %v2517, 0.6931472
    %v2519 = vlog2.pop %v2381
    %v2520 = vmul.f32 %v2519, 0.6931472
    %v2521 = vlog2.pop %v2382
    %v2522 = vmul.f32 %v2521, 0.6931472
    %v2523 = vlog2.pop %v2383
    %v2524 = vmul.f32 %v2523, 0.6931472
    %v2525 = vlog2.pop %v2384
    %v2526 = vmul.f32 %v2525, 0.6931472
    %v2527 = vlog2.pop %v2385
    %v2528 = vmul.f32 %v2527, 0.6931472
    %v2529 = vlog2.pop %v2386
    %v2530 = vmul.f32 %v2529, 0.6931472
    %v2531 = vlog2.pop %v2387
    %v2532 = vmul.f32 %v2531, 0.6931472
    %v2533 = vlog2.pop %v2388
    %v2534 = vmul.f32 %v2533, 0.6931472
    %v2535 = vlog2.pop %v2389
    %v2536 = vmul.f32 %v2535, 0.6931472
    %v2537 = vlog2.pop %v2390
    %v2538 = vmul.f32 %v2537, 0.6931472
    %v2539 = vlog2.pop %v2391
    %v2540 = vmul.f32 %v2539, 0.6931472
    %v2541 = vlog2.pop %v2392
    %v2542 = vmul.f32 %v2541, 0.6931472
    %v2543 = vlog2.pop %v2393
    %v2544 = vmul.f32 %v2543, 0.6931472
    %v2545 = vlog2.pop %v2394
    %v2546 = vmul.f32 %v2545, 0.6931472
    %v2547 = vlog2.pop %v2395
    %v2548 = vmul.f32 %v2547, 0.6931472
    %v2549 = vlog2.pop %v2396
    %v2550 = vmul.f32 %v2549, 0.6931472
    %v2551 = vlog2.pop %v2397
    %v2552 = vmul.f32 %v2551, 0.6931472
    %v2553 = vlog2.pop %v2398
    %v2554 = vmul.f32 %v2553, 0.6931472
    %v2555 = vlog2.pop %v2399
    %v2556 = vmul.f32 %v2555, 0.6931472
    %v2557 = vlog2.pop %v2400
    %v2558 = vmul.f32 %v2557, 0.6931472
    %v2559 = vlog2.pop %v2401
    %v2560 = vmul.f32 %v2559, 0.6931472
    %v2561 = vlog2.pop %v2402
    %v2562 = vmul.f32 %v2561, 0.6931472
    %v2563 = vlog2.pop %v2403
    %v2564 = vmul.f32 %v2563, 0.6931472
    %v2565 = vlog2.pop %v2404
    %v2566 = vmul.f32 %v2565, 0.6931472
    %v2567 = vlog2.pop %v2405
    %v2568 = vmul.f32 %v2567, 0.6931472
    %v2569 = vlog2.pop %v2406
    %v2570 = vmul.f32 %v2569, 0.6931472
    %v2571 = vlog2.pop %v2407
    %v2572 = vmul.f32 %v2571, 0.6931472
    %v2573 = vlog2.pop %v2408
    %v2574 = vmul.f32 %v2573, 0.6931472
    %v2575 = vlog2.pop %v2409
    %v2576 = vmul.f32 %v2575, 0.6931472
    %v2577 = vlog2.pop %v2410
    %v2578 = vmul.f32 %v2577, 0.6931472
    %v2579 = vlog2.pop %v2411
    %v2580 = vmul.f32 %v2579, 0.6931472
    %v2581 = vlog2.pop %v2412
    %v2582 = vmul.f32 %v2581, 0.6931472
    %v2583 = vlog2.pop %v2413
    %v2584 = vmul.f32 %v2583, 0.6931472
    %v2585 = vlog2.pop %v2414
    %v2586 = vmul.f32 %v2585, 0.6931472
    %v2587 = vlog2.pop %v2415
    %v2588 = vmul.f32 %v2587, 0.6931472
    %v2589 = vlog2.pop %v2416
    %v2590 = vmul.f32 %v2589, 0.6931472
    %v2591 = vlog2.pop %v2417
    %v2592 = vmul.f32 %v2591, 0.6931472
    %v2593 = vlog2.pop %v2418
    %v2594 = vmul.f32 %v2593, 0.6931472
    %v2595 = vlog2.pop %v2419
    %v2596 = vmul.f32 %v2595, 0.6931472
    %v2597 = vlog2.pop %v2420
    %v2598 = vmul.f32 %v2597, 0.6931472
    %v2599 = vlog2.pop %v2421
    %v2600 = vmul.f32 %v2599, 0.6931472
    %v2601 = vlog2.pop %v2422
    %v2602 = vmul.f32 %v2601, 0.6931472
    %v2603 = vlog2.pop %v2423
    %v2604 = vmul.f32 %v2603, 0.6931472
    %v2605 = vlog2.pop %v2424
    %v2606 = vmul.f32 %v2605, 0.6931472
    %v2607 = vlog2.pop %v2425
    %v2608 = vmul.f32 %v2607, 0.6931472
    %v2609 = vlog2.pop %v2426
    %v2610 = vmul.f32 %v2609, 0.6931472
    %v2611 = vlog2.pop %v2427
    %v2612 = vmul.f32 %v2611, 0.6931472
    %v2613 = vlog2.pop %v2428
    %v2614 = vmul.f32 %v2613, 0.6931472
    %v2615 = vlog2.pop %v2429
    %v2616 = vmul.f32 %v2615, 0.6931472
    %v2617 = vlog2.pop %v2430
    %v2618 = vmul.f32 %v2617, 0.6931472
    %v2619 = vlog2.pop %v2431
    %v2620 = vmul.f32 %v2619, 0.6931472
    %v2621 = vlog2.pop %v2432
    %v2622 = vmul.f32 %v2621, 0.6931472
    %v2623 = vlog2.pop %v2433
    %v2624 = vmul.f32 %v2623, 0.6931472
    %v2625 = vlog2.pop %v2434
    %v2626 = vmul.f32 %v2625, 0.6931472
    %v2627 = vlog2.pop %v2435
    %v2628 = vmul.f32 %v2627, 0.6931472
    %v2629 = vlog2.pop %v2436
    %v2630 = vmul.f32 %v2629, 0.6931472
    %v2631 = vlog2.pop %v2437
    %v2632 = vmul.f32 %v2631, 0.6931472
    %v2633 = vlog2.pop %v2438
    %v2634 = vmul.f32 %v2633, 0.6931472
    %v2635 = vlog2.pop %v2439
    %v2636 = vmul.f32 %v2635, 0.6931472
    %v2637 = vlog2.pop %v2440
    %v2638 = vmul.f32 %v2637, 0.6931472
    %v2639 = vlog2.pop %v2441
    %v2640 = vmul.f32 %v2639, 0.6931472
    %v2641 = vlog2.pop %v2442
    %v2642 = vmul.f32 %v2641, 0.6931472
    %v2643 = vlog2.pop %v2443
    %v2644 = vmul.f32 %v2643, 0.6931472
    %v2645 = vlog2.pop %v2444
    %v2646 = vmul.f32 %v2645, 0.6931472
    %v2647 = vlog2.pop %v2445
    %v2648 = vmul.f32 %v2647, 0.6931472
    %v2649 = vlog2.pop %v2446
    %v2650 = vmul.f32 %v2649, 0.6931472
    %v2651 = vlog2.pop %v2447
    %v2652 = vmul.f32 %v2651, 0.6931472
    %v2653 = vlog2.pop %v2448
    %v2654 = vmul.f32 %v2653, 0.6931472
    %v2655 = vlog2.pop %v2449
    %v2656 = vmul.f32 %v2655, 0.6931472
    %v2657 = vlog2.pop %v2450
    %v2658 = vmul.f32 %v2657, 0.6931472
    %v2659 = vlog2.pop %v2451
    %v2660 = vmul.f32 %v2659, 0.6931472
    %v2661 = vlog2.pop %v2452
    %v2662 = vmul.f32 %v2661, 0.6931472
    %v2663 = vlog2.pop %v2453
    %v2664 = vmul.f32 %v2663, 0.6931472
    %v2665 = vlog2.pop %v2454
    %v2666 = vmul.f32 %v2665, 0.6931472
    %v2667 = vlog2.pop %v2455
    %v2668 = vmul.f32 %v2667, 0.6931472
    %v2669 = vlog2.pop %v2456
    %v2670 = vmul.f32 %v2669, 0.6931472
    %v2671 = vlog2.pop %v2457
    %v2672 = vmul.f32 %v2671, 0.6931472
    %v2673 = vlog2.pop %v2458
    %v2674 = vmul.f32 %v2673, 0.6931472
    %v2675 = vlog2.pop %v2459
    %v2676 = vmul.f32 %v2675, 0.6931472
    %v2677 = vlog2.pop %v2460
    %v2678 = vmul.f32 %v2677, 0.6931472
    %v2679 = vlog2.pop %v2461
    %v2680 = vmul.f32 %v2679, 0.6931472
    %v2681 = vlog2.pop %v2462
    %v2682 = vmul.f32 %v2681, 0.6931472
    %v2683 = vlog2.pop %v2463
    %v2684 = vmul.f32 %v2683, 0.6931472
    %v2685 = vlog2.pop %v2464
    %v2686 = vmul.f32 %v2685, 0.6931472
    %v2687 = vlog2.pop %v2465
    %v2688 = vmul.f32 %v2687, 0.6931472
    %v2689 = vlog2.pop %v2466
    %v2690 = vmul.f32 %v2689, 0.6931472
    %v2691 = vlog2.pop %v2467
    %v2692 = vmul.f32 %v2691, 0.6931472
    %v2693 = vlog2.pop %v2468
    %v2694 = vmul.f32 %v2693, 0.6931472
    %v2695 = vlog2.pop %v2469
    %v2696 = vmul.f32 %v2695, 0.6931472
    %v2697 = vlog2.pop %v2470
    %v2698 = vmul.f32 %v2697, 0.6931472
    %v2699 = vlog2.pop %v2471
    %v2700 = vmul.f32 %v2699, 0.6931472
    %v2701 = vlog2.pop %v2472
    %v2702 = vmul.f32 %v2701, 0.6931472
    %v2703 = vlog2.pop %v2473
    %v2704 = vmul.f32 %v2703, 0.6931472
    %v2705 = vlog2.pop %v2474
    %v2706 = vmul.f32 %v2705, 0.6931472
    %v2707 = vlog2.pop %v2475
    %v2708 = vmul.f32 %v2707, 0.6931472
    %v2709 = vlog2.pop %v2476
    %v2710 = vmul.f32 %v2709, 0.6931472
    %v2711 = vlog2.pop %v2477
    %v2712 = vmul.f32 %v2711, 0.6931472
    %v2713 = vlog2.pop %v2478
    %v2714 = vmul.f32 %v2713, 0.6931472
    %v2715 = vlog2.pop %v2479
    %v2716 = vmul.f32 %v2715, 0.6931472
    %v2717 = vlog2.pop %v2480
    %v2718 = vmul.f32 %v2717, 0.6931472
    %v2719 = vlog2.pop %v2481
    %v2720 = vmul.f32 %v2719, 0.6931472
    %v2721 = vlog2.pop %v2482
    %v2722 = vmul.f32 %v2721, 0.6931472
    %v2723 = vlog2.pop %v2483
    %v2724 = vmul.f32 %v2723, 0.6931472
    %v2725 = vlog2.pop %v2484
    %v2726 = vmul.f32 %v2725, 0.6931472
    %v2727 = vlog2.pop %v2485
    %v2728 = vmul.f32 %v2727, 0.6931472
    %v2729 = vlog2.pop %v2486
    %v2730 = vmul.f32 %v2729, 0.6931472
    %v2731 = vlog2.pop %v2487
    %v2732 = vmul.f32 %v2731, 0.6931472
    %v2733 = vlog2.pop %v2488
    %v2734 = vmul.f32 %v2733, 0.6931472
    %v2735 = vlog2.pop %v2489
    %v2736 = vmul.f32 %v2735, 0.6931472
    %v2737 = vlog2.pop %v2490
    %v2738 = vmul.f32 %v2737, 0.6931472
    %v2739 = vlog2.pop %v2491
    %v2740 = vmul.f32 %v2739, 0.6931472
    %v2741 = vlog2.pop %v2492
    %v2742 = vmul.f32 %v2741, 0.6931472
    %v2743 = vlog2.pop %v2493
    %v2744 = vmul.f32 %v2743, 0.6931472
    %v2745 = vlog2.pop %v2494
    %v2746 = vmul.f32 %v2745, 0.6931472
    %v2747 = vlog2.pop %v2495
    %v2748 = vmul.f32 %v2747, 0.6931472
    %v2749 = vlog2.pop %v2496
    %v2750 = vmul.f32 %v2749, 0.6931472
    %v2751 = vlog2.pop %v2497
    %v2752 = vmul.f32 %v2751, 0.6931472
    %v2753 = vlog2.pop %v2498
    %v2754 = vmul.f32 %v2753, 0.6931472
    %v2755 = vlog2.pop %v2499
    %v2756 = vmul.f32 %v2755, 0.6931472
    %v2757 = vlog2.pop %v2500
    %v2758 = vmul.f32 %v2757, 0.6931472
    %v2759 = vrcp.pop 0.6931472
    %v2760 = vmul.f32 %v2504, %v2759
    %v2761 = vmul.f32 %v2506, %v2759
    %v2762 = vmul.f32 %v2508, %v2759
    %v2763 = vmul.f32 %v2510, %v2759
    %v2764 = vmul.f32 %v2512, %v2759
    %v2765 = vmul.f32 %v2514, %v2759
    %v2766 = vmul.f32 %v2516, %v2759
    %v2767 = vmul.f32 %v2518, %v2759
    %v2768 = vmul.f32 %v2520, %v2759
    %v2769 = vmul.f32 %v2522, %v2759
    %v2770 = vmul.f32 %v2524, %v2759
    %v2771 = vmul.f32 %v2526, %v2759
    %v2772 = vmul.f32 %v2528, %v2759
    %v2773 = vmul.f32 %v2530, %v2759
    %v2774 = vmul.f32 %v2532, %v2759
    %v2775 = vmul.f32 %v2534, %v2759
    %v2776 = vmul.f32 %v2536, %v2759
    %v2777 = vmul.f32 %v2538, %v2759
    %v2778 = vmul.f32 %v2540, %v2759
    %v2779 = vmul.f32 %v2542, %v2759
    %v2780 = vmul.f32 %v2544, %v2759
    %v2781 = vmul.f32 %v2546, %v2759
    %v2782 = vmul.f32 %v2548, %v2759
    %v2783 = vmul.f32 %v2550, %v2759
    %v2784 = vmul.f32 %v2552, %v2759
    %v2785 = vmul.f32 %v2554, %v2759
    %v2786 = vmul.f32 %v2556, %v2759
    %v2787 = vmul.f32 %v2558, %v2759
    %v2788 = vmul.f32 %v2560, %v2759
    %v2789 = vmul.f32 %v2562, %v2759
    %v2790 = vmul.f32 %v2564, %v2759
    %v2791 = vmul.f32 %v2566, %v2759
    %v2792 = vmul.f32 %v2568, %v2759
    %v2793 = vmul.f32 %v2570, %v2759
    %v2794 = vmul.f32 %v2572, %v2759
    %v2795 = vmul.f32 %v2574, %v2759
    %v2796 = vmul.f32 %v2576, %v2759
    %v2797 = vmul.f32 %v2578, %v2759
    %v2798 = vmul.f32 %v2580, %v2759
    %v2799 = vmul.f32 %v2582, %v2759
    %v2800 = vmul.f32 %v2584, %v2759
    %v2801 = vmul.f32 %v2586, %v2759
    %v2802 = vmul.f32 %v2588, %v2759
    %v2803 = vmul.f32 %v2590, %v2759
    %v2804 = vmul.f32 %v2592, %v2759
    %v2805 = vmul.f32 %v2594, %v2759
    %v2806 = vmul.f32 %v2596, %v2759
    %v2807 = vmul.f32 %v2598, %v2759
    %v2808 = vmul.f32 %v2600, %v2759
    %v2809 = vmul.f32 %v2602, %v2759
    %v2810 = vmul.f32 %v2604, %v2759
    %v2811 = vmul.f32 %v2606, %v2759
    %v2812 = vmul.f32 %v2608, %v2759
    %v2813 = vmul.f32 %v2610, %v2759
    %v2814 = vmul.f32 %v2612, %v2759
    %v2815 = vmul.f32 %v2614, %v2759
    %v2816 = vmul.f32 %v2616, %v2759
    %v2817 = vmul.f32 %v2618, %v2759
    %v2818 = vmul.f32 %v2620, %v2759
    %v2819 = vmul.f32 %v2622, %v2759
    %v2820 = vmul.f32 %v2624, %v2759
    %v2821 = vmul.f32 %v2626, %v2759
    %v2822 = vmul.f32 %v2628, %v2759
    %v2823 = vmul.f32 %v2630, %v2759
    %v2824 = vmul.f32 %v2632, %v2759
    %v2825 = vmul.f32 %v2634, %v2759
    %v2826 = vmul.f32 %v2636, %v2759
    %v2827 = vmul.f32 %v2638, %v2759
    %v2828 = vmul.f32 %v2640, %v2759
    %v2829 = vmul.f32 %v2642, %v2759
    %v2830 = vmul.f32 %v2644, %v2759
    %v2831 = vmul.f32 %v2646, %v2759
    %v2832 = vmul.f32 %v2648, %v2759
    %v2833 = vmul.f32 %v2650, %v2759
    %v2834 = vmul.f32 %v2652, %v2759
    %v2835 = vmul.f32 %v2654, %v2759
    %v2836 = vmul.f32 %v2656, %v2759
    %v2837 = vmul.f32 %v2658, %v2759
    %v2838 = vmul.f32 %v2660, %v2759
    %v2839 = vmul.f32 %v2662, %v2759
    %v2840 = vmul.f32 %v2664, %v2759
    %v2841 = vmul.f32 %v2666, %v2759
    %v2842 = vmul.f32 %v2668, %v2759
    %v2843 = vmul.f32 %v2670, %v2759
    %v2844 = vmul.f32 %v2672, %v2759
    %v2845 = vmul.f32 %v2674, %v2759
    %v2846 = vmul.f32 %v2676, %v2759
    %v2847 = vmul.f32 %v2678, %v2759
    %v2848 = vmul.f32 %v2680, %v2759
    %v2849 = vmul.f32 %v2682, %v2759
    %v2850 = vmul.f32 %v2684, %v2759
    %v2851 = vmul.f32 %v2686, %v2759
    %v2852 = vmul.f32 %v2688, %v2759
    %v2853 = vmul.f32 %v2690, %v2759
    %v2854 = vmul.f32 %v2692, %v2759
    %v2855 = vmul.f32 %v2694, %v2759
    %v2856 = vmul.f32 %v2696, %v2759
    %v2857 = vmul.f32 %v2698, %v2759
    %v2858 = vmul.f32 %v2700, %v2759
    %v2859 = vmul.f32 %v2702, %v2759
    %v2860 = vmul.f32 %v2704, %v2759
    %v2861 = vmul.f32 %v2706, %v2759
    %v2862 = vmul.f32 %v2708, %v2759
    %v2863 = vmul.f32 %v2710, %v2759
    %v2864 = vmul.f32 %v2712, %v2759
    %v2865 = vmul.f32 %v2714, %v2759
    %v2866 = vmul.f32 %v2716, %v2759
    %v2867 = vmul.f32 %v2718, %v2759
    %v2868 = vmul.f32 %v2720, %v2759
    %v2869 = vmul.f32 %v2722, %v2759
    %v2870 = vmul.f32 %v2724, %v2759
    %v2871 = vmul.f32 %v2726, %v2759
    %v2872 = vmul.f32 %v2728, %v2759
    %v2873 = vmul.f32 %v2730, %v2759
    %v2874 = vmul.f32 %v2732, %v2759
    %v2875 = vmul.f32 %v2734, %v2759
    %v2876 = vmul.f32 %v2736, %v2759
    %v2877 = vmul.f32 %v2738, %v2759
    %v2878 = vmul.f32 %v2740, %v2759
    %v2879 = vmul.f32 %v2742, %v2759
    %v2880 = vmul.f32 %v2744, %v2759
    %v2881 = vmul.f32 %v2746, %v2759
    %v2882 = vmul.f32 %v2748, %v2759
    %v2883 = vmul.f32 %v2750, %v2759
    %v2884 = vmul.f32 %v2752, %v2759
    %v2885 = vmul.f32 %v2754, %v2759
    %v2886 = vmul.f32 %v2756, %v2759
    %v2887 = vmul.f32 %v2758, %v2759
    %v2888 = vadd.f32 %v2760, 1e-06
    %v2889 = vadd.f32 %v2761, 1e-06
    %v2890 = vadd.f32 %v2762, 1e-06
    %v2891 = vadd.f32 %v2763, 1e-06
    %v2892 = vadd.f32 %v2764, 1e-06
    %v2893 = vadd.f32 %v2765, 1e-06
    %v2894 = vadd.f32 %v2766, 1e-06
    %v2895 = vadd.f32 %v2767, 1e-06
    %v2896 = vadd.f32 %v2768, 1e-06
    %v2897 = vadd.f32 %v2769, 1e-06
    %v2898 = vadd.f32 %v2770, 1e-06
    %v2899 = vadd.f32 %v2771, 1e-06
    %v2900 = vadd.f32 %v2772, 1e-06
    %v2901 = vadd.f32 %v2773, 1e-06
    %v2902 = vadd.f32 %v2774, 1e-06
    %v2903 = vadd.f32 %v2775, 1e-06
    %v2904 = vadd.f32 %v2776, 1e-06
    %v2905 = vadd.f32 %v2777, 1e-06
    %v2906 = vadd.f32 %v2778, 1e-06
    %v2907 = vadd.f32 %v2779, 1e-06
    %v2908 = vadd.f32 %v2780, 1e-06
    %v2909 = vadd.f32 %v2781, 1e-06
    %v2910 = vadd.f32 %v2782, 1e-06
    %v2911 = vadd.f32 %v2783, 1e-06
    %v2912 = vadd.f32 %v2784, 1e-06
    %v2913 = vadd.f32 %v2785, 1e-06
    %v2914 = vadd.f32 %v2786, 1e-06
    %v2915 = vadd.f32 %v2787, 1e-06
    %v2916 = vadd.f32 %v2788, 1e-06
    %v2917 = vadd.f32 %v2789, 1e-06
    %v2918 = vadd.f32 %v2790, 1e-06
    %v2919 = vadd.f32 %v2791, 1e-06
    %v2920 = vadd.f32 %v2792, 1e-06
    %v2921 = vadd.f32 %v2793, 1e-06
    %v2922 = vadd.f32 %v2794, 1e-06
    %v2923 = vadd.f32 %v2795, 1e-06
    %v2924 = vadd.f32 %v2796, 1e-06
    %v2925 = vadd.f32 %v2797, 1e-06
    %v2926 = vadd.f32 %v2798, 1e-06
    %v2927 = vadd.f32 %v2799, 1e-06
    %v2928 = vadd.f32 %v2800, 1e-06
    %v2929 = vadd.f32 %v2801, 1e-06
    %v2930 = vadd.f32 %v2802, 1e-06
    %v2931 = vadd.f32 %v2803, 1e-06
    %v2932 = vadd.f32 %v2804, 1e-06
    %v2933 = vadd.f32 %v2805, 1e-06
    %v2934 = vadd.f32 %v2806, 1e-06
    %v2935 = vadd.f32 %v2807, 1e-06
    %v2936 = vadd.f32 %v2808, 1e-06
    %v2937 = vadd.f32 %v2809, 1e-06
    %v2938 = vadd.f32 %v2810, 1e-06
    %v2939 = vadd.f32 %v2811, 1e-06
    %v2940 = vadd.f32 %v2812, 1e-06
    %v2941 = vadd.f32 %v2813, 1e-06
    %v2942 = vadd.f32 %v2814, 1e-06
    %v2943 = vadd.f32 %v2815, 1e-06
    %v2944 = vadd.f32 %v2816, 1e-06
    %v2945 = vadd.f32 %v2817, 1e-06
    %v2946 = vadd.f32 %v2818, 1e-06
    %v2947 = vadd.f32 %v2819, 1e-06
    %v2948 = vadd.f32 %v2820, 1e-06
    %v2949 = vadd.f32 %v2821, 1e-06
    %v2950 = vadd.f32 %v2822, 1e-06
    %v2951 = vadd.f32 %v2823, 1e-06
    %v2952 = vadd.f32 %v2824, 1e-06
    %v2953 = vadd.f32 %v2825, 1e-06
    %v2954 = vadd.f32 %v2826, 1e-06
    %v2955 = vadd.f32 %v2827, 1e-06
    %v2956 = vadd.f32 %v2828, 1e-06
    %v2957 = vadd.f32 %v2829, 1e-06
    %v2958 = vadd.f32 %v2830, 1e-06
    %v2959 = vadd.f32 %v2831, 1e-06
    %v2960 = vadd.f32 %v2832, 1e-06
    %v2961 = vadd.f32 %v2833, 1e-06
    %v2962 = vadd.f32 %v2834, 1e-06
    %v2963 = vadd.f32 %v2835, 1e-06
    %v2964 = vadd.f32 %v2836, 1e-06
    %v2965 = vadd.f32 %v2837, 1e-06
    %v2966 = vadd.f32 %v2838, 1e-06
    %v2967 = vadd.f32 %v2839, 1e-06
    %v2968 = vadd.f32 %v2840, 1e-06
    %v2969 = vadd.f32 %v2841, 1e-06
    %v2970 = vadd.f32 %v2842, 1e-06
    %v2971 = vadd.f32 %v2843, 1e-06
    %v2972 = vadd.f32 %v2844, 1e-06
    %v2973 = vadd.f32 %v2845, 1e-06
    %v2974 = vadd.f32 %v2846, 1e-06
    %v2975 = vadd.f32 %v2847, 1e-06
    %v2976 = vadd.f32 %v2848, 1e-06
    %v2977 = vadd.f32 %v2849, 1e-06
    %v2978 = vadd.f32 %v2850, 1e-06
    %v2979 = vadd.f32 %v2851, 1e-06
    %v2980 = vadd.f32 %v2852, 1e-06
    %v2981 = vadd.f32 %v2853, 1e-06
    %v2982 = vadd.f32 %v2854, 1e-06
    %v2983 = vadd.f32 %v2855, 1e-06
    %v2984 = vadd.f32 %v2856, 1e-06
    %v2985 = vadd.f32 %v2857, 1e-06
    %v2986 = vadd.f32 %v2858, 1e-06
    %v2987 = vadd.f32 %v2859, 1e-06
    %v2988 = vadd.f32 %v2860, 1e-06
    %v2989 = vadd.f32 %v2861, 1e-06
    %v2990 = vadd.f32 %v2862, 1e-06
    %v2991 = vadd.f32 %v2863, 1e-06
    %v2992 = vadd.f32 %v2864, 1e-06
    %v2993 = vadd.f32 %v2865, 1e-06
    %v2994 = vadd.f32 %v2866, 1e-06
    %v2995 = vadd.f32 %v2867, 1e-06
    %v2996 = vadd.f32 %v2868, 1e-06
    %v2997 = vadd.f32 %v2869, 1e-06
    %v2998 = vadd.f32 %v2870, 1e-06
    %v2999 = vadd.f32 %v2871, 1e-06
    %v3000 = vadd.f32 %v2872, 1e-06
    %v3001 = vadd.f32 %v2873, 1e-06
    %v3002 = vadd.f32 %v2874, 1e-06
    %v3003 = vadd.f32 %v2875, 1e-06
    %v3004 = vadd.f32 %v2876, 1e-06
    %v3005 = vadd.f32 %v2877, 1e-06
    %v3006 = vadd.f32 %v2878, 1e-06
    %v3007 = vadd.f32 %v2879, 1e-06
    %v3008 = vadd.f32 %v2880, 1e-06
    %v3009 = vadd.f32 %v2881, 1e-06
    %v3010 = vadd.f32 %v2882, 1e-06
    %v3011 = vadd.f32 %v2883, 1e-06
    %v3012 = vadd.f32 %v2884, 1e-06
    %v3013 = vadd.f32 %v2885, 1e-06
    %v3014 = vadd.f32 %v2886, 1e-06
    %v3015 = vadd.f32 %v2887, 1e-06
    %3144 = vset.pattern.permute.xlu0 0
    %3145 = vperm.xlu0 %3144, %v2888
    %v3146 = vpop.permute.xlu0 %3145
    %3147 = vset.pattern.permute.xlu0 0
    %3148 = vperm.xlu0 %3147, %v2889
    %v3149 = vpop.permute.xlu0 %3148
    %3150 = vset.pattern.permute.xlu0 0
    %3151 = vperm.xlu0 %3150, %v2890
    %v3152 = vpop.permute.xlu0 %3151
    %3153 = vset.pattern.permute.xlu0 0
    %3154 = vperm.xlu0 %3153, %v2891
    %v3155 = vpop.permute.xlu0 %3154
    %3156 = vset.pattern.permute.xlu0 0
    %3157 = vperm.xlu0 %3156, %v2892
    %v3158 = vpop.permute.xlu0 %3157
    %3159 = vset.pattern.permute.xlu0 0
    %3160 = vperm.xlu0 %3159, %v2893
    %v3161 = vpop.permute.xlu0 %3160
    %3162 = vset.pattern.permute.xlu0 0
    %3163 = vperm.xlu0 %3162, %v2894
    %v3164 = vpop.permute.xlu0 %3163
    %3165 = vset.pattern.permute.xlu0 0
    %3166 = vperm.xlu0 %3165, %v2895
    %v3167 = vpop.permute.xlu0 %3166
    %3168 = vset.pattern.permute.xlu0 0
    %3169 = vperm.xlu0 %3168, %v2896
    %v3170 = vpop.permute.xlu0 %3169
    %3171 = vset.pattern.permute.xlu0 0
    %3172 = vperm.xlu0 %3171, %v2897
    %v3173 = vpop.permute.xlu0 %3172
    %3174 = vset.pattern.permute.xlu0 0
    %3175 = vperm.xlu0 %3174, %v2898
    %v3176 = vpop.permute.xlu0 %3175
    %3177 = vset.pattern.permute.xlu0 0
    %3178 = vperm.xlu0 %3177, %v2899
    %v3179 = vpop.permute.xlu0 %3178
    %3180 = vset.pattern.permute.xlu0 0
    %3181 = vperm.xlu0 %3180, %v2900
    %v3182 = vpop.permute.xlu0 %3181
    %3183 = vset.pattern.permute.xlu0 0
    %3184 = vperm.xlu0 %3183, %v2901
    %v3185 = vpop.permute.xlu0 %3184
    %3186 = vset.pattern.permute.xlu0 0
    %3187 = vperm.xlu0 %3186, %v2902
    %v3188 = vpop.permute.xlu0 %3187
    %3189 = vset.pattern.permute.xlu0 0
    %3190 = vperm.xlu0 %3189, %v2903
    %v3191 = vpop.permute.xlu0 %3190
    %3192 = vset.pattern.permute.xlu0 0
    %3193 = vperm.xlu0 %3192, %v2904
    %v3194 = vpop.permute.xlu0 %3193
    %3195 = vset.pattern.permute.xlu0 0
    %3196 = vperm.xlu0 %3195, %v2905
    %v3197 = vpop.permute.xlu0 %3196
    %3198 = vset.pattern.permute.xlu0 0
    %3199 = vperm.xlu0 %3198, %v2906
    %v3200 = vpop.permute.xlu0 %3199
    %3201 = vset.pattern.permute.xlu0 0
    %3202 = vperm.xlu0 %3201, %v2907
    %v3203 = vpop.permute.xlu0 %3202
    %3204 = vset.pattern.permute.xlu0 0
    %3205 = vperm.xlu0 %3204, %v2908
    %v3206 = vpop.permute.xlu0 %3205
    %3207 = vset.pattern.permute.xlu0 0
    %3208 = vperm.xlu0 %3207, %v2909
    %v3209 = vpop.permute.xlu0 %3208
    %3210 = vset.pattern.permute.xlu0 0
    %3211 = vperm.xlu0 %3210, %v2910
    %v3212 = vpop.permute.xlu0 %3211
    %3213 = vset.pattern.permute.xlu0 0
    %3214 = vperm.xlu0 %3213, %v2911
    %v3215 = vpop.permute.xlu0 %3214
    %3216 = vset.pattern.permute.xlu0 0
    %3217 = vperm.xlu0 %3216, %v2912
    %v3218 = vpop.permute.xlu0 %3217
    %3219 = vset.pattern.permute.xlu0 0
    %3220 = vperm.xlu0 %3219, %v2913
    %v3221 = vpop.permute.xlu0 %3220
    %3222 = vset.pattern.permute.xlu0 0
    %3223 = vperm.xlu0 %3222, %v2914
    %v3224 = vpop.permute.xlu0 %3223
    %3225 = vset.pattern.permute.xlu0 0
    %3226 = vperm.xlu0 %3225, %v2915
    %v3227 = vpop.permute.xlu0 %3226
    %3228 = vset.pattern.permute.xlu0 0
    %3229 = vperm.xlu0 %3228, %v2916
    %v3230 = vpop.permute.xlu0 %3229
    %3231 = vset.pattern.permute.xlu0 0
    %3232 = vperm.xlu0 %3231, %v2917
    %v3233 = vpop.permute.xlu0 %3232
    %3234 = vset.pattern.permute.xlu0 0
    %3235 = vperm.xlu0 %3234, %v2918
    %v3236 = vpop.permute.xlu0 %3235
    %3237 = vset.pattern.permute.xlu0 0
    %3238 = vperm.xlu0 %3237, %v2919
    %v3239 = vpop.permute.xlu0 %3238
    %3240 = vset.pattern.permute.xlu0 0
    %3241 = vperm.xlu0 %3240, %v2920
    %v3242 = vpop.permute.xlu0 %3241
    %3243 = vset.pattern.permute.xlu0 0
    %3244 = vperm.xlu0 %3243, %v2921
    %v3245 = vpop.permute.xlu0 %3244
    %3246 = vset.pattern.permute.xlu0 0
    %3247 = vperm.xlu0 %3246, %v2922
    %v3248 = vpop.permute.xlu0 %3247
    %3249 = vset.pattern.permute.xlu0 0
    %3250 = vperm.xlu0 %3249, %v2923
    %v3251 = vpop.permute.xlu0 %3250
    %3252 = vset.pattern.permute.xlu0 0
    %3253 = vperm.xlu0 %3252, %v2924
    %v3254 = vpop.permute.xlu0 %3253
    %3255 = vset.pattern.permute.xlu0 0
    %3256 = vperm.xlu0 %3255, %v2925
    %v3257 = vpop.permute.xlu0 %3256
    %3258 = vset.pattern.permute.xlu0 0
    %3259 = vperm.xlu0 %3258, %v2926
    %v3260 = vpop.permute.xlu0 %3259
    %3261 = vset.pattern.permute.xlu0 0
    %3262 = vperm.xlu0 %3261, %v2927
    %v3263 = vpop.permute.xlu0 %3262
    %3264 = vset.pattern.permute.xlu0 0
    %3265 = vperm.xlu0 %3264, %v2928
    %v3266 = vpop.permute.xlu0 %3265
    %3267 = vset.pattern.permute.xlu0 0
    %3268 = vperm.xlu0 %3267, %v2929
    %v3269 = vpop.permute.xlu0 %3268
    %3270 = vset.pattern.permute.xlu0 0
    %3271 = vperm.xlu0 %3270, %v2930
    %v3272 = vpop.permute.xlu0 %3271
    %3273 = vset.pattern.permute.xlu0 0
    %3274 = vperm.xlu0 %3273, %v2931
    %v3275 = vpop.permute.xlu0 %3274
    %3276 = vset.pattern.permute.xlu0 0
    %3277 = vperm.xlu0 %3276, %v2932
    %v3278 = vpop.permute.xlu0 %3277
    %3279 = vset.pattern.permute.xlu0 0
    %3280 = vperm.xlu0 %3279, %v2933
    %v3281 = vpop.permute.xlu0 %3280
    %3282 = vset.pattern.permute.xlu0 0
    %3283 = vperm.xlu0 %3282, %v2934
    %v3284 = vpop.permute.xlu0 %3283
    %3285 = vset.pattern.permute.xlu0 0
    %3286 = vperm.xlu0 %3285, %v2935
    %v3287 = vpop.permute.xlu0 %3286
    %3288 = vset.pattern.permute.xlu0 0
    %3289 = vperm.xlu0 %3288, %v2936
    %v3290 = vpop.permute.xlu0 %3289
    %3291 = vset.pattern.permute.xlu0 0
    %3292 = vperm.xlu0 %3291, %v2937
    %v3293 = vpop.permute.xlu0 %3292
    %3294 = vset.pattern.permute.xlu0 0
    %3295 = vperm.xlu0 %3294, %v2938
    %v3296 = vpop.permute.xlu0 %3295
    %3297 = vset.pattern.permute.xlu0 0
    %3298 = vperm.xlu0 %3297, %v2939
    %v3299 = vpop.permute.xlu0 %3298
    %3300 = vset.pattern.permute.xlu0 0
    %3301 = vperm.xlu0 %3300, %v2940
    %v3302 = vpop.permute.xlu0 %3301
    %3303 = vset.pattern.permute.xlu0 0
    %3304 = vperm.xlu0 %3303, %v2941
    %v3305 = vpop.permute.xlu0 %3304
    %3306 = vset.pattern.permute.xlu0 0
    %3307 = vperm.xlu0 %3306, %v2942
    %v3308 = vpop.permute.xlu0 %3307
    %3309 = vset.pattern.permute.xlu0 0
    %3310 = vperm.xlu0 %3309, %v2943
    %v3311 = vpop.permute.xlu0 %3310
    %3312 = vset.pattern.permute.xlu0 0
    %3313 = vperm.xlu0 %3312, %v2944
    %v3314 = vpop.permute.xlu0 %3313
    %3315 = vset.pattern.permute.xlu0 0
    %3316 = vperm.xlu0 %3315, %v2945
    %v3317 = vpop.permute.xlu0 %3316
    %3318 = vset.pattern.permute.xlu0 0
    %3319 = vperm.xlu0 %3318, %v2946
    %v3320 = vpop.permute.xlu0 %3319
    %3321 = vset.pattern.permute.xlu0 0
    %3322 = vperm.xlu0 %3321, %v2947
    %v3323 = vpop.permute.xlu0 %3322
    %3324 = vset.pattern.permute.xlu0 0
    %3325 = vperm.xlu0 %3324, %v2948
    %v3326 = vpop.permute.xlu0 %3325
    %3327 = vset.pattern.permute.xlu0 0
    %3328 = vperm.xlu0 %3327, %v2949
    %v3329 = vpop.permute.xlu0 %3328
    %3330 = vset.pattern.permute.xlu0 0
    %3331 = vperm.xlu0 %3330, %v2950
    %v3332 = vpop.permute.xlu0 %3331
    %3333 = vset.pattern.permute.xlu0 0
    %3334 = vperm.xlu0 %3333, %v2951
    %v3335 = vpop.permute.xlu0 %3334
    %3336 = vset.pattern.permute.xlu0 0
    %3337 = vperm.xlu0 %3336, %v2952
    %v3338 = vpop.permute.xlu0 %3337
    %3339 = vset.pattern.permute.xlu0 0
    %3340 = vperm.xlu0 %3339, %v2953
    %v3341 = vpop.permute.xlu0 %3340
    %3342 = vset.pattern.permute.xlu0 0
    %3343 = vperm.xlu0 %3342, %v2954
    %v3344 = vpop.permute.xlu0 %3343
    %3345 = vset.pattern.permute.xlu0 0
    %3346 = vperm.xlu0 %3345, %v2955
    %v3347 = vpop.permute.xlu0 %3346
    %3348 = vset.pattern.permute.xlu0 0
    %3349 = vperm.xlu0 %3348, %v2956
    %v3350 = vpop.permute.xlu0 %3349
    %3351 = vset.pattern.permute.xlu0 0
    %3352 = vperm.xlu0 %3351, %v2957
    %v3353 = vpop.permute.xlu0 %3352
    %3354 = vset.pattern.permute.xlu0 0
    %3355 = vperm.xlu0 %3354, %v2958
    %v3356 = vpop.permute.xlu0 %3355
    %3357 = vset.pattern.permute.xlu0 0
    %3358 = vperm.xlu0 %3357, %v2959
    %v3359 = vpop.permute.xlu0 %3358
    %3360 = vset.pattern.permute.xlu0 0
    %3361 = vperm.xlu0 %3360, %v2960
    %v3362 = vpop.permute.xlu0 %3361
    %3363 = vset.pattern.permute.xlu0 0
    %3364 = vperm.xlu0 %3363, %v2961
    %v3365 = vpop.permute.xlu0 %3364
    %3366 = vset.pattern.permute.xlu0 0
    %3367 = vperm.xlu0 %3366, %v2962
    %v3368 = vpop.permute.xlu0 %3367
    %3369 = vset.pattern.permute.xlu0 0
    %3370 = vperm.xlu0 %3369, %v2963
    %v3371 = vpop.permute.xlu0 %3370
    %3372 = vset.pattern.permute.xlu0 0
    %3373 = vperm.xlu0 %3372, %v2964
    %v3374 = vpop.permute.xlu0 %3373
    %3375 = vset.pattern.permute.xlu0 0
    %3376 = vperm.xlu0 %3375, %v2965
    %v3377 = vpop.permute.xlu0 %3376
    %3378 = vset.pattern.permute.xlu0 0
    %3379 = vperm.xlu0 %3378, %v2966
    %v3380 = vpop.permute.xlu0 %3379
    %3381 = vset.pattern.permute.xlu0 0
    %3382 = vperm.xlu0 %3381, %v2967
    %v3383 = vpop.permute.xlu0 %3382
    %3384 = vset.pattern.permute.xlu0 0
    %3385 = vperm.xlu0 %3384, %v2968
    %v3386 = vpop.permute.xlu0 %3385
    %3387 = vset.pattern.permute.xlu0 0
    %3388 = vperm.xlu0 %3387, %v2969
    %v3389 = vpop.permute.xlu0 %3388
    %3390 = vset.pattern.permute.xlu0 0
    %3391 = vperm.xlu0 %3390, %v2970
    %v3392 = vpop.permute.xlu0 %3391
    %3393 = vset.pattern.permute.xlu0 0
    %3394 = vperm.xlu0 %3393, %v2971
    %v3395 = vpop.permute.xlu0 %3394
    %3396 = vset.pattern.permute.xlu0 0
    %3397 = vperm.xlu0 %3396, %v2972
    %v3398 = vpop.permute.xlu0 %3397
    %3399 = vset.pattern.permute.xlu0 0
    %3400 = vperm.xlu0 %3399, %v2973
    %v3401 = vpop.permute.xlu0 %3400
    %3402 = vset.pattern.permute.xlu0 0
    %3403 = vperm.xlu0 %3402, %v2974
    %v3404 = vpop.permute.xlu0 %3403
    %3405 = vset.pattern.permute.xlu0 0
    %3406 = vperm.xlu0 %3405, %v2975
    %v3407 = vpop.permute.xlu0 %3406
    %3408 = vset.pattern.permute.xlu0 0
    %3409 = vperm.xlu0 %3408, %v2976
    %v3410 = vpop.permute.xlu0 %3409
    %3411 = vset.pattern.permute.xlu0 0
    %3412 = vperm.xlu0 %3411, %v2977
    %v3413 = vpop.permute.xlu0 %3412
    %3414 = vset.pattern.permute.xlu0 0
    %3415 = vperm.xlu0 %3414, %v2978
    %v3416 = vpop.permute.xlu0 %3415
    %3417 = vset.pattern.permute.xlu0 0
    %3418 = vperm.xlu0 %3417, %v2979
    %v3419 = vpop.permute.xlu0 %3418
    %3420 = vset.pattern.permute.xlu0 0
    %3421 = vperm.xlu0 %3420, %v2980
    %v3422 = vpop.permute.xlu0 %3421
    %3423 = vset.pattern.permute.xlu0 0
    %3424 = vperm.xlu0 %3423, %v2981
    %v3425 = vpop.permute.xlu0 %3424
    %3426 = vset.pattern.permute.xlu0 0
    %3427 = vperm.xlu0 %3426, %v2982
    %v3428 = vpop.permute.xlu0 %3427
    %3429 = vset.pattern.permute.xlu0 0
    %3430 = vperm.xlu0 %3429, %v2983
    %v3431 = vpop.permute.xlu0 %3430
    %3432 = vset.pattern.permute.xlu0 0
    %3433 = vperm.xlu0 %3432, %v2984
    %v3434 = vpop.permute.xlu0 %3433
    %3435 = vset.pattern.permute.xlu0 0
    %3436 = vperm.xlu0 %3435, %v2985
    %v3437 = vpop.permute.xlu0 %3436
    %3438 = vset.pattern.permute.xlu0 0
    %3439 = vperm.xlu0 %3438, %v2986
    %v3440 = vpop.permute.xlu0 %3439
    %3441 = vset.pattern.permute.xlu0 0
    %3442 = vperm.xlu0 %3441, %v2987
    %v3443 = vpop.permute.xlu0 %3442
    %3444 = vset.pattern.permute.xlu0 0
    %3445 = vperm.xlu0 %3444, %v2988
    %v3446 = vpop.permute.xlu0 %3445
    %3447 = vset.pattern.permute.xlu0 0
    %3448 = vperm.xlu0 %3447, %v2989
    %v3449 = vpop.permute.xlu0 %3448
    %3450 = vset.pattern.permute.xlu0 0
    %3451 = vperm.xlu0 %3450, %v2990
    %v3452 = vpop.permute.xlu0 %3451
    %3453 = vset.pattern.permute.xlu0 0
    %3454 = vperm.xlu0 %3453, %v2991
    %v3455 = vpop.permute.xlu0 %3454
    %3456 = vset.pattern.permute.xlu0 0
    %3457 = vperm.xlu0 %3456, %v2992
    %v3458 = vpop.permute.xlu0 %3457
    %3459 = vset.pattern.permute.xlu0 0
    %3460 = vperm.xlu0 %3459, %v2993
    %v3461 = vpop.permute.xlu0 %3460
    %3462 = vset.pattern.permute.xlu0 0
    %3463 = vperm.xlu0 %3462, %v2994
    %v3464 = vpop.permute.xlu0 %3463
    %3465 = vset.pattern.permute.xlu0 0
    %3466 = vperm.xlu0 %3465, %v2995
    %v3467 = vpop.permute.xlu0 %3466
    %3468 = vset.pattern.permute.xlu0 0
    %3469 = vperm.xlu0 %3468, %v2996
    %v3470 = vpop.permute.xlu0 %3469
    %3471 = vset.pattern.permute.xlu0 0
    %3472 = vperm.xlu0 %3471, %v2997
    %v3473 = vpop.permute.xlu0 %3472
    %3474 = vset.pattern.permute.xlu0 0
    %3475 = vperm.xlu0 %3474, %v2998
    %v3476 = vpop.permute.xlu0 %3475
    %3477 = vset.pattern.permute.xlu0 0
    %3478 = vperm.xlu0 %3477, %v2999
    %v3479 = vpop.permute.xlu0 %3478
    %3480 = vset.pattern.permute.xlu0 0
    %3481 = vperm.xlu0 %3480, %v3000
    %v3482 = vpop.permute.xlu0 %3481
    %3483 = vset.pattern.permute.xlu0 0
    %3484 = vperm.xlu0 %3483, %v3001
    %v3485 = vpop.permute.xlu0 %3484
    %3486 = vset.pattern.permute.xlu0 0
    %3487 = vperm.xlu0 %3486, %v3002
    %v3488 = vpop.permute.xlu0 %3487
    %3489 = vset.pattern.permute.xlu0 0
    %3490 = vperm.xlu0 %3489, %v3003
    %v3491 = vpop.permute.xlu0 %3490
    %3492 = vset.pattern.permute.xlu0 0
    %3493 = vperm.xlu0 %3492, %v3004
    %v3494 = vpop.permute.xlu0 %3493
    %3495 = vset.pattern.permute.xlu0 0
    %3496 = vperm.xlu0 %3495, %v3005
    %v3497 = vpop.permute.xlu0 %3496
    %3498 = vset.pattern.permute.xlu0 0
    %3499 = vperm.xlu0 %3498, %v3006
    %v3500 = vpop.permute.xlu0 %3499
    %3501 = vset.pattern.permute.xlu0 0
    %3502 = vperm.xlu0 %3501, %v3007
    %v3503 = vpop.permute.xlu0 %3502
    %3504 = vset.pattern.permute.xlu0 0
    %3505 = vperm.xlu0 %3504, %v3008
    %v3506 = vpop.permute.xlu0 %3505
    %3507 = vset.pattern.permute.xlu0 0
    %3508 = vperm.xlu0 %3507, %v3009
    %v3509 = vpop.permute.xlu0 %3508
    %3510 = vset.pattern.permute.xlu0 0
    %3511 = vperm.xlu0 %3510, %v3010
    %v3512 = vpop.permute.xlu0 %3511
    %3513 = vset.pattern.permute.xlu0 0
    %3514 = vperm.xlu0 %3513, %v3011
    %v3515 = vpop.permute.xlu0 %3514
    %3516 = vset.pattern.permute.xlu0 0
    %3517 = vperm.xlu0 %3516, %v3012
    %v3518 = vpop.permute.xlu0 %3517
    %3519 = vset.pattern.permute.xlu0 0
    %3520 = vperm.xlu0 %3519, %v3013
    %v3521 = vpop.permute.xlu0 %3520
    %3522 = vset.pattern.permute.xlu0 0
    %3523 = vperm.xlu0 %3522, %v3014
    %v3524 = vpop.permute.xlu0 %3523
    %3525 = vset.pattern.permute.xlu0 0
    %3526 = vperm.xlu0 %3525, %v3015
    %v3527 = vpop.permute.xlu0 %3526
    %v3528 = vlaneseq
    %v3529 = vand.u32 %v3528, 127
    %v3530 = vlaneseq
    %v3531 = vshrl.u32 %v3530, 7
    %v3532 = vsub.s32 %v3529, %v3531
    %v3533 = vrot.slane %v3146, %v3532
    %v3534 = vadd.s32 %v3529, 4294967288
    %v3535 = vlaneseq
    %v3536 = vshrl.u32 %v3535, 7
    %v3537 = vsub.s32 %v3534, %v3536
    %v3538 = vrot.slane %v3149, %v3537
    %vm3539 = vcmask 130112
    %v3540 = vsel %vm3539, %v3538, %v3533
    %v3541 = vadd.s32 %v3529, 4294967280
    %v3542 = vlaneseq
    %v3543 = vshrl.u32 %v3542, 7
    %v3544 = vsub.s32 %v3541, %v3543
    %v3545 = vrot.slane %v3152, %v3544
    %vm3546 = vcmask 195712
    %v3547 = vsel %vm3546, %v3545, %v3540
    %v3548 = vadd.s32 %v3529, 4294967272
    %v3549 = vlaneseq
    %v3550 = vshrl.u32 %v3549, 7
    %v3551 = vsub.s32 %v3548, %v3550
    %v3552 = vrot.slane %v3155, %v3551
    %vm3553 = vcmask 261312
    %v3554 = vsel %vm3553, %v3552, %v3547
    %v3555 = vadd.s32 %v3529, 4294967264
    %v3556 = vlaneseq
    %v3557 = vshrl.u32 %v3556, 7
    %v3558 = vsub.s32 %v3555, %v3557
    %v3559 = vrot.slane %v3158, %v3558
    %vm3560 = vcmask 326912
    %v3561 = vsel %vm3560, %v3559, %v3554
    %v3562 = vadd.s32 %v3529, 4294967256
    %v3563 = vlaneseq
    %v3564 = vshrl.u32 %v3563, 7
    %v3565 = vsub.s32 %v3562, %v3564
    %v3566 = vrot.slane %v3161, %v3565
    %vm3567 = vcmask 392512
    %v3568 = vsel %vm3567, %v3566, %v3561
    %v3569 = vadd.s32 %v3529, 4294967248
    %v3570 = vlaneseq
    %v3571 = vshrl.u32 %v3570, 7
    %v3572 = vsub.s32 %v3569, %v3571
    %v3573 = vrot.slane %v3164, %v3572
    %vm3574 = vcmask 458112
    %v3575 = vsel %vm3574, %v3573, %v3568
    %v3576 = vadd.s32 %v3529, 4294967240
    %v3577 = vlaneseq
    %v3578 = vshrl.u32 %v3577, 7
    %v3579 = vsub.s32 %v3576, %v3578
    %v3580 = vrot.slane %v3167, %v3579
    %vm3581 = vcmask 523712
    %v3582 = vsel %vm3581, %v3580, %v3575
    %v3583 = vadd.s32 %v3529, 4294967232
    %v3584 = vlaneseq
    %v3585 = vshrl.u32 %v3584, 7
    %v3586 = vsub.s32 %v3583, %v3585
    %v3587 = vrot.slane %v3170, %v3586
    %vm3588 = vcmask 589312
    %v3589 = vsel %vm3588, %v3587, %v3582
    %v3590 = vadd.s32 %v3529, 4294967224
    %v3591 = vlaneseq
    %v3592 = vshrl.u32 %v3591, 7
    %v3593 = vsub.s32 %v3590, %v3592
    %v3594 = vrot.slane %v3173, %v3593
    %vm3595 = vcmask 654912
    %v3596 = vsel %vm3595, %v3594, %v3589
    %v3597 = vadd.s32 %v3529, 4294967216
    %v3598 = vlaneseq
    %v3599 = vshrl.u32 %v3598, 7
    %v3600 = vsub.s32 %v3597, %v3599
    %v3601 = vrot.slane %v3176, %v3600
    %vm3602 = vcmask 720512
    %v3603 = vsel %vm3602, %v3601, %v3596
    %v3604 = vadd.s32 %v3529, 4294967208
    %v3605 = vlaneseq
    %v3606 = vshrl.u32 %v3605, 7
    %v3607 = vsub.s32 %v3604, %v3606
    %v3608 = vrot.slane %v3179, %v3607
    %vm3609 = vcmask 786112
    %v3610 = vsel %vm3609, %v3608, %v3603
    %v3611 = vadd.s32 %v3529, 4294967200
    %v3612 = vlaneseq
    %v3613 = vshrl.u32 %v3612, 7
    %v3614 = vsub.s32 %v3611, %v3613
    %v3615 = vrot.slane %v3182, %v3614
    %vm3616 = vcmask 851712
    %v3617 = vsel %vm3616, %v3615, %v3610
    %v3618 = vadd.s32 %v3529, 4294967192
    %v3619 = vlaneseq
    %v3620 = vshrl.u32 %v3619, 7
    %v3621 = vsub.s32 %v3618, %v3620
    %v3622 = vrot.slane %v3185, %v3621
    %vm3623 = vcmask 917312
    %v3624 = vsel %vm3623, %v3622, %v3617
    %v3625 = vadd.s32 %v3529, 4294967184
    %v3626 = vlaneseq
    %v3627 = vshrl.u32 %v3626, 7
    %v3628 = vsub.s32 %v3625, %v3627
    %v3629 = vrot.slane %v3188, %v3628
    %vm3630 = vcmask 982912
    %v3631 = vsel %vm3630, %v3629, %v3624
    %v3632 = vadd.s32 %v3529, 4294967176
    %v3633 = vlaneseq
    %v3634 = vshrl.u32 %v3633, 7
    %v3635 = vsub.s32 %v3632, %v3634
    %v3636 = vrot.slane %v3191, %v3635
    %vm3637 = vcmask 1048512
    %v3638 = vsel %vm3637, %v3636, %v3631
    %v3639 = vlaneseq
    %v3640 = vshrl.u32 %v3639, 7
    %v3641 = vsub.s32 %v3529, %v3640
    %v3642 = vrot.slane %v3194, %v3641
    %v3643 = vlaneseq
    %v3644 = vshrl.u32 %v3643, 7
    %v3645 = vsub.s32 %v3534, %v3644
    %v3646 = vrot.slane %v3197, %v3645
    %v3647 = vsel %vm3539, %v3646, %v3642
    %v3648 = vlaneseq
    %v3649 = vshrl.u32 %v3648, 7
    %v3650 = vsub.s32 %v3541, %v3649
    %v3651 = vrot.slane %v3200, %v3650
    %v3652 = vsel %vm3546, %v3651, %v3647
    %v3653 = vlaneseq
    %v3654 = vshrl.u32 %v3653, 7
    %v3655 = vsub.s32 %v3548, %v3654
    %v3656 = vrot.slane %v3203, %v3655
    %v3657 = vsel %vm3553, %v3656, %v3652
    %v3658 = vlaneseq
    %v3659 = vshrl.u32 %v3658, 7
    %v3660 = vsub.s32 %v3555, %v3659
    %v3661 = vrot.slane %v3206, %v3660
    %v3662 = vsel %vm3560, %v3661, %v3657
    %v3663 = vlaneseq
    %v3664 = vshrl.u32 %v3663, 7
    %v3665 = vsub.s32 %v3562, %v3664
    %v3666 = vrot.slane %v3209, %v3665
    %v3667 = vsel %vm3567, %v3666, %v3662
    %v3668 = vlaneseq
    %v3669 = vshrl.u32 %v3668, 7
    %v3670 = vsub.s32 %v3569, %v3669
    %v3671 = vrot.slane %v3212, %v3670
    %v3672 = vsel %vm3574, %v3671, %v3667
    %v3673 = vlaneseq
    %v3674 = vshrl.u32 %v3673, 7
    %v3675 = vsub.s32 %v3576, %v3674
    %v3676 = vrot.slane %v3215, %v3675
    %v3677 = vsel %vm3581, %v3676, %v3672
    %v3678 = vlaneseq
    %v3679 = vshrl.u32 %v3678, 7
    %v3680 = vsub.s32 %v3583, %v3679
    %v3681 = vrot.slane %v3218, %v3680
    %v3682 = vsel %vm3588, %v3681, %v3677
    %v3683 = vlaneseq
    %v3684 = vshrl.u32 %v3683, 7
    %v3685 = vsub.s32 %v3590, %v3684
    %v3686 = vrot.slane %v3221, %v3685
    %v3687 = vsel %vm3595, %v3686, %v3682
    %v3688 = vlaneseq
    %v3689 = vshrl.u32 %v3688, 7
    %v3690 = vsub.s32 %v3597, %v3689
    %v3691 = vrot.slane %v3224, %v3690
    %v3692 = vsel %vm3602, %v3691, %v3687
    %v3693 = vlaneseq
    %v3694 = vshrl.u32 %v3693, 7
    %v3695 = vsub.s32 %v3604, %v3694
    %v3696 = vrot.slane %v3227, %v3695
    %v3697 = vsel %vm3609, %v3696, %v3692
    %v3698 = vlaneseq
    %v3699 = vshrl.u32 %v3698, 7
    %v3700 = vsub.s32 %v3611, %v3699
    %v3701 = vrot.slane %v3230, %v3700
    %v3702 = vsel %vm3616, %v3701, %v3697
    %v3703 = vlaneseq
    %v3704 = vshrl.u32 %v3703, 7
    %v3705 = vsub.s32 %v3618, %v3704
    %v3706 = vrot.slane %v3233, %v3705
    %v3707 = vsel %vm3623, %v3706, %v3702
    %v3708 = vlaneseq
    %v3709 = vshrl.u32 %v3708, 7
    %v3710 = vsub.s32 %v3625, %v3709
    %v3711 = vrot.slane %v3236, %v3710
    %v3712 = vsel %vm3630, %v3711, %v3707
    %v3713 = vlaneseq
    %v3714 = vshrl.u32 %v3713, 7
    %v3715 = vsub.s32 %v3632, %v3714
    %v3716 = vrot.slane %v3239, %v3715
    %v3717 = vsel %vm3637, %v3716, %v3712
    %v3718 = vlaneseq
    %v3719 = vshrl.u32 %v3718, 7
    %v3720 = vsub.s32 %v3529, %v3719
    %v3721 = vrot.slane %v3242, %v3720
    %v3722 = vlaneseq
    %v3723 = vshrl.u32 %v3722, 7
    %v3724 = vsub.s32 %v3534, %v3723
    %v3725 = vrot.slane %v3245, %v3724
    %v3726 = vsel %vm3539, %v3725, %v3721
    %v3727 = vlaneseq
    %v3728 = vshrl.u32 %v3727, 7
    %v3729 = vsub.s32 %v3541, %v3728
    %v3730 = vrot.slane %v3248, %v3729
    %v3731 = vsel %vm3546, %v3730, %v3726
    %v3732 = vlaneseq
    %v3733 = vshrl.u32 %v3732, 7
    %v3734 = vsub.s32 %v3548, %v3733
    %v3735 = vrot.slane %v3251, %v3734
    %v3736 = vsel %vm3553, %v3735, %v3731
    %v3737 = vlaneseq
    %v3738 = vshrl.u32 %v3737, 7
    %v3739 = vsub.s32 %v3555, %v3738
    %v3740 = vrot.slane %v3254, %v3739
    %v3741 = vsel %vm3560, %v3740, %v3736
    %v3742 = vlaneseq
    %v3743 = vshrl.u32 %v3742, 7
    %v3744 = vsub.s32 %v3562, %v3743
    %v3745 = vrot.slane %v3257, %v3744
    %v3746 = vsel %vm3567, %v3745, %v3741
    %v3747 = vlaneseq
    %v3748 = vshrl.u32 %v3747, 7
    %v3749 = vsub.s32 %v3569, %v3748
    %v3750 = vrot.slane %v3260, %v3749
    %v3751 = vsel %vm3574, %v3750, %v3746
    %v3752 = vlaneseq
    %v3753 = vshrl.u32 %v3752, 7
    %v3754 = vsub.s32 %v3576, %v3753
    %v3755 = vrot.slane %v3263, %v3754
    %v3756 = vsel %vm3581, %v3755, %v3751
    %v3757 = vlaneseq
    %v3758 = vshrl.u32 %v3757, 7
    %v3759 = vsub.s32 %v3583, %v3758
    %v3760 = vrot.slane %v3266, %v3759
    %v3761 = vsel %vm3588, %v3760, %v3756
    %v3762 = vlaneseq
    %v3763 = vshrl.u32 %v3762, 7
    %v3764 = vsub.s32 %v3590, %v3763
    %v3765 = vrot.slane %v3269, %v3764
    %v3766 = vsel %vm3595, %v3765, %v3761
    %v3767 = vlaneseq
    %v3768 = vshrl.u32 %v3767, 7
    %v3769 = vsub.s32 %v3597, %v3768
    %v3770 = vrot.slane %v3272, %v3769
    %v3771 = vsel %vm3602, %v3770, %v3766
    %v3772 = vlaneseq
    %v3773 = vshrl.u32 %v3772, 7
    %v3774 = vsub.s32 %v3604, %v3773
    %v3775 = vrot.slane %v3275, %v3774
    %v3776 = vsel %vm3609, %v3775, %v3771
    %v3777 = vlaneseq
    %v3778 = vshrl.u32 %v3777, 7
    %v3779 = vsub.s32 %v3611, %v3778
    %v3780 = vrot.slane %v3278, %v3779
    %v3781 = vsel %vm3616, %v3780, %v3776
    %v3782 = vlaneseq
    %v3783 = vshrl.u32 %v3782, 7
    %v3784 = vsub.s32 %v3618, %v3783
    %v3785 = vrot.slane %v3281, %v3784
    %v3786 = vsel %vm3623, %v3785, %v3781
    %v3787 = vlaneseq
    %v3788 = vshrl.u32 %v3787, 7
    %v3789 = vsub.s32 %v3625, %v3788
    %v3790 = vrot.slane %v3284, %v3789
    %v3791 = vsel %vm3630, %v3790, %v3786
    %v3792 = vlaneseq
    %v3793 = vshrl.u32 %v3792, 7
    %v3794 = vsub.s32 %v3632, %v3793
    %v3795 = vrot.slane %v3287, %v3794
    %v3796 = vsel %vm3637, %v3795, %v3791
    %v3797 = vlaneseq
    %v3798 = vshrl.u32 %v3797, 7
    %v3799 = vsub.s32 %v3529, %v3798
    %v3800 = vrot.slane %v3290, %v3799
    %v3801 = vlaneseq
    %v3802 = vshrl.u32 %v3801, 7
    %v3803 = vsub.s32 %v3534, %v3802
    %v3804 = vrot.slane %v3293, %v3803
    %v3805 = vsel %vm3539, %v3804, %v3800
    %v3806 = vlaneseq
    %v3807 = vshrl.u32 %v3806, 7
    %v3808 = vsub.s32 %v3541, %v3807
    %v3809 = vrot.slane %v3296, %v3808
    %v3810 = vsel %vm3546, %v3809, %v3805
    %v3811 = vlaneseq
    %v3812 = vshrl.u32 %v3811, 7
    %v3813 = vsub.s32 %v3548, %v3812
    %v3814 = vrot.slane %v3299, %v3813
    %v3815 = vsel %vm3553, %v3814, %v3810
    %v3816 = vlaneseq
    %v3817 = vshrl.u32 %v3816, 7
    %v3818 = vsub.s32 %v3555, %v3817
    %v3819 = vrot.slane %v3302, %v3818
    %v3820 = vsel %vm3560, %v3819, %v3815
    %v3821 = vlaneseq
    %v3822 = vshrl.u32 %v3821, 7
    %v3823 = vsub.s32 %v3562, %v3822
    %v3824 = vrot.slane %v3305, %v3823
    %v3825 = vsel %vm3567, %v3824, %v3820
    %v3826 = vlaneseq
    %v3827 = vshrl.u32 %v3826, 7
    %v3828 = vsub.s32 %v3569, %v3827
    %v3829 = vrot.slane %v3308, %v3828
    %v3830 = vsel %vm3574, %v3829, %v3825
    %v3831 = vlaneseq
    %v3832 = vshrl.u32 %v3831, 7
    %v3833 = vsub.s32 %v3576, %v3832
    %v3834 = vrot.slane %v3311, %v3833
    %v3835 = vsel %vm3581, %v3834, %v3830
    %v3836 = vlaneseq
    %v3837 = vshrl.u32 %v3836, 7
    %v3838 = vsub.s32 %v3583, %v3837
    %v3839 = vrot.slane %v3314, %v3838
    %v3840 = vsel %vm3588, %v3839, %v3835
    %v3841 = vlaneseq
    %v3842 = vshrl.u32 %v3841, 7
    %v3843 = vsub.s32 %v3590, %v3842
    %v3844 = vrot.slane %v3317, %v3843
    %v3845 = vsel %vm3595, %v3844, %v3840
    %v3846 = vlaneseq
    %v3847 = vshrl.u32 %v3846, 7
    %v3848 = vsub.s32 %v3597, %v3847
    %v3849 = vrot.slane %v3320, %v3848
    %v3850 = vsel %vm3602, %v3849, %v3845
    %v3851 = vlaneseq
    %v3852 = vshrl.u32 %v3851, 7
    %v3853 = vsub.s32 %v3604, %v3852
    %v3854 = vrot.slane %v3323, %v3853
    %v3855 = vsel %vm3609, %v3854, %v3850
    %v3856 = vlaneseq
    %v3857 = vshrl.u32 %v3856, 7
    %v3858 = vsub.s32 %v3611, %v3857
    %v3859 = vrot.slane %v3326, %v3858
    %v3860 = vsel %vm3616, %v3859, %v3855
    %v3861 = vlaneseq
    %v3862 = vshrl.u32 %v3861, 7
    %v3863 = vsub.s32 %v3618, %v3862
    %v3864 = vrot.slane %v3329, %v3863
    %v3865 = vsel %vm3623, %v3864, %v3860
    %v3866 = vlaneseq
    %v3867 = vshrl.u32 %v3866, 7
    %v3868 = vsub.s32 %v3625, %v3867
    %v3869 = vrot.slane %v3332, %v3868
    %v3870 = vsel %vm3630, %v3869, %v3865
    %v3871 = vlaneseq
    %v3872 = vshrl.u32 %v3871, 7
    %v3873 = vsub.s32 %v3632, %v3872
    %v3874 = vrot.slane %v3335, %v3873
    %v3875 = vsel %vm3637, %v3874, %v3870
    %v3876 = vlaneseq
    %v3877 = vshrl.u32 %v3876, 7
    %v3878 = vsub.s32 %v3529, %v3877
    %v3879 = vrot.slane %v3338, %v3878
    %v3880 = vlaneseq
    %v3881 = vshrl.u32 %v3880, 7
    %v3882 = vsub.s32 %v3534, %v3881
    %v3883 = vrot.slane %v3341, %v3882
    %v3884 = vsel %vm3539, %v3883, %v3879
    %v3885 = vlaneseq
    %v3886 = vshrl.u32 %v3885, 7
    %v3887 = vsub.s32 %v3541, %v3886
    %v3888 = vrot.slane %v3344, %v3887
    %v3889 = vsel %vm3546, %v3888, %v3884
    %v3890 = vlaneseq
    %v3891 = vshrl.u32 %v3890, 7
    %v3892 = vsub.s32 %v3548, %v3891
    %v3893 = vrot.slane %v3347, %v3892
    %v3894 = vsel %vm3553, %v3893, %v3889
    %v3895 = vlaneseq
    %v3896 = vshrl.u32 %v3895, 7
    %v3897 = vsub.s32 %v3555, %v3896
    %v3898 = vrot.slane %v3350, %v3897
    %v3899 = vsel %vm3560, %v3898, %v3894
    %v3900 = vlaneseq
    %v3901 = vshrl.u32 %v3900, 7
    %v3902 = vsub.s32 %v3562, %v3901
    %v3903 = vrot.slane %v3353, %v3902
    %v3904 = vsel %vm3567, %v3903, %v3899
    %v3905 = vlaneseq
    %v3906 = vshrl.u32 %v3905, 7
    %v3907 = vsub.s32 %v3569, %v3906
    %v3908 = vrot.slane %v3356, %v3907
    %v3909 = vsel %vm3574, %v3908, %v3904
    %v3910 = vlaneseq
    %v3911 = vshrl.u32 %v3910, 7
    %v3912 = vsub.s32 %v3576, %v3911
    %v3913 = vrot.slane %v3359, %v3912
    %v3914 = vsel %vm3581, %v3913, %v3909
    %v3915 = vlaneseq
    %v3916 = vshrl.u32 %v3915, 7
    %v3917 = vsub.s32 %v3583, %v3916
    %v3918 = vrot.slane %v3362, %v3917
    %v3919 = vsel %vm3588, %v3918, %v3914
    %v3920 = vlaneseq
    %v3921 = vshrl.u32 %v3920, 7
    %v3922 = vsub.s32 %v3590, %v3921
    %v3923 = vrot.slane %v3365, %v3922
    %v3924 = vsel %vm3595, %v3923, %v3919
    %v3925 = vlaneseq
    %v3926 = vshrl.u32 %v3925, 7
    %v3927 = vsub.s32 %v3597, %v3926
    %v3928 = vrot.slane %v3368, %v3927
    %v3929 = vsel %vm3602, %v3928, %v3924
    %v3930 = vlaneseq
    %v3931 = vshrl.u32 %v3930, 7
    %v3932 = vsub.s32 %v3604, %v3931
    %v3933 = vrot.slane %v3371, %v3932
    %v3934 = vsel %vm3609, %v3933, %v3929
    %v3935 = vlaneseq
    %v3936 = vshrl.u32 %v3935, 7
    %v3937 = vsub.s32 %v3611, %v3936
    %v3938 = vrot.slane %v3374, %v3937
    %v3939 = vsel %vm3616, %v3938, %v3934
    %v3940 = vlaneseq
    %v3941 = vshrl.u32 %v3940, 7
    %v3942 = vsub.s32 %v3618, %v3941
    %v3943 = vrot.slane %v3377, %v3942
    %v3944 = vsel %vm3623, %v3943, %v3939
    %v3945 = vlaneseq
    %v3946 = vshrl.u32 %v3945, 7
    %v3947 = vsub.s32 %v3625, %v3946
    %v3948 = vrot.slane %v3380, %v3947
    %v3949 = vsel %vm3630, %v3948, %v3944
    %v3950 = vlaneseq
    %v3951 = vshrl.u32 %v3950, 7
    %v3952 = vsub.s32 %v3632, %v3951
    %v3953 = vrot.slane %v3383, %v3952
    %v3954 = vsel %vm3637, %v3953, %v3949
    %v3955 = vlaneseq
    %v3956 = vshrl.u32 %v3955, 7
    %v3957 = vsub.s32 %v3529, %v3956
    %v3958 = vrot.slane %v3386, %v3957
    %v3959 = vlaneseq
    %v3960 = vshrl.u32 %v3959, 7
    %v3961 = vsub.s32 %v3534, %v3960
    %v3962 = vrot.slane %v3389, %v3961
    %v3963 = vsel %vm3539, %v3962, %v3958
    %v3964 = vlaneseq
    %v3965 = vshrl.u32 %v3964, 7
    %v3966 = vsub.s32 %v3541, %v3965
    %v3967 = vrot.slane %v3392, %v3966
    %v3968 = vsel %vm3546, %v3967, %v3963
    %v3969 = vlaneseq
    %v3970 = vshrl.u32 %v3969, 7
    %v3971 = vsub.s32 %v3548, %v3970
    %v3972 = vrot.slane %v3395, %v3971
    %v3973 = vsel %vm3553, %v3972, %v3968
    %v3974 = vlaneseq
    %v3975 = vshrl.u32 %v3974, 7
    %v3976 = vsub.s32 %v3555, %v3975
    %v3977 = vrot.slane %v3398, %v3976
    %v3978 = vsel %vm3560, %v3977, %v3973
    %v3979 = vlaneseq
    %v3980 = vshrl.u32 %v3979, 7
    %v3981 = vsub.s32 %v3562, %v3980
    %v3982 = vrot.slane %v3401, %v3981
    %v3983 = vsel %vm3567, %v3982, %v3978
    %v3984 = vlaneseq
    %v3985 = vshrl.u32 %v3984, 7
    %v3986 = vsub.s32 %v3569, %v3985
    %v3987 = vrot.slane %v3404, %v3986
    %v3988 = vsel %vm3574, %v3987, %v3983
    %v3989 = vlaneseq
    %v3990 = vshrl.u32 %v3989, 7
    %v3991 = vsub.s32 %v3576, %v3990
    %v3992 = vrot.slane %v3407, %v3991
    %v3993 = vsel %vm3581, %v3992, %v3988
    %v3994 = vlaneseq
    %v3995 = vshrl.u32 %v3994, 7
    %v3996 = vsub.s32 %v3583, %v3995
    %v3997 = vrot.slane %v3410, %v3996
    %v3998 = vsel %vm3588, %v3997, %v3993
    %v3999 = vlaneseq
    %v4000 = vshrl.u32 %v3999, 7
    %v4001 = vsub.s32 %v3590, %v4000
    %v4002 = vrot.slane %v3413, %v4001
    %v4003 = vsel %vm3595, %v4002, %v3998
    %v4004 = vlaneseq
    %v4005 = vshrl.u32 %v4004, 7
    %v4006 = vsub.s32 %v3597, %v4005
    %v4007 = vrot.slane %v3416, %v4006
    %v4008 = vsel %vm3602, %v4007, %v4003
    %v4009 = vlaneseq
    %v4010 = vshrl.u32 %v4009, 7
    %v4011 = vsub.s32 %v3604, %v4010
    %v4012 = vrot.slane %v3419, %v4011
    %v4013 = vsel %vm3609, %v4012, %v4008
    %v4014 = vlaneseq
    %v4015 = vshrl.u32 %v4014, 7
    %v4016 = vsub.s32 %v3611, %v4015
    %v4017 = vrot.slane %v3422, %v4016
    %v4018 = vsel %vm3616, %v4017, %v4013
    %v4019 = vlaneseq
    %v4020 = vshrl.u32 %v4019, 7
    %v4021 = vsub.s32 %v3618, %v4020
    %v4022 = vrot.slane %v3425, %v4021
    %v4023 = vsel %vm3623, %v4022, %v4018
    %v4024 = vlaneseq
    %v4025 = vshrl.u32 %v4024, 7
    %v4026 = vsub.s32 %v3625, %v4025
    %v4027 = vrot.slane %v3428, %v4026
    %v4028 = vsel %vm3630, %v4027, %v4023
    %v4029 = vlaneseq
    %v4030 = vshrl.u32 %v4029, 7
    %v4031 = vsub.s32 %v3632, %v4030
    %v4032 = vrot.slane %v3431, %v4031
    %v4033 = vsel %vm3637, %v4032, %v4028
    %v4034 = vlaneseq
    %v4035 = vshrl.u32 %v4034, 7
    %v4036 = vsub.s32 %v3529, %v4035
    %v4037 = vrot.slane %v3434, %v4036
    %v4038 = vlaneseq
    %v4039 = vshrl.u32 %v4038, 7
    %v4040 = vsub.s32 %v3534, %v4039
    %v4041 = vrot.slane %v3437, %v4040
    %v4042 = vsel %vm3539, %v4041, %v4037
    %v4043 = vlaneseq
    %v4044 = vshrl.u32 %v4043, 7
    %v4045 = vsub.s32 %v3541, %v4044
    %v4046 = vrot.slane %v3440, %v4045
    %v4047 = vsel %vm3546, %v4046, %v4042
    %v4048 = vlaneseq
    %v4049 = vshrl.u32 %v4048, 7
    %v4050 = vsub.s32 %v3548, %v4049
    %v4051 = vrot.slane %v3443, %v4050
    %v4052 = vsel %vm3553, %v4051, %v4047
    %v4053 = vlaneseq
    %v4054 = vshrl.u32 %v4053, 7
    %v4055 = vsub.s32 %v3555, %v4054
    %v4056 = vrot.slane %v3446, %v4055
    %v4057 = vsel %vm3560, %v4056, %v4052
    %v4058 = vlaneseq
    %v4059 = vshrl.u32 %v4058, 7
    %v4060 = vsub.s32 %v3562, %v4059
    %v4061 = vrot.slane %v3449, %v4060
    %v4062 = vsel %vm3567, %v4061, %v4057
    %v4063 = vlaneseq
    %v4064 = vshrl.u32 %v4063, 7
    %v4065 = vsub.s32 %v3569, %v4064
    %v4066 = vrot.slane %v3452, %v4065
    %v4067 = vsel %vm3574, %v4066, %v4062
    %v4068 = vlaneseq
    %v4069 = vshrl.u32 %v4068, 7
    %v4070 = vsub.s32 %v3576, %v4069
    %v4071 = vrot.slane %v3455, %v4070
    %v4072 = vsel %vm3581, %v4071, %v4067
    %v4073 = vlaneseq
    %v4074 = vshrl.u32 %v4073, 7
    %v4075 = vsub.s32 %v3583, %v4074
    %v4076 = vrot.slane %v3458, %v4075
    %v4077 = vsel %vm3588, %v4076, %v4072
    %v4078 = vlaneseq
    %v4079 = vshrl.u32 %v4078, 7
    %v4080 = vsub.s32 %v3590, %v4079
    %v4081 = vrot.slane %v3461, %v4080
    %v4082 = vsel %vm3595, %v4081, %v4077
    %v4083 = vlaneseq
    %v4084 = vshrl.u32 %v4083, 7
    %v4085 = vsub.s32 %v3597, %v4084
    %v4086 = vrot.slane %v3464, %v4085
    %v4087 = vsel %vm3602, %v4086, %v4082
    %v4088 = vlaneseq
    %v4089 = vshrl.u32 %v4088, 7
    %v4090 = vsub.s32 %v3604, %v4089
    %v4091 = vrot.slane %v3467, %v4090
    %v4092 = vsel %vm3609, %v4091, %v4087
    %v4093 = vlaneseq
    %v4094 = vshrl.u32 %v4093, 7
    %v4095 = vsub.s32 %v3611, %v4094
    %v4096 = vrot.slane %v3470, %v4095
    %v4097 = vsel %vm3616, %v4096, %v4092
    %v4098 = vlaneseq
    %v4099 = vshrl.u32 %v4098, 7
    %v4100 = vsub.s32 %v3618, %v4099
    %v4101 = vrot.slane %v3473, %v4100
    %v4102 = vsel %vm3623, %v4101, %v4097
    %v4103 = vlaneseq
    %v4104 = vshrl.u32 %v4103, 7
    %v4105 = vsub.s32 %v3625, %v4104
    %v4106 = vrot.slane %v3476, %v4105
    %v4107 = vsel %vm3630, %v4106, %v4102
    %v4108 = vlaneseq
    %v4109 = vshrl.u32 %v4108, 7
    %v4110 = vsub.s32 %v3632, %v4109
    %v4111 = vrot.slane %v3479, %v4110
    %v4112 = vsel %vm3637, %v4111, %v4107
    %v4113 = vlaneseq
    %v4114 = vshrl.u32 %v4113, 7
    %v4115 = vsub.s32 %v3529, %v4114
    %v4116 = vrot.slane %v3482, %v4115
    %v4117 = vlaneseq
    %v4118 = vshrl.u32 %v4117, 7
    %v4119 = vsub.s32 %v3534, %v4118
    %v4120 = vrot.slane %v3485, %v4119
    %v4121 = vsel %vm3539, %v4120, %v4116
    %v4122 = vlaneseq
    %v4123 = vshrl.u32 %v4122, 7
    %v4124 = vsub.s32 %v3541, %v4123
    %v4125 = vrot.slane %v3488, %v4124
    %v4126 = vsel %vm3546, %v4125, %v4121
    %v4127 = vlaneseq
    %v4128 = vshrl.u32 %v4127, 7
    %v4129 = vsub.s32 %v3548, %v4128
    %v4130 = vrot.slane %v3491, %v4129
    %v4131 = vsel %vm3553, %v4130, %v4126
    %v4132 = vlaneseq
    %v4133 = vshrl.u32 %v4132, 7
    %v4134 = vsub.s32 %v3555, %v4133
    %v4135 = vrot.slane %v3494, %v4134
    %v4136 = vsel %vm3560, %v4135, %v4131
    %v4137 = vlaneseq
    %v4138 = vshrl.u32 %v4137, 7
    %v4139 = vsub.s32 %v3562, %v4138
    %v4140 = vrot.slane %v3497, %v4139
    %v4141 = vsel %vm3567, %v4140, %v4136
    %v4142 = vlaneseq
    %v4143 = vshrl.u32 %v4142, 7
    %v4144 = vsub.s32 %v3569, %v4143
    %v4145 = vrot.slane %v3500, %v4144
    %v4146 = vsel %vm3574, %v4145, %v4141
    %v4147 = vlaneseq
    %v4148 = vshrl.u32 %v4147, 7
    %v4149 = vsub.s32 %v3576, %v4148
    %v4150 = vrot.slane %v3503, %v4149
    %v4151 = vsel %vm3581, %v4150, %v4146
    %v4152 = vlaneseq
    %v4153 = vshrl.u32 %v4152, 7
    %v4154 = vsub.s32 %v3583, %v4153
    %v4155 = vrot.slane %v3506, %v4154
    %v4156 = vsel %vm3588, %v4155, %v4151
    %v4157 = vlaneseq
    %v4158 = vshrl.u32 %v4157, 7
    %v4159 = vsub.s32 %v3590, %v4158
    %v4160 = vrot.slane %v3509, %v4159
    %v4161 = vsel %vm3595, %v4160, %v4156
    %v4162 = vlaneseq
    %v4163 = vshrl.u32 %v4162, 7
    %v4164 = vsub.s32 %v3597, %v4163
    %v4165 = vrot.slane %v3512, %v4164
    %v4166 = vsel %vm3602, %v4165, %v4161
    %v4167 = vlaneseq
    %v4168 = vshrl.u32 %v4167, 7
    %v4169 = vsub.s32 %v3604, %v4168
    %v4170 = vrot.slane %v3515, %v4169
    %v4171 = vsel %vm3609, %v4170, %v4166
    %v4172 = vlaneseq
    %v4173 = vshrl.u32 %v4172, 7
    %v4174 = vsub.s32 %v3611, %v4173
    %v4175 = vrot.slane %v3518, %v4174
    %v4176 = vsel %vm3616, %v4175, %v4171
    %v4177 = vlaneseq
    %v4178 = vshrl.u32 %v4177, 7
    %v4179 = vsub.s32 %v3618, %v4178
    %v4180 = vrot.slane %v3521, %v4179
    %v4181 = vsel %vm3623, %v4180, %v4176
    %v4182 = vlaneseq
    %v4183 = vshrl.u32 %v4182, 7
    %v4184 = vsub.s32 %v3625, %v4183
    %v4185 = vrot.slane %v3524, %v4184
    %v4186 = vsel %vm3630, %v4185, %v4181
    %v4187 = vlaneseq
    %v4188 = vshrl.u32 %v4187, 7
    %v4189 = vsub.s32 %v3632, %v4188
    %v4190 = vrot.slane %v3527, %v4189
    %v4191 = vsel %vm3637, %v4190, %v4186
    %vm4192 = vcmask 1041409
    %v4193 = vsel %vm4192, %v3717, %v3638
    %vm4194 = vcmask 1042434
    %v4195 = vsel %vm4194, %v3796, %v4193
    %vm4196 = vcmask 1043459
    %v4197 = vsel %vm4196, %v3875, %v4195
    %vm4198 = vcmask 1044484
    %v4199 = vsel %vm4198, %v3954, %v4197
    %vm4200 = vcmask 1045509
    %v4201 = vsel %vm4200, %v4033, %v4199
    %vm4202 = vcmask 1046534
    %v4203 = vsel %vm4202, %v4112, %v4201
    %vm4204 = vcmask 1047559
    %v4205 = vsel %vm4204, %v4191, %v4203
    %v4207 = vrcp.pop %v4205
    %v4208 = vmul.f32 %v2502, %v4207
    %v4209 = vmax.f32 %v4208, 0.010416667
    %v4210 = vmin.f32 %v4209, 270.0
    %4339 = vset.pattern.permute.xlu0 0
    %4340 = vperm.xlu0 %4339, %v2373
    %v4341 = vpop.permute.xlu0 %4340
    %4342 = vset.pattern.permute.xlu0 0
    %4343 = vperm.xlu0 %4342, %v2374
    %v4344 = vpop.permute.xlu0 %4343
    %4345 = vset.pattern.permute.xlu0 0
    %4346 = vperm.xlu0 %4345, %v2375
    %v4347 = vpop.permute.xlu0 %4346
    %4348 = vset.pattern.permute.xlu0 0
    %4349 = vperm.xlu0 %4348, %v2376
    %v4350 = vpop.permute.xlu0 %4349
    %4351 = vset.pattern.permute.xlu0 0
    %4352 = vperm.xlu0 %4351, %v2377
    %v4353 = vpop.permute.xlu0 %4352
    %4354 = vset.pattern.permute.xlu0 0
    %4355 = vperm.xlu0 %4354, %v2378
    %v4356 = vpop.permute.xlu0 %4355
    %4357 = vset.pattern.permute.xlu0 0
    %4358 = vperm.xlu0 %4357, %v2379
    %v4359 = vpop.permute.xlu0 %4358
    %4360 = vset.pattern.permute.xlu0 0
    %4361 = vperm.xlu0 %4360, %v2380
    %v4362 = vpop.permute.xlu0 %4361
    %4363 = vset.pattern.permute.xlu0 0
    %4364 = vperm.xlu0 %4363, %v2381
    %v4365 = vpop.permute.xlu0 %4364
    %4366 = vset.pattern.permute.xlu0 0
    %4367 = vperm.xlu0 %4366, %v2382
    %v4368 = vpop.permute.xlu0 %4367
    %4369 = vset.pattern.permute.xlu0 0
    %4370 = vperm.xlu0 %4369, %v2383
    %v4371 = vpop.permute.xlu0 %4370
    %4372 = vset.pattern.permute.xlu0 0
    %4373 = vperm.xlu0 %4372, %v2384
    %v4374 = vpop.permute.xlu0 %4373
    %4375 = vset.pattern.permute.xlu0 0
    %4376 = vperm.xlu0 %4375, %v2385
    %v4377 = vpop.permute.xlu0 %4376
    %4378 = vset.pattern.permute.xlu0 0
    %4379 = vperm.xlu0 %4378, %v2386
    %v4380 = vpop.permute.xlu0 %4379
    %4381 = vset.pattern.permute.xlu0 0
    %4382 = vperm.xlu0 %4381, %v2387
    %v4383 = vpop.permute.xlu0 %4382
    %4384 = vset.pattern.permute.xlu0 0
    %4385 = vperm.xlu0 %4384, %v2388
    %v4386 = vpop.permute.xlu0 %4385
    %4387 = vset.pattern.permute.xlu0 0
    %4388 = vperm.xlu0 %4387, %v2389
    %v4389 = vpop.permute.xlu0 %4388
    %4390 = vset.pattern.permute.xlu0 0
    %4391 = vperm.xlu0 %4390, %v2390
    %v4392 = vpop.permute.xlu0 %4391
    %4393 = vset.pattern.permute.xlu0 0
    %4394 = vperm.xlu0 %4393, %v2391
    %v4395 = vpop.permute.xlu0 %4394
    %4396 = vset.pattern.permute.xlu0 0
    %4397 = vperm.xlu0 %4396, %v2392
    %v4398 = vpop.permute.xlu0 %4397
    %4399 = vset.pattern.permute.xlu0 0
    %4400 = vperm.xlu0 %4399, %v2393
    %v4401 = vpop.permute.xlu0 %4400
    %4402 = vset.pattern.permute.xlu0 0
    %4403 = vperm.xlu0 %4402, %v2394
    %v4404 = vpop.permute.xlu0 %4403
    %4405 = vset.pattern.permute.xlu0 0
    %4406 = vperm.xlu0 %4405, %v2395
    %v4407 = vpop.permute.xlu0 %4406
    %4408 = vset.pattern.permute.xlu0 0
    %4409 = vperm.xlu0 %4408, %v2396
    %v4410 = vpop.permute.xlu0 %4409
    %4411 = vset.pattern.permute.xlu0 0
    %4412 = vperm.xlu0 %4411, %v2397
    %v4413 = vpop.permute.xlu0 %4412
    %4414 = vset.pattern.permute.xlu0 0
    %4415 = vperm.xlu0 %4414, %v2398
    %v4416 = vpop.permute.xlu0 %4415
    %4417 = vset.pattern.permute.xlu0 0
    %4418 = vperm.xlu0 %4417, %v2399
    %v4419 = vpop.permute.xlu0 %4418
    %4420 = vset.pattern.permute.xlu0 0
    %4421 = vperm.xlu0 %4420, %v2400
    %v4422 = vpop.permute.xlu0 %4421
    %4423 = vset.pattern.permute.xlu0 0
    %4424 = vperm.xlu0 %4423, %v2401
    %v4425 = vpop.permute.xlu0 %4424
    %4426 = vset.pattern.permute.xlu0 0
    %4427 = vperm.xlu0 %4426, %v2402
    %v4428 = vpop.permute.xlu0 %4427
    %4429 = vset.pattern.permute.xlu0 0
    %4430 = vperm.xlu0 %4429, %v2403
    %v4431 = vpop.permute.xlu0 %4430
    %4432 = vset.pattern.permute.xlu0 0
    %4433 = vperm.xlu0 %4432, %v2404
    %v4434 = vpop.permute.xlu0 %4433
    %4435 = vset.pattern.permute.xlu0 0
    %4436 = vperm.xlu0 %4435, %v2405
    %v4437 = vpop.permute.xlu0 %4436
    %4438 = vset.pattern.permute.xlu0 0
    %4439 = vperm.xlu0 %4438, %v2406
    %v4440 = vpop.permute.xlu0 %4439
    %4441 = vset.pattern.permute.xlu0 0
    %4442 = vperm.xlu0 %4441, %v2407
    %v4443 = vpop.permute.xlu0 %4442
    %4444 = vset.pattern.permute.xlu0 0
    %4445 = vperm.xlu0 %4444, %v2408
    %v4446 = vpop.permute.xlu0 %4445
    %4447 = vset.pattern.permute.xlu0 0
    %4448 = vperm.xlu0 %4447, %v2409
    %v4449 = vpop.permute.xlu0 %4448
    %4450 = vset.pattern.permute.xlu0 0
    %4451 = vperm.xlu0 %4450, %v2410
    %v4452 = vpop.permute.xlu0 %4451
    %4453 = vset.pattern.permute.xlu0 0
    %4454 = vperm.xlu0 %4453, %v2411
    %v4455 = vpop.permute.xlu0 %4454
    %4456 = vset.pattern.permute.xlu0 0
    %4457 = vperm.xlu0 %4456, %v2412
    %v4458 = vpop.permute.xlu0 %4457
    %4459 = vset.pattern.permute.xlu0 0
    %4460 = vperm.xlu0 %4459, %v2413
    %v4461 = vpop.permute.xlu0 %4460
    %4462 = vset.pattern.permute.xlu0 0
    %4463 = vperm.xlu0 %4462, %v2414
    %v4464 = vpop.permute.xlu0 %4463
    %4465 = vset.pattern.permute.xlu0 0
    %4466 = vperm.xlu0 %4465, %v2415
    %v4467 = vpop.permute.xlu0 %4466
    %4468 = vset.pattern.permute.xlu0 0
    %4469 = vperm.xlu0 %4468, %v2416
    %v4470 = vpop.permute.xlu0 %4469
    %4471 = vset.pattern.permute.xlu0 0
    %4472 = vperm.xlu0 %4471, %v2417
    %v4473 = vpop.permute.xlu0 %4472
    %4474 = vset.pattern.permute.xlu0 0
    %4475 = vperm.xlu0 %4474, %v2418
    %v4476 = vpop.permute.xlu0 %4475
    %4477 = vset.pattern.permute.xlu0 0
    %4478 = vperm.xlu0 %4477, %v2419
    %v4479 = vpop.permute.xlu0 %4478
    %4480 = vset.pattern.permute.xlu0 0
    %4481 = vperm.xlu0 %4480, %v2420
    %v4482 = vpop.permute.xlu0 %4481
    %4483 = vset.pattern.permute.xlu0 0
    %4484 = vperm.xlu0 %4483, %v2421
    %v4485 = vpop.permute.xlu0 %4484
    %4486 = vset.pattern.permute.xlu0 0
    %4487 = vperm.xlu0 %4486, %v2422
    %v4488 = vpop.permute.xlu0 %4487
    %4489 = vset.pattern.permute.xlu0 0
    %4490 = vperm.xlu0 %4489, %v2423
    %v4491 = vpop.permute.xlu0 %4490
    %4492 = vset.pattern.permute.xlu0 0
    %4493 = vperm.xlu0 %4492, %v2424
    %v4494 = vpop.permute.xlu0 %4493
    %4495 = vset.pattern.permute.xlu0 0
    %4496 = vperm.xlu0 %4495, %v2425
    %v4497 = vpop.permute.xlu0 %4496
    %4498 = vset.pattern.permute.xlu0 0
    %4499 = vperm.xlu0 %4498, %v2426
    %v4500 = vpop.permute.xlu0 %4499
    %4501 = vset.pattern.permute.xlu0 0
    %4502 = vperm.xlu0 %4501, %v2427
    %v4503 = vpop.permute.xlu0 %4502
    %4504 = vset.pattern.permute.xlu0 0
    %4505 = vperm.xlu0 %4504, %v2428
    %v4506 = vpop.permute.xlu0 %4505
    %4507 = vset.pattern.permute.xlu0 0
    %4508 = vperm.xlu0 %4507, %v2429
    %v4509 = vpop.permute.xlu0 %4508
    %4510 = vset.pattern.permute.xlu0 0
    %4511 = vperm.xlu0 %4510, %v2430
    %v4512 = vpop.permute.xlu0 %4511
    %4513 = vset.pattern.permute.xlu0 0
    %4514 = vperm.xlu0 %4513, %v2431
    %v4515 = vpop.permute.xlu0 %4514
    %4516 = vset.pattern.permute.xlu0 0
    %4517 = vperm.xlu0 %4516, %v2432
    %v4518 = vpop.permute.xlu0 %4517
    %4519 = vset.pattern.permute.xlu0 0
    %4520 = vperm.xlu0 %4519, %v2433
    %v4521 = vpop.permute.xlu0 %4520
    %4522 = vset.pattern.permute.xlu0 0
    %4523 = vperm.xlu0 %4522, %v2434
    %v4524 = vpop.permute.xlu0 %4523
    %4525 = vset.pattern.permute.xlu0 0
    %4526 = vperm.xlu0 %4525, %v2435
    %v4527 = vpop.permute.xlu0 %4526
    %4528 = vset.pattern.permute.xlu0 0
    %4529 = vperm.xlu0 %4528, %v2436
    %v4530 = vpop.permute.xlu0 %4529
    %4531 = vset.pattern.permute.xlu0 0
    %4532 = vperm.xlu0 %4531, %v2437
    %v4533 = vpop.permute.xlu0 %4532
    %4534 = vset.pattern.permute.xlu0 0
    %4535 = vperm.xlu0 %4534, %v2438
    %v4536 = vpop.permute.xlu0 %4535
    %4537 = vset.pattern.permute.xlu0 0
    %4538 = vperm.xlu0 %4537, %v2439
    %v4539 = vpop.permute.xlu0 %4538
    %4540 = vset.pattern.permute.xlu0 0
    %4541 = vperm.xlu0 %4540, %v2440
    %v4542 = vpop.permute.xlu0 %4541
    %4543 = vset.pattern.permute.xlu0 0
    %4544 = vperm.xlu0 %4543, %v2441
    %v4545 = vpop.permute.xlu0 %4544
    %4546 = vset.pattern.permute.xlu0 0
    %4547 = vperm.xlu0 %4546, %v2442
    %v4548 = vpop.permute.xlu0 %4547
    %4549 = vset.pattern.permute.xlu0 0
    %4550 = vperm.xlu0 %4549, %v2443
    %v4551 = vpop.permute.xlu0 %4550
    %4552 = vset.pattern.permute.xlu0 0
    %4553 = vperm.xlu0 %4552, %v2444
    %v4554 = vpop.permute.xlu0 %4553
    %4555 = vset.pattern.permute.xlu0 0
    %4556 = vperm.xlu0 %4555, %v2445
    %v4557 = vpop.permute.xlu0 %4556
    %4558 = vset.pattern.permute.xlu0 0
    %4559 = vperm.xlu0 %4558, %v2446
    %v4560 = vpop.permute.xlu0 %4559
    %4561 = vset.pattern.permute.xlu0 0
    %4562 = vperm.xlu0 %4561, %v2447
    %v4563 = vpop.permute.xlu0 %4562
    %4564 = vset.pattern.permute.xlu0 0
    %4565 = vperm.xlu0 %4564, %v2448
    %v4566 = vpop.permute.xlu0 %4565
    %4567 = vset.pattern.permute.xlu0 0
    %4568 = vperm.xlu0 %4567, %v2449
    %v4569 = vpop.permute.xlu0 %4568
    %4570 = vset.pattern.permute.xlu0 0
    %4571 = vperm.xlu0 %4570, %v2450
    %v4572 = vpop.permute.xlu0 %4571
    %4573 = vset.pattern.permute.xlu0 0
    %4574 = vperm.xlu0 %4573, %v2451
    %v4575 = vpop.permute.xlu0 %4574
    %4576 = vset.pattern.permute.xlu0 0
    %4577 = vperm.xlu0 %4576, %v2452
    %v4578 = vpop.permute.xlu0 %4577
    %4579 = vset.pattern.permute.xlu0 0
    %4580 = vperm.xlu0 %4579, %v2453
    %v4581 = vpop.permute.xlu0 %4580
    %4582 = vset.pattern.permute.xlu0 0
    %4583 = vperm.xlu0 %4582, %v2454
    %v4584 = vpop.permute.xlu0 %4583
    %4585 = vset.pattern.permute.xlu0 0
    %4586 = vperm.xlu0 %4585, %v2455
    %v4587 = vpop.permute.xlu0 %4586
    %4588 = vset.pattern.permute.xlu0 0
    %4589 = vperm.xlu0 %4588, %v2456
    %v4590 = vpop.permute.xlu0 %4589
    %4591 = vset.pattern.permute.xlu0 0
    %4592 = vperm.xlu0 %4591, %v2457
    %v4593 = vpop.permute.xlu0 %4592
    %4594 = vset.pattern.permute.xlu0 0
    %4595 = vperm.xlu0 %4594, %v2458
    %v4596 = vpop.permute.xlu0 %4595
    %4597 = vset.pattern.permute.xlu0 0
    %4598 = vperm.xlu0 %4597, %v2459
    %v4599 = vpop.permute.xlu0 %4598
    %4600 = vset.pattern.permute.xlu0 0
    %4601 = vperm.xlu0 %4600, %v2460
    %v4602 = vpop.permute.xlu0 %4601
    %4603 = vset.pattern.permute.xlu0 0
    %4604 = vperm.xlu0 %4603, %v2461
    %v4605 = vpop.permute.xlu0 %4604
    %4606 = vset.pattern.permute.xlu0 0
    %4607 = vperm.xlu0 %4606, %v2462
    %v4608 = vpop.permute.xlu0 %4607
    %4609 = vset.pattern.permute.xlu0 0
    %4610 = vperm.xlu0 %4609, %v2463
    %v4611 = vpop.permute.xlu0 %4610
    %4612 = vset.pattern.permute.xlu0 0
    %4613 = vperm.xlu0 %4612, %v2464
    %v4614 = vpop.permute.xlu0 %4613
    %4615 = vset.pattern.permute.xlu0 0
    %4616 = vperm.xlu0 %4615, %v2465
    %v4617 = vpop.permute.xlu0 %4616
    %4618 = vset.pattern.permute.xlu0 0
    %4619 = vperm.xlu0 %4618, %v2466
    %v4620 = vpop.permute.xlu0 %4619
    %4621 = vset.pattern.permute.xlu0 0
    %4622 = vperm.xlu0 %4621, %v2467
    %v4623 = vpop.permute.xlu0 %4622
    %4624 = vset.pattern.permute.xlu0 0
    %4625 = vperm.xlu0 %4624, %v2468
    %v4626 = vpop.permute.xlu0 %4625
    %4627 = vset.pattern.permute.xlu0 0
    %4628 = vperm.xlu0 %4627, %v2469
    %v4629 = vpop.permute.xlu0 %4628
    %4630 = vset.pattern.permute.xlu0 0
    %4631 = vperm.xlu0 %4630, %v2470
    %v4632 = vpop.permute.xlu0 %4631
    %4633 = vset.pattern.permute.xlu0 0
    %4634 = vperm.xlu0 %4633, %v2471
    %v4635 = vpop.permute.xlu0 %4634
    %4636 = vset.pattern.permute.xlu0 0
    %4637 = vperm.xlu0 %4636, %v2472
    %v4638 = vpop.permute.xlu0 %4637
    %4639 = vset.pattern.permute.xlu0 0
    %4640 = vperm.xlu0 %4639, %v2473
    %v4641 = vpop.permute.xlu0 %4640
    %4642 = vset.pattern.permute.xlu0 0
    %4643 = vperm.xlu0 %4642, %v2474
    %v4644 = vpop.permute.xlu0 %4643
    %4645 = vset.pattern.permute.xlu0 0
    %4646 = vperm.xlu0 %4645, %v2475
    %v4647 = vpop.permute.xlu0 %4646
    %4648 = vset.pattern.permute.xlu0 0
    %4649 = vperm.xlu0 %4648, %v2476
    %v4650 = vpop.permute.xlu0 %4649
    %4651 = vset.pattern.permute.xlu0 0
    %4652 = vperm.xlu0 %4651, %v2477
    %v4653 = vpop.permute.xlu0 %4652
    %4654 = vset.pattern.permute.xlu0 0
    %4655 = vperm.xlu0 %4654, %v2478
    %v4656 = vpop.permute.xlu0 %4655
    %4657 = vset.pattern.permute.xlu0 0
    %4658 = vperm.xlu0 %4657, %v2479
    %v4659 = vpop.permute.xlu0 %4658
    %4660 = vset.pattern.permute.xlu0 0
    %4661 = vperm.xlu0 %4660, %v2480
    %v4662 = vpop.permute.xlu0 %4661
    %4663 = vset.pattern.permute.xlu0 0
    %4664 = vperm.xlu0 %4663, %v2481
    %v4665 = vpop.permute.xlu0 %4664
    %4666 = vset.pattern.permute.xlu0 0
    %4667 = vperm.xlu0 %4666, %v2482
    %v4668 = vpop.permute.xlu0 %4667
    %4669 = vset.pattern.permute.xlu0 0
    %4670 = vperm.xlu0 %4669, %v2483
    %v4671 = vpop.permute.xlu0 %4670
    %4672 = vset.pattern.permute.xlu0 0
    %4673 = vperm.xlu0 %4672, %v2484
    %v4674 = vpop.permute.xlu0 %4673
    %4675 = vset.pattern.permute.xlu0 0
    %4676 = vperm.xlu0 %4675, %v2485
    %v4677 = vpop.permute.xlu0 %4676
    %4678 = vset.pattern.permute.xlu0 0
    %4679 = vperm.xlu0 %4678, %v2486
    %v4680 = vpop.permute.xlu0 %4679
    %4681 = vset.pattern.permute.xlu0 0
    %4682 = vperm.xlu0 %4681, %v2487
    %v4683 = vpop.permute.xlu0 %4682
    %4684 = vset.pattern.permute.xlu0 0
    %4685 = vperm.xlu0 %4684, %v2488
    %v4686 = vpop.permute.xlu0 %4685
    %4687 = vset.pattern.permute.xlu0 0
    %4688 = vperm.xlu0 %4687, %v2489
    %v4689 = vpop.permute.xlu0 %4688
    %4690 = vset.pattern.permute.xlu0 0
    %4691 = vperm.xlu0 %4690, %v2490
    %v4692 = vpop.permute.xlu0 %4691
    %4693 = vset.pattern.permute.xlu0 0
    %4694 = vperm.xlu0 %4693, %v2491
    %v4695 = vpop.permute.xlu0 %4694
    %4696 = vset.pattern.permute.xlu0 0
    %4697 = vperm.xlu0 %4696, %v2492
    %v4698 = vpop.permute.xlu0 %4697
    %4699 = vset.pattern.permute.xlu0 0
    %4700 = vperm.xlu0 %4699, %v2493
    %v4701 = vpop.permute.xlu0 %4700
    %4702 = vset.pattern.permute.xlu0 0
    %4703 = vperm.xlu0 %4702, %v2494
    %v4704 = vpop.permute.xlu0 %4703
    %4705 = vset.pattern.permute.xlu0 0
    %4706 = vperm.xlu0 %4705, %v2495
    %v4707 = vpop.permute.xlu0 %4706
    %4708 = vset.pattern.permute.xlu0 0
    %4709 = vperm.xlu0 %4708, %v2496
    %v4710 = vpop.permute.xlu0 %4709
    %4711 = vset.pattern.permute.xlu0 0
    %4712 = vperm.xlu0 %4711, %v2497
    %v4713 = vpop.permute.xlu0 %4712
    %4714 = vset.pattern.permute.xlu0 0
    %4715 = vperm.xlu0 %4714, %v2498
    %v4716 = vpop.permute.xlu0 %4715
    %4717 = vset.pattern.permute.xlu0 0
    %4718 = vperm.xlu0 %4717, %v2499
    %v4719 = vpop.permute.xlu0 %4718
    %4720 = vset.pattern.permute.xlu0 0
    %4721 = vperm.xlu0 %4720, %v2500
    %v4722 = vpop.permute.xlu0 %4721
    %v4723 = vlaneseq
    %v4724 = vshrl.u32 %v4723, 7
    %v4725 = vsub.s32 %v3529, %v4724
    %v4726 = vrot.slane %v4341, %v4725
    %v4727 = vlaneseq
    %v4728 = vshrl.u32 %v4727, 7
    %v4729 = vsub.s32 %v3534, %v4728
    %v4730 = vrot.slane %v4344, %v4729
    %v4731 = vsel %vm3539, %v4730, %v4726
    %v4732 = vlaneseq
    %v4733 = vshrl.u32 %v4732, 7
    %v4734 = vsub.s32 %v3541, %v4733
    %v4735 = vrot.slane %v4347, %v4734
    %v4736 = vsel %vm3546, %v4735, %v4731
    %v4737 = vlaneseq
    %v4738 = vshrl.u32 %v4737, 7
    %v4739 = vsub.s32 %v3548, %v4738
    %v4740 = vrot.slane %v4350, %v4739
    %v4741 = vsel %vm3553, %v4740, %v4736
    %v4742 = vlaneseq
    %v4743 = vshrl.u32 %v4742, 7
    %v4744 = vsub.s32 %v3555, %v4743
    %v4745 = vrot.slane %v4353, %v4744
    %v4746 = vsel %vm3560, %v4745, %v4741
    %v4747 = vlaneseq
    %v4748 = vshrl.u32 %v4747, 7
    %v4749 = vsub.s32 %v3562, %v4748
    %v4750 = vrot.slane %v4356, %v4749
    %v4751 = vsel %vm3567, %v4750, %v4746
    %v4752 = vlaneseq
    %v4753 = vshrl.u32 %v4752, 7
    %v4754 = vsub.s32 %v3569, %v4753
    %v4755 = vrot.slane %v4359, %v4754
    %v4756 = vsel %vm3574, %v4755, %v4751
    %v4757 = vlaneseq
    %v4758 = vshrl.u32 %v4757, 7
    %v4759 = vsub.s32 %v3576, %v4758
    %v4760 = vrot.slane %v4362, %v4759
    %v4761 = vsel %vm3581, %v4760, %v4756
    %v4762 = vlaneseq
    %v4763 = vshrl.u32 %v4762, 7
    %v4764 = vsub.s32 %v3583, %v4763
    %v4765 = vrot.slane %v4365, %v4764
    %v4766 = vsel %vm3588, %v4765, %v4761
    %v4767 = vlaneseq
    %v4768 = vshrl.u32 %v4767, 7
    %v4769 = vsub.s32 %v3590, %v4768
    %v4770 = vrot.slane %v4368, %v4769
    %v4771 = vsel %vm3595, %v4770, %v4766
    %v4772 = vlaneseq
    %v4773 = vshrl.u32 %v4772, 7
    %v4774 = vsub.s32 %v3597, %v4773
    %v4775 = vrot.slane %v4371, %v4774
    %v4776 = vsel %vm3602, %v4775, %v4771
    %v4777 = vlaneseq
    %v4778 = vshrl.u32 %v4777, 7
    %v4779 = vsub.s32 %v3604, %v4778
    %v4780 = vrot.slane %v4374, %v4779
    %v4781 = vsel %vm3609, %v4780, %v4776
    %v4782 = vlaneseq
    %v4783 = vshrl.u32 %v4782, 7
    %v4784 = vsub.s32 %v3611, %v4783
    %v4785 = vrot.slane %v4377, %v4784
    %v4786 = vsel %vm3616, %v4785, %v4781
    %v4787 = vlaneseq
    %v4788 = vshrl.u32 %v4787, 7
    %v4789 = vsub.s32 %v3618, %v4788
    %v4790 = vrot.slane %v4380, %v4789
    %v4791 = vsel %vm3623, %v4790, %v4786
    %v4792 = vlaneseq
    %v4793 = vshrl.u32 %v4792, 7
    %v4794 = vsub.s32 %v3625, %v4793
    %v4795 = vrot.slane %v4383, %v4794
    %v4796 = vsel %vm3630, %v4795, %v4791
    %v4797 = vlaneseq
    %v4798 = vshrl.u32 %v4797, 7
    %v4799 = vsub.s32 %v3632, %v4798
    %v4800 = vrot.slane %v4386, %v4799
    %v4801 = vsel %vm3637, %v4800, %v4796
    %v4802 = vlaneseq
    %v4803 = vshrl.u32 %v4802, 7
    %v4804 = vsub.s32 %v3529, %v4803
    %v4805 = vrot.slane %v4389, %v4804
    %v4806 = vlaneseq
    %v4807 = vshrl.u32 %v4806, 7
    %v4808 = vsub.s32 %v3534, %v4807
    %v4809 = vrot.slane %v4392, %v4808
    %v4810 = vsel %vm3539, %v4809, %v4805
    %v4811 = vlaneseq
    %v4812 = vshrl.u32 %v4811, 7
    %v4813 = vsub.s32 %v3541, %v4812
    %v4814 = vrot.slane %v4395, %v4813
    %v4815 = vsel %vm3546, %v4814, %v4810
    %v4816 = vlaneseq
    %v4817 = vshrl.u32 %v4816, 7
    %v4818 = vsub.s32 %v3548, %v4817
    %v4819 = vrot.slane %v4398, %v4818
    %v4820 = vsel %vm3553, %v4819, %v4815
    %v4821 = vlaneseq
    %v4822 = vshrl.u32 %v4821, 7
    %v4823 = vsub.s32 %v3555, %v4822
    %v4824 = vrot.slane %v4401, %v4823
    %v4825 = vsel %vm3560, %v4824, %v4820
    %v4826 = vlaneseq
    %v4827 = vshrl.u32 %v4826, 7
    %v4828 = vsub.s32 %v3562, %v4827
    %v4829 = vrot.slane %v4404, %v4828
    %v4830 = vsel %vm3567, %v4829, %v4825
    %v4831 = vlaneseq
    %v4832 = vshrl.u32 %v4831, 7
    %v4833 = vsub.s32 %v3569, %v4832
    %v4834 = vrot.slane %v4407, %v4833
    %v4835 = vsel %vm3574, %v4834, %v4830
    %v4836 = vlaneseq
    %v4837 = vshrl.u32 %v4836, 7
    %v4838 = vsub.s32 %v3576, %v4837
    %v4839 = vrot.slane %v4410, %v4838
    %v4840 = vsel %vm3581, %v4839, %v4835
    %v4841 = vlaneseq
    %v4842 = vshrl.u32 %v4841, 7
    %v4843 = vsub.s32 %v3583, %v4842
    %v4844 = vrot.slane %v4413, %v4843
    %v4845 = vsel %vm3588, %v4844, %v4840
    %v4846 = vlaneseq
    %v4847 = vshrl.u32 %v4846, 7
    %v4848 = vsub.s32 %v3590, %v4847
    %v4849 = vrot.slane %v4416, %v4848
    %v4850 = vsel %vm3595, %v4849, %v4845
    %v4851 = vlaneseq
    %v4852 = vshrl.u32 %v4851, 7
    %v4853 = vsub.s32 %v3597, %v4852
    %v4854 = vrot.slane %v4419, %v4853
    %v4855 = vsel %vm3602, %v4854, %v4850
    %v4856 = vlaneseq
    %v4857 = vshrl.u32 %v4856, 7
    %v4858 = vsub.s32 %v3604, %v4857
    %v4859 = vrot.slane %v4422, %v4858
    %v4860 = vsel %vm3609, %v4859, %v4855
    %v4861 = vlaneseq
    %v4862 = vshrl.u32 %v4861, 7
    %v4863 = vsub.s32 %v3611, %v4862
    %v4864 = vrot.slane %v4425, %v4863
    %v4865 = vsel %vm3616, %v4864, %v4860
    %v4866 = vlaneseq
    %v4867 = vshrl.u32 %v4866, 7
    %v4868 = vsub.s32 %v3618, %v4867
    %v4869 = vrot.slane %v4428, %v4868
    %v4870 = vsel %vm3623, %v4869, %v4865
    %v4871 = vlaneseq
    %v4872 = vshrl.u32 %v4871, 7
    %v4873 = vsub.s32 %v3625, %v4872
    %v4874 = vrot.slane %v4431, %v4873
    %v4875 = vsel %vm3630, %v4874, %v4870
    %v4876 = vlaneseq
    %v4877 = vshrl.u32 %v4876, 7
    %v4878 = vsub.s32 %v3632, %v4877
    %v4879 = vrot.slane %v4434, %v4878
    %v4880 = vsel %vm3637, %v4879, %v4875
    %v4881 = vlaneseq
    %v4882 = vshrl.u32 %v4881, 7
    %v4883 = vsub.s32 %v3529, %v4882
    %v4884 = vrot.slane %v4437, %v4883
    %v4885 = vlaneseq
    %v4886 = vshrl.u32 %v4885, 7
    %v4887 = vsub.s32 %v3534, %v4886
    %v4888 = vrot.slane %v4440, %v4887
    %v4889 = vsel %vm3539, %v4888, %v4884
    %v4890 = vlaneseq
    %v4891 = vshrl.u32 %v4890, 7
    %v4892 = vsub.s32 %v3541, %v4891
    %v4893 = vrot.slane %v4443, %v4892
    %v4894 = vsel %vm3546, %v4893, %v4889
    %v4895 = vlaneseq
    %v4896 = vshrl.u32 %v4895, 7
    %v4897 = vsub.s32 %v3548, %v4896
    %v4898 = vrot.slane %v4446, %v4897
    %v4899 = vsel %vm3553, %v4898, %v4894
    %v4900 = vlaneseq
    %v4901 = vshrl.u32 %v4900, 7
    %v4902 = vsub.s32 %v3555, %v4901
    %v4903 = vrot.slane %v4449, %v4902
    %v4904 = vsel %vm3560, %v4903, %v4899
    %v4905 = vlaneseq
    %v4906 = vshrl.u32 %v4905, 7
    %v4907 = vsub.s32 %v3562, %v4906
    %v4908 = vrot.slane %v4452, %v4907
    %v4909 = vsel %vm3567, %v4908, %v4904
    %v4910 = vlaneseq
    %v4911 = vshrl.u32 %v4910, 7
    %v4912 = vsub.s32 %v3569, %v4911
    %v4913 = vrot.slane %v4455, %v4912
    %v4914 = vsel %vm3574, %v4913, %v4909
    %v4915 = vlaneseq
    %v4916 = vshrl.u32 %v4915, 7
    %v4917 = vsub.s32 %v3576, %v4916
    %v4918 = vrot.slane %v4458, %v4917
    %v4919 = vsel %vm3581, %v4918, %v4914
    %v4920 = vlaneseq
    %v4921 = vshrl.u32 %v4920, 7
    %v4922 = vsub.s32 %v3583, %v4921
    %v4923 = vrot.slane %v4461, %v4922
    %v4924 = vsel %vm3588, %v4923, %v4919
    %v4925 = vlaneseq
    %v4926 = vshrl.u32 %v4925, 7
    %v4927 = vsub.s32 %v3590, %v4926
    %v4928 = vrot.slane %v4464, %v4927
    %v4929 = vsel %vm3595, %v4928, %v4924
    %v4930 = vlaneseq
    %v4931 = vshrl.u32 %v4930, 7
    %v4932 = vsub.s32 %v3597, %v4931
    %v4933 = vrot.slane %v4467, %v4932
    %v4934 = vsel %vm3602, %v4933, %v4929
    %v4935 = vlaneseq
    %v4936 = vshrl.u32 %v4935, 7
    %v4937 = vsub.s32 %v3604, %v4936
    %v4938 = vrot.slane %v4470, %v4937
    %v4939 = vsel %vm3609, %v4938, %v4934
    %v4940 = vlaneseq
    %v4941 = vshrl.u32 %v4940, 7
    %v4942 = vsub.s32 %v3611, %v4941
    %v4943 = vrot.slane %v4473, %v4942
    %v4944 = vsel %vm3616, %v4943, %v4939
    %v4945 = vlaneseq
    %v4946 = vshrl.u32 %v4945, 7
    %v4947 = vsub.s32 %v3618, %v4946
    %v4948 = vrot.slane %v4476, %v4947
    %v4949 = vsel %vm3623, %v4948, %v4944
    %v4950 = vlaneseq
    %v4951 = vshrl.u32 %v4950, 7
    %v4952 = vsub.s32 %v3625, %v4951
    %v4953 = vrot.slane %v4479, %v4952
    %v4954 = vsel %vm3630, %v4953, %v4949
    %v4955 = vlaneseq
    %v4956 = vshrl.u32 %v4955, 7
    %v4957 = vsub.s32 %v3632, %v4956
    %v4958 = vrot.slane %v4482, %v4957
    %v4959 = vsel %vm3637, %v4958, %v4954
    %v4960 = vlaneseq
    %v4961 = vshrl.u32 %v4960, 7
    %v4962 = vsub.s32 %v3529, %v4961
    %v4963 = vrot.slane %v4485, %v4962
    %v4964 = vlaneseq
    %v4965 = vshrl.u32 %v4964, 7
    %v4966 = vsub.s32 %v3534, %v4965
    %v4967 = vrot.slane %v4488, %v4966
    %v4968 = vsel %vm3539, %v4967, %v4963
    %v4969 = vlaneseq
    %v4970 = vshrl.u32 %v4969, 7
    %v4971 = vsub.s32 %v3541, %v4970
    %v4972 = vrot.slane %v4491, %v4971
    %v4973 = vsel %vm3546, %v4972, %v4968
    %v4974 = vlaneseq
    %v4975 = vshrl.u32 %v4974, 7
    %v4976 = vsub.s32 %v3548, %v4975
    %v4977 = vrot.slane %v4494, %v4976
    %v4978 = vsel %vm3553, %v4977, %v4973
    %v4979 = vlaneseq
    %v4980 = vshrl.u32 %v4979, 7
    %v4981 = vsub.s32 %v3555, %v4980
    %v4982 = vrot.slane %v4497, %v4981
    %v4983 = vsel %vm3560, %v4982, %v4978
    %v4984 = vlaneseq
    %v4985 = vshrl.u32 %v4984, 7
    %v4986 = vsub.s32 %v3562, %v4985
    %v4987 = vrot.slane %v4500, %v4986
    %v4988 = vsel %vm3567, %v4987, %v4983
    %v4989 = vlaneseq
    %v4990 = vshrl.u32 %v4989, 7
    %v4991 = vsub.s32 %v3569, %v4990
    %v4992 = vrot.slane %v4503, %v4991
    %v4993 = vsel %vm3574, %v4992, %v4988
    %v4994 = vlaneseq
    %v4995 = vshrl.u32 %v4994, 7
    %v4996 = vsub.s32 %v3576, %v4995
    %v4997 = vrot.slane %v4506, %v4996
    %v4998 = vsel %vm3581, %v4997, %v4993
    %v4999 = vlaneseq
    %v5000 = vshrl.u32 %v4999, 7
    %v5001 = vsub.s32 %v3583, %v5000
    %v5002 = vrot.slane %v4509, %v5001
    %v5003 = vsel %vm3588, %v5002, %v4998
    %v5004 = vlaneseq
    %v5005 = vshrl.u32 %v5004, 7
    %v5006 = vsub.s32 %v3590, %v5005
    %v5007 = vrot.slane %v4512, %v5006
    %v5008 = vsel %vm3595, %v5007, %v5003
    %v5009 = vlaneseq
    %v5010 = vshrl.u32 %v5009, 7
    %v5011 = vsub.s32 %v3597, %v5010
    %v5012 = vrot.slane %v4515, %v5011
    %v5013 = vsel %vm3602, %v5012, %v5008
    %v5014 = vlaneseq
    %v5015 = vshrl.u32 %v5014, 7
    %v5016 = vsub.s32 %v3604, %v5015
    %v5017 = vrot.slane %v4518, %v5016
    %v5018 = vsel %vm3609, %v5017, %v5013
    %v5019 = vlaneseq
    %v5020 = vshrl.u32 %v5019, 7
    %v5021 = vsub.s32 %v3611, %v5020
    %v5022 = vrot.slane %v4521, %v5021
    %v5023 = vsel %vm3616, %v5022, %v5018
    %v5024 = vlaneseq
    %v5025 = vshrl.u32 %v5024, 7
    %v5026 = vsub.s32 %v3618, %v5025
    %v5027 = vrot.slane %v4524, %v5026
    %v5028 = vsel %vm3623, %v5027, %v5023
    %v5029 = vlaneseq
    %v5030 = vshrl.u32 %v5029, 7
    %v5031 = vsub.s32 %v3625, %v5030
    %v5032 = vrot.slane %v4527, %v5031
    %v5033 = vsel %vm3630, %v5032, %v5028
    %v5034 = vlaneseq
    %v5035 = vshrl.u32 %v5034, 7
    %v5036 = vsub.s32 %v3632, %v5035
    %v5037 = vrot.slane %v4530, %v5036
    %v5038 = vsel %vm3637, %v5037, %v5033
    %v5039 = vlaneseq
    %v5040 = vshrl.u32 %v5039, 7
    %v5041 = vsub.s32 %v3529, %v5040
    %v5042 = vrot.slane %v4533, %v5041
    %v5043 = vlaneseq
    %v5044 = vshrl.u32 %v5043, 7
    %v5045 = vsub.s32 %v3534, %v5044
    %v5046 = vrot.slane %v4536, %v5045
    %v5047 = vsel %vm3539, %v5046, %v5042
    %v5048 = vlaneseq
    %v5049 = vshrl.u32 %v5048, 7
    %v5050 = vsub.s32 %v3541, %v5049
    %v5051 = vrot.slane %v4539, %v5050
    %v5052 = vsel %vm3546, %v5051, %v5047
    %v5053 = vlaneseq
    %v5054 = vshrl.u32 %v5053, 7
    %v5055 = vsub.s32 %v3548, %v5054
    %v5056 = vrot.slane %v4542, %v5055
    %v5057 = vsel %vm3553, %v5056, %v5052
    %v5058 = vlaneseq
    %v5059 = vshrl.u32 %v5058, 7
    %v5060 = vsub.s32 %v3555, %v5059
    %v5061 = vrot.slane %v4545, %v5060
    %v5062 = vsel %vm3560, %v5061, %v5057
    %v5063 = vlaneseq
    %v5064 = vshrl.u32 %v5063, 7
    %v5065 = vsub.s32 %v3562, %v5064
    %v5066 = vrot.slane %v4548, %v5065
    %v5067 = vsel %vm3567, %v5066, %v5062
    %v5068 = vlaneseq
    %v5069 = vshrl.u32 %v5068, 7
    %v5070 = vsub.s32 %v3569, %v5069
    %v5071 = vrot.slane %v4551, %v5070
    %v5072 = vsel %vm3574, %v5071, %v5067
    %v5073 = vlaneseq
    %v5074 = vshrl.u32 %v5073, 7
    %v5075 = vsub.s32 %v3576, %v5074
    %v5076 = vrot.slane %v4554, %v5075
    %v5077 = vsel %vm3581, %v5076, %v5072
    %v5078 = vlaneseq
    %v5079 = vshrl.u32 %v5078, 7
    %v5080 = vsub.s32 %v3583, %v5079
    %v5081 = vrot.slane %v4557, %v5080
    %v5082 = vsel %vm3588, %v5081, %v5077
    %v5083 = vlaneseq
    %v5084 = vshrl.u32 %v5083, 7
    %v5085 = vsub.s32 %v3590, %v5084
    %v5086 = vrot.slane %v4560, %v5085
    %v5087 = vsel %vm3595, %v5086, %v5082
    %v5088 = vlaneseq
    %v5089 = vshrl.u32 %v5088, 7
    %v5090 = vsub.s32 %v3597, %v5089
    %v5091 = vrot.slane %v4563, %v5090
    %v5092 = vsel %vm3602, %v5091, %v5087
    %v5093 = vlaneseq
    %v5094 = vshrl.u32 %v5093, 7
    %v5095 = vsub.s32 %v3604, %v5094
    %v5096 = vrot.slane %v4566, %v5095
    %v5097 = vsel %vm3609, %v5096, %v5092
    %v5098 = vlaneseq
    %v5099 = vshrl.u32 %v5098, 7
    %v5100 = vsub.s32 %v3611, %v5099
    %v5101 = vrot.slane %v4569, %v5100
    %v5102 = vsel %vm3616, %v5101, %v5097
    %v5103 = vlaneseq
    %v5104 = vshrl.u32 %v5103, 7
    %v5105 = vsub.s32 %v3618, %v5104
    %v5106 = vrot.slane %v4572, %v5105
    %v5107 = vsel %vm3623, %v5106, %v5102
    %v5108 = vlaneseq
    %v5109 = vshrl.u32 %v5108, 7
    %v5110 = vsub.s32 %v3625, %v5109
    %v5111 = vrot.slane %v4575, %v5110
    %v5112 = vsel %vm3630, %v5111, %v5107
    %v5113 = vlaneseq
    %v5114 = vshrl.u32 %v5113, 7
    %v5115 = vsub.s32 %v3632, %v5114
    %v5116 = vrot.slane %v4578, %v5115
    %v5117 = vsel %vm3637, %v5116, %v5112
    %v5118 = vlaneseq
    %v5119 = vshrl.u32 %v5118, 7
    %v5120 = vsub.s32 %v3529, %v5119
    %v5121 = vrot.slane %v4581, %v5120
    %v5122 = vlaneseq
    %v5123 = vshrl.u32 %v5122, 7
    %v5124 = vsub.s32 %v3534, %v5123
    %v5125 = vrot.slane %v4584, %v5124
    %v5126 = vsel %vm3539, %v5125, %v5121
    %v5127 = vlaneseq
    %v5128 = vshrl.u32 %v5127, 7
    %v5129 = vsub.s32 %v3541, %v5128
    %v5130 = vrot.slane %v4587, %v5129
    %v5131 = vsel %vm3546, %v5130, %v5126
    %v5132 = vlaneseq
    %v5133 = vshrl.u32 %v5132, 7
    %v5134 = vsub.s32 %v3548, %v5133
    %v5135 = vrot.slane %v4590, %v5134
    %v5136 = vsel %vm3553, %v5135, %v5131
    %v5137 = vlaneseq
    %v5138 = vshrl.u32 %v5137, 7
    %v5139 = vsub.s32 %v3555, %v5138
    %v5140 = vrot.slane %v4593, %v5139
    %v5141 = vsel %vm3560, %v5140, %v5136
    %v5142 = vlaneseq
    %v5143 = vshrl.u32 %v5142, 7
    %v5144 = vsub.s32 %v3562, %v5143
    %v5145 = vrot.slane %v4596, %v5144
    %v5146 = vsel %vm3567, %v5145, %v5141
    %v5147 = vlaneseq
    %v5148 = vshrl.u32 %v5147, 7
    %v5149 = vsub.s32 %v3569, %v5148
    %v5150 = vrot.slane %v4599, %v5149
    %v5151 = vsel %vm3574, %v5150, %v5146
    %v5152 = vlaneseq
    %v5153 = vshrl.u32 %v5152, 7
    %v5154 = vsub.s32 %v3576, %v5153
    %v5155 = vrot.slane %v4602, %v5154
    %v5156 = vsel %vm3581, %v5155, %v5151
    %v5157 = vlaneseq
    %v5158 = vshrl.u32 %v5157, 7
    %v5159 = vsub.s32 %v3583, %v5158
    %v5160 = vrot.slane %v4605, %v5159
    %v5161 = vsel %vm3588, %v5160, %v5156
    %v5162 = vlaneseq
    %v5163 = vshrl.u32 %v5162, 7
    %v5164 = vsub.s32 %v3590, %v5163
    %v5165 = vrot.slane %v4608, %v5164
    %v5166 = vsel %vm3595, %v5165, %v5161
    %v5167 = vlaneseq
    %v5168 = vshrl.u32 %v5167, 7
    %v5169 = vsub.s32 %v3597, %v5168
    %v5170 = vrot.slane %v4611, %v5169
    %v5171 = vsel %vm3602, %v5170, %v5166
    %v5172 = vlaneseq
    %v5173 = vshrl.u32 %v5172, 7
    %v5174 = vsub.s32 %v3604, %v5173
    %v5175 = vrot.slane %v4614, %v5174
    %v5176 = vsel %vm3609, %v5175, %v5171
    %v5177 = vlaneseq
    %v5178 = vshrl.u32 %v5177, 7
    %v5179 = vsub.s32 %v3611, %v5178
    %v5180 = vrot.slane %v4617, %v5179
    %v5181 = vsel %vm3616, %v5180, %v5176
    %v5182 = vlaneseq
    %v5183 = vshrl.u32 %v5182, 7
    %v5184 = vsub.s32 %v3618, %v5183
    %v5185 = vrot.slane %v4620, %v5184
    %v5186 = vsel %vm3623, %v5185, %v5181
    %v5187 = vlaneseq
    %v5188 = vshrl.u32 %v5187, 7
    %v5189 = vsub.s32 %v3625, %v5188
    %v5190 = vrot.slane %v4623, %v5189
    %v5191 = vsel %vm3630, %v5190, %v5186
    %v5192 = vlaneseq
    %v5193 = vshrl.u32 %v5192, 7
    %v5194 = vsub.s32 %v3632, %v5193
    %v5195 = vrot.slane %v4626, %v5194
    %v5196 = vsel %vm3637, %v5195, %v5191
    %v5197 = vlaneseq
    %v5198 = vshrl.u32 %v5197, 7
    %v5199 = vsub.s32 %v3529, %v5198
    %v5200 = vrot.slane %v4629, %v5199
    %v5201 = vlaneseq
    %v5202 = vshrl.u32 %v5201, 7
    %v5203 = vsub.s32 %v3534, %v5202
    %v5204 = vrot.slane %v4632, %v5203
    %v5205 = vsel %vm3539, %v5204, %v5200
    %v5206 = vlaneseq
    %v5207 = vshrl.u32 %v5206, 7
    %v5208 = vsub.s32 %v3541, %v5207
    %v5209 = vrot.slane %v4635, %v5208
    %v5210 = vsel %vm3546, %v5209, %v5205
    %v5211 = vlaneseq
    %v5212 = vshrl.u32 %v5211, 7
    %v5213 = vsub.s32 %v3548, %v5212
    %v5214 = vrot.slane %v4638, %v5213
    %v5215 = vsel %vm3553, %v5214, %v5210
    %v5216 = vlaneseq
    %v5217 = vshrl.u32 %v5216, 7
    %v5218 = vsub.s32 %v3555, %v5217
    %v5219 = vrot.slane %v4641, %v5218
    %v5220 = vsel %vm3560, %v5219, %v5215
    %v5221 = vlaneseq
    %v5222 = vshrl.u32 %v5221, 7
    %v5223 = vsub.s32 %v3562, %v5222
    %v5224 = vrot.slane %v4644, %v5223
    %v5225 = vsel %vm3567, %v5224, %v5220
    %v5226 = vlaneseq
    %v5227 = vshrl.u32 %v5226, 7
    %v5228 = vsub.s32 %v3569, %v5227
    %v5229 = vrot.slane %v4647, %v5228
    %v5230 = vsel %vm3574, %v5229, %v5225
    %v5231 = vlaneseq
    %v5232 = vshrl.u32 %v5231, 7
    %v5233 = vsub.s32 %v3576, %v5232
    %v5234 = vrot.slane %v4650, %v5233
    %v5235 = vsel %vm3581, %v5234, %v5230
    %v5236 = vlaneseq
    %v5237 = vshrl.u32 %v5236, 7
    %v5238 = vsub.s32 %v3583, %v5237
    %v5239 = vrot.slane %v4653, %v5238
    %v5240 = vsel %vm3588, %v5239, %v5235
    %v5241 = vlaneseq
    %v5242 = vshrl.u32 %v5241, 7
    %v5243 = vsub.s32 %v3590, %v5242
    %v5244 = vrot.slane %v4656, %v5243
    %v5245 = vsel %vm3595, %v5244, %v5240
    %v5246 = vlaneseq
    %v5247 = vshrl.u32 %v5246, 7
    %v5248 = vsub.s32 %v3597, %v5247
    %v5249 = vrot.slane %v4659, %v5248
    %v5250 = vsel %vm3602, %v5249, %v5245
    %v5251 = vlaneseq
    %v5252 = vshrl.u32 %v5251, 7
    %v5253 = vsub.s32 %v3604, %v5252
    %v5254 = vrot.slane %v4662, %v5253
    %v5255 = vsel %vm3609, %v5254, %v5250
    %v5256 = vlaneseq
    %v5257 = vshrl.u32 %v5256, 7
    %v5258 = vsub.s32 %v3611, %v5257
    %v5259 = vrot.slane %v4665, %v5258
    %v5260 = vsel %vm3616, %v5259, %v5255
    %v5261 = vlaneseq
    %v5262 = vshrl.u32 %v5261, 7
    %v5263 = vsub.s32 %v3618, %v5262
    %v5264 = vrot.slane %v4668, %v5263
    %v5265 = vsel %vm3623, %v5264, %v5260
    %v5266 = vlaneseq
    %v5267 = vshrl.u32 %v5266, 7
    %v5268 = vsub.s32 %v3625, %v5267
    %v5269 = vrot.slane %v4671, %v5268
    %v5270 = vsel %vm3630, %v5269, %v5265
    %v5271 = vlaneseq
    %v5272 = vshrl.u32 %v5271, 7
    %v5273 = vsub.s32 %v3632, %v5272
    %v5274 = vrot.slane %v4674, %v5273
    %v5275 = vsel %vm3637, %v5274, %v5270
    %v5276 = vlaneseq
    %v5277 = vshrl.u32 %v5276, 7
    %v5278 = vsub.s32 %v3529, %v5277
    %v5279 = vrot.slane %v4677, %v5278
    %v5280 = vlaneseq
    %v5281 = vshrl.u32 %v5280, 7
    %v5282 = vsub.s32 %v3534, %v5281
    %v5283 = vrot.slane %v4680, %v5282
    %v5284 = vsel %vm3539, %v5283, %v5279
    %v5285 = vlaneseq
    %v5286 = vshrl.u32 %v5285, 7
    %v5287 = vsub.s32 %v3541, %v5286
    %v5288 = vrot.slane %v4683, %v5287
    %v5289 = vsel %vm3546, %v5288, %v5284
    %v5290 = vlaneseq
    %v5291 = vshrl.u32 %v5290, 7
    %v5292 = vsub.s32 %v3548, %v5291
    %v5293 = vrot.slane %v4686, %v5292
    %v5294 = vsel %vm3553, %v5293, %v5289
    %v5295 = vlaneseq
    %v5296 = vshrl.u32 %v5295, 7
    %v5297 = vsub.s32 %v3555, %v5296
    %v5298 = vrot.slane %v4689, %v5297
    %v5299 = vsel %vm3560, %v5298, %v5294
    %v5300 = vlaneseq
    %v5301 = vshrl.u32 %v5300, 7
    %v5302 = vsub.s32 %v3562, %v5301
    %v5303 = vrot.slane %v4692, %v5302
    %v5304 = vsel %vm3567, %v5303, %v5299
    %v5305 = vlaneseq
    %v5306 = vshrl.u32 %v5305, 7
    %v5307 = vsub.s32 %v3569, %v5306
    %v5308 = vrot.slane %v4695, %v5307
    %v5309 = vsel %vm3574, %v5308, %v5304
    %v5310 = vlaneseq
    %v5311 = vshrl.u32 %v5310, 7
    %v5312 = vsub.s32 %v3576, %v5311
    %v5313 = vrot.slane %v4698, %v5312
    %v5314 = vsel %vm3581, %v5313, %v5309
    %v5315 = vlaneseq
    %v5316 = vshrl.u32 %v5315, 7
    %v5317 = vsub.s32 %v3583, %v5316
    %v5318 = vrot.slane %v4701, %v5317
    %v5319 = vsel %vm3588, %v5318, %v5314
    %v5320 = vlaneseq
    %v5321 = vshrl.u32 %v5320, 7
    %v5322 = vsub.s32 %v3590, %v5321
    %v5323 = vrot.slane %v4704, %v5322
    %v5324 = vsel %vm3595, %v5323, %v5319
    %v5325 = vlaneseq
    %v5326 = vshrl.u32 %v5325, 7
    %v5327 = vsub.s32 %v3597, %v5326
    %v5328 = vrot.slane %v4707, %v5327
    %v5329 = vsel %vm3602, %v5328, %v5324
    %v5330 = vlaneseq
    %v5331 = vshrl.u32 %v5330, 7
    %v5332 = vsub.s32 %v3604, %v5331
    %v5333 = vrot.slane %v4710, %v5332
    %v5334 = vsel %vm3609, %v5333, %v5329
    %v5335 = vlaneseq
    %v5336 = vshrl.u32 %v5335, 7
    %v5337 = vsub.s32 %v3611, %v5336
    %v5338 = vrot.slane %v4713, %v5337
    %v5339 = vsel %vm3616, %v5338, %v5334
    %v5340 = vlaneseq
    %v5341 = vshrl.u32 %v5340, 7
    %v5342 = vsub.s32 %v3618, %v5341
    %v5343 = vrot.slane %v4716, %v5342
    %v5344 = vsel %vm3623, %v5343, %v5339
    %v5345 = vlaneseq
    %v5346 = vshrl.u32 %v5345, 7
    %v5347 = vsub.s32 %v3625, %v5346
    %v5348 = vrot.slane %v4719, %v5347
    %v5349 = vsel %vm3630, %v5348, %v5344
    %v5350 = vlaneseq
    %v5351 = vshrl.u32 %v5350, 7
    %v5352 = vsub.s32 %v3632, %v5351
    %v5353 = vrot.slane %v4722, %v5352
    %v5354 = vsel %vm3637, %v5353, %v5349
    %v5355 = vsel %vm4192, %v4880, %v4801
    %v5356 = vsel %vm4194, %v4959, %v5355
    %v5357 = vsel %vm4196, %v5038, %v5356
    %v5358 = vsel %vm4198, %v5117, %v5357
    %v5359 = vsel %vm4200, %v5196, %v5358
    %v5360 = vsel %vm4202, %v5275, %v5359
    %v5361 = vsel %vm4204, %v5354, %v5360
    %5363 = vst [vmem:[#allocation5] sm:$0xff] %v5361
    %5364 = vst [vmem:[#allocation6] sm:$0xff] %v4210
    // Predicated region
    $region22: #{tpu_custom_call.1} parent=1 // pred_check
      _
    $region23: #{tpu_custom_call.1} parent=1 // pred_check_branch
      %5366 = sbr.rel (0) target = $region25
    $region24: #{tpu_custom_call.1} parent=1 // pred_region
      %s5368 = ssub.s32 128, 16
      %5369 = vsyncadd [#allocation4], %s5368
      %s5370 = sshll.u32 [#allocation5], 4
      %s5371 = int_to_ptr.vmem [resolvable:$true] %s5370
      %5376 = dma.vmem_to_hbm [thread:$0]  %s5371, 16, %s4, [#allocation4], 16, 16, 1
    $region25: #{tpu_custom_call.1} parent=1 // pred_fallthru
      _
    // Predicated region
    $region26: #{tpu_custom_call.1} parent=1 // pred_check
      _
    $region27: #{tpu_custom_call.1} parent=1 // pred_check_branch
      %5378 = sbr.rel (0) target = $region29
    $region28: #{tpu_custom_call.1} parent=1 // pred_region
      %s5380 = ssub.s32 128, 16
      %5381 = vsyncadd [#allocation7], %s5380
      %s5382 = sshll.u32 [#allocation6], 4
      %s5383 = int_to_ptr.vmem [resolvable:$true] %s5382
      %5388 = dma.vmem_to_hbm [thread:$0]  %s5383, 16, %s5, [#allocation7], 16, 16, 1
    $region29: #{tpu_custom_call.1} parent=1 // pred_fallthru
      _
    // Predicated region
    $region30: #{tpu_custom_call.1} parent=1 // pred_check
      _
    $region31: #{tpu_custom_call.1} parent=1 // pred_check_branch
      %5390 = sbr.rel (0) target = $region33
    $region32: #{tpu_custom_call.1} parent=1 // pred_region
      %5391 = dma.done [#allocation4], 128
    $region33: #{tpu_custom_call.1} parent=1 // pred_fallthru
      _
    // Predicated region
    $region34: #{tpu_custom_call.1} parent=1 // pred_check
      _
    $region35: #{tpu_custom_call.1} parent=1 // pred_check_branch
      %5393 = sbr.rel (0) target = $region37
    $region36: #{tpu_custom_call.1} parent=1 // pred_region
      %5394 = dma.done [#allocation7], 128
    $region37: #{tpu_custom_call.1} parent=1 // pred_fallthru
      _
    %5395 = vsyncpa [#allocation3], 1
    %5396 = vsyncpa [#allocation4], 1
    %5397 = vsyncpa [#allocation7], 1

</llo_original>
